<compile_context>
chip_gen: v6e
topology: v6e:2x2x1
jax: 0.10.0
libtpu: 0.0.40
codegen_flags: <defaults>
</compile_context>

<pallas_src>
import functools

import jax
import jax.numpy as jnp
import numpy as np
from jax.experimental import pallas as pl
from jax.experimental.pallas import tpu as pltpu


def _fused_conv_in_lrelu_kernel(p_ref, w_ref, b_ref, o_ref, *, eps, slope):
    """Fused im2col-matmul + bias + InstanceNorm3d + LeakyReLU, one batch item.

    p_ref : (1, K, M)    bf16 im2col patches, K = 27*Cin (sublanes), M = D*H*W (lanes)
    w_ref : (Cout, K)    bf16 conv weights (PyTorch OIDHW, flattened)
    b_ref : (Cout, 1)    f32 conv bias
    o_ref : (1, Cout, M) f32 output (already channels-first / NCDHW order)
    """
    # Single big-K matmul on the MXU; accumulation stays inside the MXU
    # (f32 accumulate) — no VMEM accumulator round trips.
    y = jnp.dot(w_ref[...], p_ref[0],
                preferred_element_type=jnp.float32)          # (Cout, M) f32
    y = y + b_ref[...]                                        # bias (bcast over lanes)

    # InstanceNorm3d: per-channel stats over the spatial volume of this batch
    # element, single pass (sum & sum-of-squares), biased variance, eps inside
    # rsqrt (EUP slot), no affine params (torch default).
    inv_m = jnp.float32(1.0 / y.shape[1])
    mean = jnp.sum(y, axis=1, keepdims=True) * inv_m          # (Cout, 1)
    var = jnp.sum(y * y, axis=1, keepdims=True) * inv_m - mean * mean
    var = jnp.maximum(var, 0.0)
    yn = (y - mean) * jax.lax.rsqrt(var + eps)

    # LeakyReLU (negative_slope=0.01, torch default).
    ya = jnp.where(yn >= 0, yn, slope * yn)

    o_ref[...] = ya.reshape(o_ref.shape).astype(o_ref.dtype)


def _im2col_3x3x3(x_ncdhw):
    """(N, C, D, H, W) -> (N, 27*C, D*H*W) patches for a 3x3x3 'same' conv.

    K index = c*27 + (kd*9 + kh*3 + kw), matching w.reshape(Cout, Cin*27).
    """
    N, C, D, H, W = x_ncdhw.shape
    xp = jnp.pad(x_ncdhw, ((0, 0), (0, 0), (1, 1), (1, 1), (1, 1)))
    taps = [xp[:, :, kd:kd + D, kh:kh + H, kw:kw + W]
            for kd in range(3) for kh in range(3) for kw in range(3)]
    p = jnp.stack(taps, axis=2)                     # (N, C, 27, D, H, W)
    return p.reshape(N, C * 27, D * H * W)


def conv_in_lrelu(x_ncdhw, w_oidhw, b, *, eps=1e-5, slope=0.01):
    """One Conv3d(k=3, pad=1) + InstanceNorm3d + LeakyReLU layer (NCDHW in/out)."""
    N, Cin, D, H, W = x_ncdhw.shape
    Cout = w_oidhw.shape[0]
    M = D * H * W
    K = 27 * Cin

    # Plain-XLA glue: im2col patches + weight/bias flattening; bf16 MXU operands,
    # f32 bias and f32 epilogue math inside the kernel.
    patches = _im2col_3x3x3(x_ncdhw.astype(jnp.bfloat16))     # (N, K, M) bf16
    w2d = w_oidhw.reshape(Cout, K).astype(jnp.bfloat16)       # (Cout, K) bf16
    b2d = b.astype(jnp.float32).reshape(Cout, 1)              # (Cout, 1) f32

    kernel = functools.partial(_fused_conv_in_lrelu_kernel, eps=eps, slope=slope)

    out = pl.pallas_call(
        kernel,
        out_shape=jax.ShapeDtypeStruct((N, Cout, M), jnp.float32),
        grid_spec=pltpu.PrefetchScalarGridSpec(
            num_scalar_prefetch=0,
            grid=(N,),
            in_specs=[
                pl.BlockSpec((1, K, M), lambda n: (n, 0, 0)),   # patches
                pl.BlockSpec((Cout, K), lambda n: (0, 0)),      # weights (resident)
                pl.BlockSpec((Cout, 1), lambda n: (0, 0)),      # bias (resident)
            ],
            out_specs=pl.BlockSpec((1, Cout, M), lambda n: (n, 0, 0)),
        ),
        compiler_params=pltpu.CompilerParams(
            dimension_semantics=("parallel",)),   # v7x: shard batch over both TCs
    )(patches, w2d, b2d)

    return out.reshape(N, Cout, D, H, W)


def conv_block_pallas(x_ncdhw, params):
    """ConvBlock forward: NCDHW in, NCDHW out (matches the PyTorch module)."""
    w1, b1, w2, b2 = params
    y = conv_in_lrelu(x_ncdhw, w1, b1)
    return conv_in_lrelu(y, w2, b2)


# -------------------- pure-JAX reference for validation --------------------
def _ref_layer(x, w, b, eps=1e-5, slope=0.01):
    y = jax.lax.conv_general_dilated(
        x, w, window_strides=(1, 1, 1),
        padding=((1, 1), (1, 1), (1, 1)),
        dimension_numbers=("NCDHW", "OIDHW", "NCDHW"))
    y = y + b.reshape(1, -1, 1, 1, 1)
    mean = jnp.mean(y, axis=(2, 3, 4), keepdims=True)
    var = jnp.mean(jnp.square(y - mean), axis=(2, 3, 4), keepdims=True)
    yn = (y - mean) / jnp.sqrt(var + eps)
    return jnp.where(yn >= 0, yn, slope * yn)


def conv_block_ref(x_ncdhw, params):
    w1, b1, w2, b2 = params
    return _ref_layer(_ref_layer(x_ncdhw, w1, b1), w2, b2)


if __name__ == "__main__":
    # Small shapes: batch=2, in_channels=4, spatial 8^3; out_channels=64
    # (the module's default).
    N, Cin, D, H, W = 2, 4, 8, 8, 8
    Cout = 64

    key = jax.random.PRNGKey(0)
    kx, kw1, kb1, kw2, kb2 = jax.random.split(key, 5)

    x = jax.random.normal(kx, (N, Cin, D, H, W), dtype=jnp.float32)

    # Deterministic synthetic parameters in PyTorch OIDHW layout.
    w1 = 0.1 * jax.random.normal(kw1, (Cout, Cin, 3, 3, 3), dtype=jnp.float32)
    b1 = 0.1 * jax.random.normal(kb1, (Cout,), dtype=jnp.float32)
    w2 = 0.1 * jax.random.normal(kw2, (Cout, Cout, 3, 3, 3), dtype=jnp.float32)
    b2 = 0.1 * jax.random.normal(kb2, (Cout,), dtype=jnp.float32)
    params = (w1, b1, w2, b2)

    fwd = jax.jit(conv_block_pallas)
    out = jax.block_until_ready(fwd(x, params))
    ref = jax.block_until_ready(conv_block_ref(x, params))

    assert out.shape == (N, Cout, D, H, W), out.shape
    # bf16 MXU operands (f32 accumulation + f32 norm epilogue) vs f32 reference:
    # instance-normalized outputs are O(1), observed error is a few 1e-3, so a
    # 5e-2 tolerance gives ample margin while still catching real bugs.
    np.testing.assert_allclose(np.asarray(out), np.asarray(ref),
                               rtol=5e-2, atol=5e-2)
    print("KERNEL_OK")
</pallas_src>

<mosaic_0001>
module attributes {stable_mosaic.version = 11 : i64} {
  func.func @_fused_conv_in_lrelu_kernel(%arg0: i32, %arg1: memref<1x108x512xbf16, #tpu.memory_space<vmem>>, %arg2: memref<64x108xbf16, #tpu.memory_space<vmem>>, %arg3: memref<64x1xf32, #tpu.memory_space<vmem>>, %arg4: memref<1x64x512xf32, #tpu.memory_space<vmem>>) attributes {dimension_semantics = [#tpu.dimension_semantics<parallel>], iteration_bounds = array<i64: 2>, scalar_prefetch = 0 : i64, scratch_operands = 0 : i64, tpu.core_type = #tpu.core_type<tc>, window_params = [{transform_indices = @transform_0, window_bounds = array<i64: 1, 108, 512>}, {pipeline_mode = #tpu.pipeline_mode<synchronous>, transform_indices = @transform_1, window_bounds = array<i64: 64, 108>}, {pipeline_mode = #tpu.pipeline_mode<synchronous>, transform_indices = @transform_2, window_bounds = array<i64: 64, 1>}, {transform_indices = @transform_3, window_bounds = array<i64: 1, 64, 512>}]} {
    %c0 = arith.constant 0 : index
    %c0_0 = arith.constant 0 : index
    %0 = vector.load %arg2[%c0, %c0_0] : memref<64x108xbf16, #tpu.memory_space<vmem>>, vector<64x108xbf16>
    %c0_1 = arith.constant 0 : index
    %c0_2 = arith.constant 0 : index
    %c0_3 = arith.constant 0 : index
    %1 = vector.load %arg1[%c0_1, %c0_2, %c0_3] : memref<1x108x512xbf16, #tpu.memory_space<vmem>>, vector<1x108x512xbf16>
    %2 = vector.shape_cast %1 : vector<1x108x512xbf16> to vector<108x512xbf16>
    %cst = arith.constant dense<0.000000e+00> : vector<64x512xf32>
    %3 = tpu.matmul %0, %2, %cst {dimension_numbers = #tpu.dot_dimension_numbers<[1], [0], [0], [1], [0, 0, 1, 1], [], []>} : vector<64x108xbf16>, vector<108x512xbf16>, vector<64x512xf32> -> vector<64x512xf32>
    %c0_4 = arith.constant 0 : index
    %c0_5 = arith.constant 0 : index
    %4 = vector.load %arg3[%c0_4, %c0_5] : memref<64x1xf32, #tpu.memory_space<vmem>>, vector<64x1xf32>
    %5 = vector.broadcast %4 : vector<64x1xf32> to vector<64x512xf32>
    %6 = arith.addf %3, %5 : vector<64x512xf32>
    %cst_6 = arith.constant dense<0.000000e+00> : vector<64xf32>
    %7 = vector.multi_reduction <add>, %6, %cst_6 [1] : vector<64x512xf32> to vector<64xf32>
    %8 = vector.shape_cast %7 : vector<64xf32> to vector<64x1xf32>
    %cst_7 = arith.constant 0.001953125 : f32
    %9 = vector.broadcast %cst_7 : f32 to vector<64x1xf32>
    %10 = arith.mulf %8, %9 : vector<64x1xf32>
    %11 = arith.mulf %6, %6 : vector<64x512xf32>
    %cst_8 = arith.constant dense<0.000000e+00> : vector<64xf32>
    %12 = vector.multi_reduction <add>, %11, %cst_8 [1] : vector<64x512xf32> to vector<64xf32>
    %13 = vector.shape_cast %12 : vector<64xf32> to vector<64x1xf32>
    %cst_9 = arith.constant 0.001953125 : f32
    %14 = vector.broadcast %cst_9 : f32 to vector<64x1xf32>
    %15 = arith.mulf %13, %14 : vector<64x1xf32>
    %16 = arith.mulf %10, %10 : vector<64x1xf32>
    %17 = arith.subf %15, %16 : vector<64x1xf32>
    %cst_10 = arith.constant 0.000000e+00 : f32
    %18 = vector.broadcast %cst_10 : f32 to vector<64x1xf32>
    %19 = arith.maximumf %17, %18 : vector<64x1xf32>
    %20 = vector.broadcast %10 : vector<64x1xf32> to vector<64x512xf32>
    %21 = arith.subf %6, %20 : vector<64x512xf32>
    %cst_11 = arith.constant 9.99999974E-6 : f32
    %22 = vector.broadcast %cst_11 : f32 to vector<64x1xf32>
    %23 = arith.addf %19, %22 : vector<64x1xf32>
    %24 = math.rsqrt %23 : vector<64x1xf32>
    %25 = vector.broadcast %24 : vector<64x1xf32> to vector<64x512xf32>
    %26 = arith.mulf %21, %25 : vector<64x512xf32>
    %cst_12 = arith.constant 0.000000e+00 : f32
    %27 = vector.broadcast %cst_12 : f32 to vector<64x512xf32>
    %28 = arith.cmpf oge, %26, %27 : vector<64x512xf32>
    %cst_13 = arith.constant 0.00999999977 : f32
    %29 = vector.broadcast %cst_13 : f32 to vector<64x512xf32>
    %30 = arith.mulf %29, %26 : vector<64x512xf32>
    %31 = arith.select %28, %26, %30 : vector<64x512xi1>, vector<64x512xf32>
    %32 = vector.shape_cast %31 : vector<64x512xf32> to vector<1x64x512xf32>
    %c0_14 = arith.constant 0 : index
    %c0_15 = arith.constant 0 : index
    %c0_16 = arith.constant 0 : index
    %33 = vector.load %arg4[%c0_14, %c0_15, %c0_16] : memref<1x64x512xf32, #tpu.memory_space<vmem>>, vector<1x64x512xf32>
    tpu.vector_store %arg4[%c0_14, %c0_15, %c0_16], %32 {strides = array<i32>} : memref<1x64x512xf32, #tpu.memory_space<vmem>>, vector<1x64x512xf32>,
    return
  }
  func.func @transform_0(%arg0: i32) -> (i32, i32, i32) {
    %c0_i32 = arith.constant 0 : i32
    %c0_i32_0 = arith.constant 0 : i32
    %c0_i32_1 = arith.constant 0 : i32
    return %arg0, %c0_i32, %c0_i32_0 : i32, i32, i32
  }
  func.func @transform_1(%arg0: i32) -> (i32, i32) {
    %c0_i32 = arith.constant 0 : i32
    %c0_i32_0 = arith.constant 0 : i32
    %c0_i32_1 = arith.constant 0 : i32
    return %c0_i32, %c0_i32_0 : i32, i32
  }
  func.func @transform_2(%arg0: i32) -> (i32, i32) {
    %c0_i32 = arith.constant 0 : i32
    %c0_i32_0 = arith.constant 0 : i32
    %c0_i32_1 = arith.constant 0 : i32
    return %c0_i32, %c0_i32_0 : i32, i32
  }
  func.func @transform_3(%arg0: i32) -> (i32, i32, i32) {
    %c0_i32 = arith.constant 0 : i32
    %c0_i32_0 = arith.constant 0 : i32
    %c0_i32_1 = arith.constant 0 : i32
    return %arg0, %c0_i32, %c0_i32_0 : i32, i32, i32
  }
}

module attributes {stable_mosaic.version = 11 : i64} {
  func.func @_fused_conv_in_lrelu_kernel(%arg0: i32, %arg1: memref<1x1728x512xbf16, #tpu.memory_space<vmem>>, %arg2: memref<64x1728xbf16, #tpu.memory_space<vmem>>, %arg3: memref<64x1xf32, #tpu.memory_space<vmem>>, %arg4: memref<1x64x512xf32, #tpu.memory_space<vmem>>) attributes {dimension_semantics = [#tpu.dimension_semantics<parallel>], iteration_bounds = array<i64: 2>, scalar_prefetch = 0 : i64, scratch_operands = 0 : i64, tpu.core_type = #tpu.core_type<tc>, window_params = [{transform_indices = @transform_0, window_bounds = array<i64: 1, 1728, 512>}, {pipeline_mode = #tpu.pipeline_mode<synchronous>, transform_indices = @transform_1, window_bounds = array<i64: 64, 1728>}, {pipeline_mode = #tpu.pipeline_mode<synchronous>, transform_indices = @transform_2, window_bounds = array<i64: 64, 1>}, {transform_indices = @transform_3, window_bounds = array<i64: 1, 64, 512>}]} {
    %c0 = arith.constant 0 : index
    %c0_0 = arith.constant 0 : index
    %0 = vector.load %arg2[%c0, %c0_0] : memref<64x1728xbf16, #tpu.memory_space<vmem>>, vector<64x1728xbf16>
    %c0_1 = arith.constant 0 : index
    %c0_2 = arith.constant 0 : index
    %c0_3 = arith.constant 0 : index
    %1 = vector.load %arg1[%c0_1, %c0_2, %c0_3] : memref<1x1728x512xbf16, #tpu.memory_space<vmem>>, vector<1x1728x512xbf16>
    %2 = vector.shape_cast %1 : vector<1x1728x512xbf16> to vector<1728x512xbf16>
    %cst = arith.constant dense<0.000000e+00> : vector<64x512xf32>
    %3 = tpu.matmul %0, %2, %cst {dimension_numbers = #tpu.dot_dimension_numbers<[1], [0], [0], [1], [0, 0, 1, 1], [], []>} : vector<64x1728xbf16>, vector<1728x512xbf16>, vector<64x512xf32> -> vector<64x512xf32>
    %c0_4 = arith.constant 0 : index
    %c0_5 = arith.constant 0 : index
    %4 = vector.load %arg3[%c0_4, %c0_5] : memref<64x1xf32, #tpu.memory_space<vmem>>, vector<64x1xf32>
    %5 = vector.broadcast %4 : vector<64x1xf32> to vector<64x512xf32>
    %6 = arith.addf %3, %5 : vector<64x512xf32>
    %cst_6 = arith.constant dense<0.000000e+00> : vector<64xf32>
    %7 = vector.multi_reduction <add>, %6, %cst_6 [1] : vector<64x512xf32> to vector<64xf32>
    %8 = vector.shape_cast %7 : vector<64xf32> to vector<64x1xf32>
    %cst_7 = arith.constant 0.001953125 : f32
    %9 = vector.broadcast %cst_7 : f32 to vector<64x1xf32>
    %10 = arith.mulf %8, %9 : vector<64x1xf32>
    %11 = arith.mulf %6, %6 : vector<64x512xf32>
    %cst_8 = arith.constant dense<0.000000e+00> : vector<64xf32>
    %12 = vector.multi_reduction <add>, %11, %cst_8 [1] : vector<64x512xf32> to vector<64xf32>
    %13 = vector.shape_cast %12 : vector<64xf32> to vector<64x1xf32>
    %cst_9 = arith.constant 0.001953125 : f32
    %14 = vector.broadcast %cst_9 : f32 to vector<64x1xf32>
    %15 = arith.mulf %13, %14 : vector<64x1xf32>
    %16 = arith.mulf %10, %10 : vector<64x1xf32>
    %17 = arith.subf %15, %16 : vector<64x1xf32>
    %cst_10 = arith.constant 0.000000e+00 : f32
    %18 = vector.broadcast %cst_10 : f32 to vector<64x1xf32>
    %19 = arith.maximumf %17, %18 : vector<64x1xf32>
    %20 = vector.broadcast %10 : vector<64x1xf32> to vector<64x512xf32>
    %21 = arith.subf %6, %20 : vector<64x512xf32>
    %cst_11 = arith.constant 9.99999974E-6 : f32
    %22 = vector.broadcast %cst_11 : f32 to vector<64x1xf32>
    %23 = arith.addf %19, %22 : vector<64x1xf32>
    %24 = math.rsqrt %23 : vector<64x1xf32>
    %25 = vector.broadcast %24 : vector<64x1xf32> to vector<64x512xf32>
    %26 = arith.mulf %21, %25 : vector<64x512xf32>
    %cst_12 = arith.constant 0.000000e+00 : f32
    %27 = vector.broadcast %cst_12 : f32 to vector<64x512xf32>
    %28 = arith.cmpf oge, %26, %27 : vector<64x512xf32>
    %cst_13 = arith.constant 0.00999999977 : f32
    %29 = vector.broadcast %cst_13 : f32 to vector<64x512xf32>
    %30 = arith.mulf %29, %26 : vector<64x512xf32>
    %31 = arith.select %28, %26, %30 : vector<64x512xi1>, vector<64x512xf32>
    %32 = vector.shape_cast %31 : vector<64x512xf32> to vector<1x64x512xf32>
    %c0_14 = arith.constant 0 : index
    %c0_15 = arith.constant 0 : index
    %c0_16 = arith.constant 0 : index
    %33 = vector.load %arg4[%c0_14, %c0_15, %c0_16] : memref<1x64x512xf32, #tpu.memory_space<vmem>>, vector<1x64x512xf32>
    tpu.vector_store %arg4[%c0_14, %c0_15, %c0_16], %32 {strides = array<i32>} : memref<1x64x512xf32, #tpu.memory_space<vmem>>, vector<1x64x512xf32>,
    return
  }
  func.func @transform_0(%arg0: i32) -> (i32, i32, i32) {
    %c0_i32 = arith.constant 0 : i32
    %c0_i32_0 = arith.constant 0 : i32
    %c0_i32_1 = arith.constant 0 : i32
    return %arg0, %c0_i32, %c0_i32_0 : i32, i32, i32
  }
  func.func @transform_1(%arg0: i32) -> (i32, i32) {
    %c0_i32 = arith.constant 0 : i32
    %c0_i32_0 = arith.constant 0 : i32
    %c0_i32_1 = arith.constant 0 : i32
    return %c0_i32, %c0_i32_0 : i32, i32
  }
  func.func @transform_2(%arg0: i32) -> (i32, i32) {
    %c0_i32 = arith.constant 0 : i32
    %c0_i32_0 = arith.constant 0 : i32
    %c0_i32_1 = arith.constant 0 : i32
    return %c0_i32, %c0_i32_0 : i32, i32
  }
  func.func @transform_3(%arg0: i32) -> (i32, i32, i32) {
    %c0_i32 = arith.constant 0 : i32
    %c0_i32_0 = arith.constant 0 : i32
    %c0_i32_1 = arith.constant 0 : i32
    return %arg0, %c0_i32, %c0_i32_0 : i32, i32, i32
  }
}

</mosaic_0001>

<llo_original>
// kernel: conv_block_pallas.2
$region0: #{conv_block_pallas.2}
  #allocation0 [shape = 'u32[]', space=smem, size = 0x4, offset = 0x4, fixed_abs, tag = 'smem constant byte address 0x4 - core index']
  #allocation1 [shape = 'u32[144,128]{1,0:T(1,128)}', space=vmem, size = 0x12000, scoped, tag = 'internal scratch']
  %s0 = inlined_call_operand.vmem [shape: bf16[2,108,512], index: 0, kind: input, shape index: {}]
  %s1 = inlined_call_operand.vmem [shape: bf16[64,108], index: 1, kind: input, shape index: {}]
  %s2 = inlined_call_operand.vmem [shape: f32[64,1], index: 2, kind: input, shape index: {}]
  %s3 = inlined_call_operand.vmem [shape: f32[2,64,512], index: 3, kind: output, shape index: {}]
  %s4 = sld [smem:[#allocation0]]
  $region45: #{conv_block_pallas.2} parent=0
    _
  %s6 = ssub.s32 1, %s4
  %s7 = scalar_select 0, %s6, %s4
  loop: start=0, step=1, limit=4
  $region2: #{conv_block_pallas.2} parent=0 // loop_pre_header
    _
  $region3: #{conv_block_pallas.2} parent=0 // loop_header
    %s9 = sphi 0, %s13
    %p10 = scmp.ge.s32.totalorder %s9, 4
    %s19 = sphi 0, %s21
    %s22 = sphi 0, %s19
    %s23 = sphi 0, %s22
    %s39 = sphi 0, %s23
    %s43 = sphi 0, %s43
    %s45 = sphi 0, %s43
    %s46 = sphi 0, %s45
    %s60 = sphi 0, %s46
    %s64 = sphi 0, %s64
    %s66 = sphi 0, %s64
    %s67 = sphi 0, %s66
    %s81 = sphi 0, %s67
    %s87 = sphi 0, %s89
    %s90 = sphi 0, %s87
    %s91 = sphi 0, %s90
    %s107 = sphi 0, %s91
  $region4: #{conv_block_pallas.2} parent=0 // loop_header_branch
    %12 = sbr.rel (%p10) target = $region8
  $region5: #{conv_block_pallas.2} parent=0 // loop_body
    %s14 = ssub.s32 %s9, 1
    %s15 = ssub.s32 %s9, 2
    %s16 = sadd.s32 %s9, 1
    %s17 = ssub.s32 %s9, %s16
    %p18 = scmp.eq.s32.totalorder %s17, 0
    %s20 = sadd.s32 %s19, 1
    %s21 = scalar_select %p18, %s19, %s20
    %p24 = pneg %p18
    %p25 = scmp.eq.s32.totalorder %s9, 1
    %p26 = por %p24, %p25
    %p27 = scmp.ne.s32.totalorder %s19, %s22
    %p28 = scmp.eq.s32.totalorder %s9, 0
    %p29 = por %p27, %p28
    %p30 = scmp.ne.s32.totalorder %s19, %s22
    %p31 = scmp.eq.s32.totalorder %s14, 1
    %p32 = por %p30, %p31
    %p33 = scmp.ne.s32.totalorder %s22, %s23
    %p34 = scmp.eq.s32.totalorder %s14, 0
    %p35 = por %p33, %p34
    %p36 = scmp.ne.s32.totalorder %s22, %s23
    %p37 = scmp.eq.s32.totalorder %s15, 1
    %p38 = por %p36, %p37
    %p40 = scmp.ne.s32.totalorder %s23, %s39
    %p41 = scmp.eq.s32.totalorder %s15, 0
    %p42 = por %p40, %p41
    %s44 = sadd.s32 %s43, 1
    %p47 = scmp.eq.s32.totalorder %s9, 1
    %p48 = scmp.ne.s32.totalorder %s43, %s45
    %p49 = scmp.eq.s32.totalorder %s9, 0
    %p50 = por %p48, %p49
    %p51 = scmp.ne.s32.totalorder %s43, %s45
    %p52 = scmp.eq.s32.totalorder %s14, 1
    %p53 = por %p51, %p52
    %p54 = scmp.ne.s32.totalorder %s45, %s46
    %p55 = scmp.eq.s32.totalorder %s14, 0
    %p56 = por %p54, %p55
    %p57 = scmp.ne.s32.totalorder %s45, %s46
    %p58 = scmp.eq.s32.totalorder %s15, 1
    %p59 = por %p57, %p58
    %p61 = scmp.ne.s32.totalorder %s46, %s60
    %p62 = scmp.eq.s32.totalorder %s15, 0
    %p63 = por %p61, %p62
    %s65 = sadd.s32 %s64, 1
    %p68 = scmp.eq.s32.totalorder %s9, 1
    %p69 = scmp.ne.s32.totalorder %s64, %s66
    %p70 = scmp.eq.s32.totalorder %s9, 0
    %p71 = por %p69, %p70
    %p72 = scmp.ne.s32.totalorder %s64, %s66
    %p73 = scmp.eq.s32.totalorder %s14, 1
    %p74 = por %p72, %p73
    %p75 = scmp.ne.s32.totalorder %s66, %s67
    %p76 = scmp.eq.s32.totalorder %s14, 0
    %p77 = por %p75, %p76
    %p78 = scmp.ne.s32.totalorder %s66, %s67
    %p79 = scmp.eq.s32.totalorder %s15, 1
    %p80 = por %p78, %p79
    %p82 = scmp.ne.s32.totalorder %s67, %s81
    %p83 = scmp.eq.s32.totalorder %s15, 0
    %p84 = por %p82, %p83
    %s85 = ssub.s32 %s9, %s16
    %p86 = scmp.eq.s32.totalorder %s85, 0
    %s88 = sadd.s32 %s87, 1
    %s89 = scalar_select %p86, %s87, %s88
    %p92 = pneg %p86
    %p93 = scmp.eq.s32.totalorder %s9, 1
    %p94 = por %p92, %p93
    %p95 = scmp.ne.s32.totalorder %s87, %s90
    %p96 = scmp.eq.s32.totalorder %s9, 0
    %p97 = por %p95, %p96
    %p98 = scmp.ne.s32.totalorder %s87, %s90
    %p99 = scmp.eq.s32.totalorder %s14, 1
    %p100 = por %p98, %p99
    %p101 = scmp.ne.s32.totalorder %s90, %s91
    %p102 = scmp.eq.s32.totalorder %s14, 0
    %p103 = por %p101, %p102
    %p104 = scmp.ne.s32.totalorder %s90, %s91
    %p105 = scmp.eq.s32.totalorder %s15, 1
    %p106 = por %p104, %p105
    %p108 = scmp.ne.s32.totalorder %s91, %s107
    %p109 = scmp.eq.s32.totalorder %s15, 0
    %p110 = por %p108, %p109
    %p111 = scmp.le.s32.totalorder 1, %s9
    %p112 = scmp.lt.s32.totalorder %s9, 3
    %p113 = pnand %p111, %p112
    %p114 = pneg %p113
    // Predicated region
    $region9: #{conv_block_pallas.2} parent=5 // pred_check
      _
    $region10: #{conv_block_pallas.2} parent=5 // pred_check_branch
      %116 = sbr.rel (%p113) target = $region12
    $region11: #{conv_block_pallas.2} parent=5 // pred_region
      %s117 = ssub.s32 %s9, 1
      // Predicated region
      $region13: #{conv_block_pallas.2} parent=11 // pred_check
        %p118 = pneg %p56
      $region14: #{conv_block_pallas.2} parent=11 // pred_check_branch
        %120 = sbr.rel (%p118) target = $region16
      $region15: #{conv_block_pallas.2} parent=11 // pred_region
        _
      $region16: #{conv_block_pallas.2} parent=11 // pred_fallthru
        _
      // Predicated region
      $region17: #{conv_block_pallas.2} parent=11 // pred_check
        %p121 = pneg %p77
      $region18: #{conv_block_pallas.2} parent=11 // pred_check_branch
        %123 = sbr.rel (%p121) target = $region20
      $region19: #{conv_block_pallas.2} parent=11 // pred_region
        _
      $region20: #{conv_block_pallas.2} parent=11 // pred_fallthru
        _
    $region12: #{conv_block_pallas.2} parent=5 // pred_fallthru
      _
    %p124 = scmp.lt.s32.totalorder %s9, 2
    // Predicated region
    $region21: #{conv_block_pallas.2} parent=5 // pred_check
      %p125 = pneg %p124
    $region22: #{conv_block_pallas.2} parent=5 // pred_check_branch
      %127 = sbr.rel (%p125) target = $region24
    $region23: #{conv_block_pallas.2} parent=5 // pred_region
      // Predicated region
      $region25: #{conv_block_pallas.2} parent=23 // pred_check
        %p128 = pneg %p29
      $region26: #{conv_block_pallas.2} parent=23 // pred_check_branch
        %130 = sbr.rel (%p128) target = $region28
      $region27: #{conv_block_pallas.2} parent=23 // pred_region
        %p131 = scmp.lt.s32.totalorder %s9, 1
        %s132 = scalar_select %p131, %s9, 1
        %s133 = smul.addr %s132, 56
        %s134 = smul.addr %s133, 4
        %s135 = scalar_lea.vmem %s0, %s134
      $region28: #{conv_block_pallas.2} parent=23 // pred_fallthru
        _
    $region24: #{conv_block_pallas.2} parent=5 // pred_fallthru
      _
    %p136 = scmp.le.s32.totalorder 1, %s9
    %p137 = scmp.lt.s32.totalorder %s9, 3
    %p138 = pnand %p136, %p137
    %p139 = pneg %p138
    // Predicated region
    $region29: #{conv_block_pallas.2} parent=5 // pred_check
      _
    $region30: #{conv_block_pallas.2} parent=5 // pred_check_branch
      %141 = sbr.rel (%p138) target = $region32
    $region31: #{conv_block_pallas.2} parent=5 // pred_region
      %s142 = ssub.s32 %s9, 1
      %p143 = scmp.lt.s32.totalorder %s14, 1
      %s144 = scalar_select %p143, %s14, 1
      %s145 = smul.addr %s144, 56
      %s146 = smul.addr %s145, 4
      %s147 = scalar_lea.vmem %s0, %s146
      %p148 = pneg %p35
      %p149 = pneg %p32
      %p150 = pneg %p56
      %p151 = pneg %p53
      %p152 = pneg %p77
      %p153 = pneg %p74
      %p154 = pneg %p103
      %p155 = pneg %p100
      %p156 = scmp.lt.s32.totalorder %s14, 1
      %s157 = scalar_select %p156, %s14, 1
      %s158 = smul.addr %s157, 32
      %s159 = smul.addr %s158, 8
      %s160 = scalar_lea.vmem %s3, %s159
      %p161 = scmp.lt.s32.totalorder %s14, 1
      %s162 = scalar_select %p161, %s14, 1
      %s163 = smul.addr %s162, 56
      %s164 = smul.addr %s163, 4
      %s165 = scalar_lea.vmem %s0, %s164
      %p166 = scmp.lt.s32.totalorder %s14, 1
      %s167 = scalar_select %p166, %s14, 1
      %s168 = smul.addr %s167, 32
      %s169 = smul.addr %s168, 8
      %s170 = scalar_lea.vmem %s3, %s169
      %v172 = vld [vmem:[%s1] sm:$0xf]
      %v173 = vld [vmem:[%s1 + $0x4] sm:$0xf]
      %v174 = vld [vmem:[%s1 + $0x8] sm:$0xf]
      %v175 = vld [vmem:[%s1 + $0xc] sm:$0xf]
      %v176 = vld [vmem:[%s1 + $0x10] sm:$0xf]
      %v177 = vld [vmem:[%s1 + $0x14] sm:$0xf]
      %v178 = vld [vmem:[%s1 + $0x18] sm:$0xf]
      %v179 = vld [vmem:[%s1 + $0x1c] sm:$0xf]
      %v180 = vld [vmem:[%s165] sm:$0xff]
      %v181 = vld [vmem:[%s165 + $0x8] sm:$0xff]
      %v182 = vld [vmem:[%s165 + $0x10] sm:$0xff]
      %v183 = vld [vmem:[%s165 + $0x18] sm:$0xff]
      %v184 = vld [vmem:[%s165 + $0x20] sm:$0xff]
      %v185 = vld [vmem:[%s165 + $0x28] sm:$0xff]
      %v186 = vld [vmem:[%s165 + $0x30] sm:$0xff]
      %v187 = vld [vmem:[%s165 + $0x38] sm:$0xff]
      %v188 = vld [vmem:[%s165 + $0x40] sm:$0xff]
      %v189 = vld [vmem:[%s165 + $0x48] sm:$0xff]
      %v190 = vld [vmem:[%s165 + $0x50] sm:$0xff]
      %v191 = vld [vmem:[%s165 + $0x58] sm:$0xff]
      %v192 = vld [vmem:[%s165 + $0x60] sm:$0xff]
      %v193 = vld [vmem:[%s165 + $0x68] sm:$0xff]
      %v194 = vld [vmem:[%s165 + $0x70] sm:$0xff]
      %v195 = vld [vmem:[%s165 + $0x78] sm:$0xff]
      %v196 = vld [vmem:[%s165 + $0x80] sm:$0xff]
      %v197 = vld [vmem:[%s165 + $0x88] sm:$0xff]
      %v198 = vld [vmem:[%s165 + $0x90] sm:$0xff]
      %v199 = vld [vmem:[%s165 + $0x98] sm:$0xff]
      %v200 = vld [vmem:[%s165 + $0xa0] sm:$0xff]
      %v201 = vld [vmem:[%s165 + $0xa8] sm:$0xff]
      %v202 = vld [vmem:[%s165 + $0xb0] sm:$0xff]
      %v203 = vld [vmem:[%s165 + $0xb8] sm:$0xff]
      %v204 = vld [vmem:[%s165 + $0xc0] sm:$0xff]
      %v205 = vld [vmem:[%s165 + $0xc8] sm:$0xff]
      %v206 = vld [vmem:[%s165 + $0xd0] sm:$0x33]
      %v207 = vld [vmem:[%s165 + $0xd8] sm:$0x33]
      %v208 = vld [vmem:[%s2] sm:$0xff]
      %v209 = vld [vmem:[%s2 + $0x8] sm:$0xff]
      %v210 = vld [vmem:[%s2 + $0x10] sm:$0xff]
      %v211 = vld [vmem:[%s2 + $0x18] sm:$0xff]
      %v212 = vld [vmem:[%s2 + $0x20] sm:$0xff]
      %v213 = vld [vmem:[%s2 + $0x28] sm:$0xff]
      %v214 = vld [vmem:[%s2 + $0x30] sm:$0xff]
      %v215 = vld [vmem:[%s2 + $0x38] sm:$0xff]
      %217 = vset.pattern.permute.xlu0 0
      %218 = vperm.xlu0 %217, %v208
      %v219 = vpop.permute.xlu0 %218
      %222 = vset.pattern.permute.xlu0 0
      %223 = vperm.xlu0 %222, %v209
      %v224 = vpop.permute.xlu0 %223
      %227 = vset.pattern.permute.xlu0 0
      %228 = vperm.xlu0 %227, %v210
      %v229 = vpop.permute.xlu0 %228
      %232 = vset.pattern.permute.xlu0 0
      %233 = vperm.xlu0 %232, %v211
      %v234 = vpop.permute.xlu0 %233
      %237 = vset.pattern.permute.xlu0 0
      %238 = vperm.xlu0 %237, %v212
      %v239 = vpop.permute.xlu0 %238
      %242 = vset.pattern.permute.xlu0 0
      %243 = vperm.xlu0 %242, %v213
      %v244 = vpop.permute.xlu0 %243
      %247 = vset.pattern.permute.xlu0 0
      %248 = vperm.xlu0 %247, %v214
      %v249 = vpop.permute.xlu0 %248
      %252 = vset.pattern.permute.xlu0 0
      %253 = vperm.xlu0 %252, %v215
      %v254 = vpop.permute.xlu0 %253
      %v264 = vunpack.c.l.b16 %v172
      %v265 = vunpack.c.l.b16 %v173
      %v266 = vunpack.c.l.b16 %v174
      %v267 = vunpack.c.l.b16 %v175
      %v268 = vunpack.c.l.b16 %v176
      %v269 = vunpack.c.l.b16 %v177
      %v270 = vunpack.c.l.b16 %v178
      %v271 = vunpack.c.l.b16 %v179
      %v272 = vpack.c.b16 %v265, %v264
      %v273 = vpack.c.b16 %v267, %v266
      %v274 = vpack.c.b16 %v269, %v268
      %v275 = vpack.c.b16 %v271, %v270
      %v304 = vunpack.c.l.b16 %v180
      %v305 = vunpack.c.h.b16 %v180
      %v306 = vunpack.c.l.b16 %v181
      %v307 = vunpack.c.h.b16 %v181
      %v308 = vunpack.c.l.b16 %v182
      %v309 = vunpack.c.h.b16 %v182
      %v310 = vunpack.c.l.b16 %v183
      %v311 = vunpack.c.h.b16 %v183
      %v312 = vunpack.c.l.b16 %v184
      %v313 = vunpack.c.h.b16 %v184
      %v314 = vunpack.c.l.b16 %v185
      %v315 = vunpack.c.h.b16 %v185
      %v316 = vunpack.c.l.b16 %v186
      %v317 = vunpack.c.h.b16 %v186
      %v318 = vunpack.c.l.b16 %v187
      %v319 = vunpack.c.h.b16 %v187
      %v320 = vunpack.c.l.b16 %v188
      %v321 = vunpack.c.h.b16 %v188
      %v322 = vunpack.c.l.b16 %v189
      %v323 = vunpack.c.h.b16 %v189
      %v324 = vunpack.c.l.b16 %v190
      %v325 = vunpack.c.h.b16 %v190
      %v326 = vunpack.c.l.b16 %v191
      %v327 = vunpack.c.h.b16 %v191
      %v328 = vunpack.c.l.b16 %v192
      %v329 = vunpack.c.h.b16 %v192
      %v330 = vunpack.c.l.b16 %v193
      %v331 = vunpack.c.h.b16 %v193
      %v332 = vunpack.c.l.b16 %v194
      %v333 = vunpack.c.h.b16 %v194
      %v334 = vunpack.c.l.b16 %v195
      %v335 = vunpack.c.h.b16 %v195
      %v336 = vunpack.c.l.b16 %v196
      %v337 = vunpack.c.h.b16 %v196
      %v338 = vunpack.c.l.b16 %v197
      %v339 = vunpack.c.h.b16 %v197
      %v340 = vunpack.c.l.b16 %v198
      %v341 = vunpack.c.h.b16 %v198
      %v342 = vunpack.c.l.b16 %v199
      %v343 = vunpack.c.h.b16 %v199
      %v344 = vunpack.c.l.b16 %v200
      %v345 = vunpack.c.h.b16 %v200
      %v346 = vunpack.c.l.b16 %v201
      %v347 = vunpack.c.h.b16 %v201
      %v348 = vunpack.c.l.b16 %v202
      %v349 = vunpack.c.h.b16 %v202
      %v350 = vunpack.c.l.b16 %v203
      %v351 = vunpack.c.h.b16 %v203
      %v352 = vunpack.c.l.b16 %v204
      %v353 = vunpack.c.h.b16 %v204
      %v354 = vunpack.c.l.b16 %v205
      %v355 = vunpack.c.h.b16 %v205
      %v356 = vunpack.c.l.b16 %v206
      %v357 = vunpack.c.h.b16 %v206
      %v358 = vunpack.c.l.b16 %v207
      %v359 = vunpack.c.h.b16 %v207
      %v360 = vpack.c.b16 %v308, %v304
      %v361 = vpack.c.b16 %v309, %v305
      %v362 = vpack.c.b16 %v310, %v306
      %v363 = vpack.c.b16 %v311, %v307
      %v364 = vpack.c.b16 %v316, %v312
      %v365 = vpack.c.b16 %v317, %v313
      %v366 = vpack.c.b16 %v318, %v314
      %v367 = vpack.c.b16 %v319, %v315
      %v368 = vpack.c.b16 %v324, %v320
      %v369 = vpack.c.b16 %v325, %v321
      %v370 = vpack.c.b16 %v326, %v322
      %v371 = vpack.c.b16 %v327, %v323
      %v372 = vpack.c.b16 %v332, %v328
      %v373 = vpack.c.b16 %v333, %v329
      %v374 = vpack.c.b16 %v334, %v330
      %v375 = vpack.c.b16 %v335, %v331
      %v376 = vpack.c.b16 %v340, %v336
      %v377 = vpack.c.b16 %v341, %v337
      %v378 = vpack.c.b16 %v342, %v338
      %v379 = vpack.c.b16 %v343, %v339
      %v380 = vpack.c.b16 %v348, %v344
      %v381 = vpack.c.b16 %v349, %v345
      %v382 = vpack.c.b16 %v350, %v346
      %v383 = vpack.c.b16 %v351, %v347
      %v384 = vpack.c.b16 %v356, %v352
      %v385 = vpack.c.b16 %v357, %v353
      %v386 = vpack.c.b16 %v358, %v354
      %v387 = vpack.c.b16 %v359, %v355
      %vm412 = vcmask 883712
      %v414 = vsel %vm412, %v272, 0
      %v417 = vsel %vm412, %v273, 0
      %v420 = vsel %vm412, %v274, 0
      %v423 = vsel %vm412, %v275, 0
      %vm425 = vcmask 1045504
      %v427 = vsel %vm425, %v384, 0
      %v430 = vsel %vm425, %v385, 0
      %v433 = vsel %vm425, %v386, 0
      %v436 = vsel %vm425, %v387, 0
      %438 = vmatprep.subr.bf16.mxu0 0
      %439 = vmatpush1.bf16.msra.mxu0 0
      %440 = vmatprep.subr.bf16.mxu0 %v430
      %441 = vmatpush1.bf16.msra.mxu0 %v427
      %442 = vmatprep.subr.bf16.mxu0 %v381
      %443 = vmatpush1.bf16.msra.mxu0 %v380
      %444 = vmatprep.subr.bf16.mxu0 %v377
      %445 = vmatpush1.bf16.msra.mxu0 %v376
      %446 = vmatprep.subr.bf16.mxu0 %v373
      %447 = vmatpush1.bf16.msra.mxu0 %v372
      %448 = vmatprep.subr.bf16.mxu0 %v369
      %449 = vmatpush1.bf16.msra.mxu0 %v368
      %450 = vmatprep.subr.bf16.mxu0 %v365
      %451 = vmatpush1.bf16.msra.mxu0 %v364
      %452 = vmatprep.subr.bf16.mxu0 %v361
      %453 = vmatpush1.bf16.msra.mxu0 %v360
      %454 = vmatprep.subr.bf16.mxu0 0
      %455 = vmatpush2.bf16.msra.mxu0 0
      %456 = vmatprep.subr.bf16.mxu0 0
      %457 = vmatpush2.bf16.msra.mxu0 0
      %458 = vmatprep.subr.bf16.mxu0 0
      %459 = vmatpush2.bf16.msra.mxu0 0
      %460 = vmatprep.subr.bf16.mxu0 0
      %461 = vmatpush2.bf16.msra.mxu0 0
      %462 = vmatprep.subr.bf16.mxu0 0
      %463 = vmatpush2.bf16.msra.mxu0 0
      %464 = vmatprep.subr.bf16.mxu0 0
      %465 = vmatpush2.bf16.msra.mxu0 0
      %466 = vmatprep.subr.bf16.mxu0 0
      %467 = vmatpush2.bf16.msra.mxu0 0
      %468 = vmatprep.subr.bf16.mxu0 0
      %469 = vmatpush2.bf16.msra.mxu0 0
      %470 = vmatprep.mubr.bf16.mxu0 0
      %471 = vmatmul.mubr.bf16.gmra.mxu0 %v414
      %v472 = vpop.f32.mrf.mxu0
      %v473 = vadd.f32 %v219, %v472
      %v474 = vpop.f32.mrf.mxu0
      %v475 = vadd.f32 %v219, %v474
      %v476 = vpop.f32.mrf.mxu0
      %v477 = vadd.f32 %v224, %v476
      %v478 = vpop.f32.mrf.mxu0
      %v479 = vadd.f32 %v224, %v478
      %480 = vmatprep.mubr.bf16.mxu0 0
      %481 = vmatmul.mubr.bf16.gmra.mxu0 %v417
      %v482 = vpop.f32.mrf.mxu0
      %v483 = vadd.f32 %v229, %v482
      %v484 = vpop.f32.mrf.mxu0
      %v485 = vadd.f32 %v229, %v484
      %v486 = vpop.f32.mrf.mxu0
      %v487 = vadd.f32 %v234, %v486
      %v488 = vpop.f32.mrf.mxu0
      %v489 = vadd.f32 %v234, %v488
      %490 = vmatprep.mubr.bf16.mxu0 0
      %491 = vmatmul.mubr.bf16.gmra.mxu0 %v420
      %v492 = vpop.f32.mrf.mxu0
      %v493 = vadd.f32 %v239, %v492
      %v494 = vpop.f32.mrf.mxu0
      %v495 = vadd.f32 %v239, %v494
      %v496 = vpop.f32.mrf.mxu0
      %v497 = vadd.f32 %v244, %v496
      %v498 = vpop.f32.mrf.mxu0
      %v499 = vadd.f32 %v244, %v498
      %500 = vmatprep.mubr.bf16.mxu0 0
      %501 = vmatmul.mubr.bf16.gmra.mxu0 %v423
      %v502 = vpop.f32.mrf.mxu0
      %v503 = vadd.f32 %v249, %v502
      %v504 = vpop.f32.mrf.mxu0
      %v505 = vadd.f32 %v249, %v504
      %v506 = vpop.f32.mrf.mxu0
      %v507 = vadd.f32 %v254, %v506
      %v508 = vpop.f32.mrf.mxu0
      %v509 = vadd.f32 %v254, %v508
      %510 = vdwg.mxu0
      %511 = vmatprep.subr.bf16.mxu0 0
      %512 = vmatpush1.bf16.msra.mxu0 0
      %513 = vmatprep.subr.bf16.mxu0 %v436
      %514 = vmatpush1.bf16.msra.mxu0 %v433
      %515 = vmatprep.subr.bf16.mxu0 %v383
      %516 = vmatpush1.bf16.msra.mxu0 %v382
      %517 = vmatprep.subr.bf16.mxu0 %v379
      %518 = vmatpush1.bf16.msra.mxu0 %v378
      %519 = vmatprep.subr.bf16.mxu0 %v375
      %520 = vmatpush1.bf16.msra.mxu0 %v374
      %521 = vmatprep.subr.bf16.mxu0 %v371
      %522 = vmatpush1.bf16.msra.mxu0 %v370
      %523 = vmatprep.subr.bf16.mxu0 %v367
      %524 = vmatpush1.bf16.msra.mxu0 %v366
      %525 = vmatprep.subr.bf16.mxu0 %v363
      %526 = vmatpush1.bf16.msra.mxu0 %v362
      %527 = vmatprep.subr.bf16.mxu0 0
      %528 = vmatpush2.bf16.msra.mxu0 0
      %529 = vmatprep.subr.bf16.mxu0 0
      %530 = vmatpush2.bf16.msra.mxu0 0
      %531 = vmatprep.subr.bf16.mxu0 0
      %532 = vmatpush2.bf16.msra.mxu0 0
      %533 = vmatprep.subr.bf16.mxu0 0
      %534 = vmatpush2.bf16.msra.mxu0 0
      %535 = vmatprep.subr.bf16.mxu0 0
      %536 = vmatpush2.bf16.msra.mxu0 0
      %537 = vmatprep.subr.bf16.mxu0 0
      %538 = vmatpush2.bf16.msra.mxu0 0
      %539 = vmatprep.subr.bf16.mxu0 0
      %540 = vmatpush2.bf16.msra.mxu0 0
      %541 = vmatprep.subr.bf16.mxu0 0
      %542 = vmatpush2.bf16.msra.mxu0 0
      %543 = vmatprep.mubr.bf16.mxu0 0
      %544 = vmatmul.mubr.bf16.gmra.mxu0 %v414
      %v545 = vpop.f32.mrf.mxu0
      %v546 = vadd.f32 %v219, %v545
      %v547 = vpop.f32.mrf.mxu0
      %v548 = vadd.f32 %v219, %v547
      %v549 = vpop.f32.mrf.mxu0
      %v550 = vadd.f32 %v224, %v549
      %v551 = vpop.f32.mrf.mxu0
      %v552 = vadd.f32 %v224, %v551
      %553 = vmatprep.mubr.bf16.mxu0 0
      %554 = vmatmul.mubr.bf16.gmra.mxu0 %v417
      %v555 = vpop.f32.mrf.mxu0
      %v556 = vadd.f32 %v229, %v555
      %v557 = vpop.f32.mrf.mxu0
      %v558 = vadd.f32 %v229, %v557
      %v559 = vpop.f32.mrf.mxu0
      %v560 = vadd.f32 %v234, %v559
      %v561 = vpop.f32.mrf.mxu0
      %v562 = vadd.f32 %v234, %v561
      %563 = vmatprep.mubr.bf16.mxu0 0
      %564 = vmatmul.mubr.bf16.gmra.mxu0 %v420
      %v565 = vpop.f32.mrf.mxu0
      %v566 = vadd.f32 %v239, %v565
      %v567 = vpop.f32.mrf.mxu0
      %v568 = vadd.f32 %v239, %v567
      %v569 = vpop.f32.mrf.mxu0
      %v570 = vadd.f32 %v244, %v569
      %v571 = vpop.f32.mrf.mxu0
      %v572 = vadd.f32 %v244, %v571
      %573 = vmatprep.mubr.bf16.mxu0 0
      %574 = vmatmul.mubr.bf16.gmra.mxu0 %v423
      %v575 = vpop.f32.mrf.mxu0
      %v576 = vadd.f32 %v249, %v575
      %v577 = vpop.f32.mrf.mxu0
      %v578 = vadd.f32 %v249, %v577
      %v579 = vpop.f32.mrf.mxu0
      %v580 = vadd.f32 %v254, %v579
      %v581 = vpop.f32.mrf.mxu0
      %v582 = vadd.f32 %v254, %v581
      %583 = vdwg.mxu0
      %v584 = vadd.f32 %v473, %v475
      %v585 = vadd.f32 %v584, %v546
      %v586 = vadd.f32 %v585, %v548
      %587 = vadd.xlane.f32.xlu0 %v586
      %v588 = vpop.xlane.xlu0 %587
      %v589 = vadd.f32 %v477, %v479
      %v590 = vadd.f32 %v589, %v550
      %v591 = vadd.f32 %v590, %v552
      %592 = vadd.xlane.f32.xlu0 %v591
      %v593 = vpop.xlane.xlu0 %592
      %v594 = vadd.f32 %v483, %v485
      %v595 = vadd.f32 %v594, %v556
      %v596 = vadd.f32 %v595, %v558
      %597 = vadd.xlane.f32.xlu0 %v596
      %v598 = vpop.xlane.xlu0 %597
      %v599 = vadd.f32 %v487, %v489
      %v600 = vadd.f32 %v599, %v560
      %v601 = vadd.f32 %v600, %v562
      %602 = vadd.xlane.f32.xlu0 %v601
      %v603 = vpop.xlane.xlu0 %602
      %v604 = vadd.f32 %v493, %v495
      %v605 = vadd.f32 %v604, %v566
      %v606 = vadd.f32 %v605, %v568
      %607 = vadd.xlane.f32.xlu0 %v606
      %v608 = vpop.xlane.xlu0 %607
      %v609 = vadd.f32 %v497, %v499
      %v610 = vadd.f32 %v609, %v570
      %v611 = vadd.f32 %v610, %v572
      %612 = vadd.xlane.f32.xlu0 %v611
      %v613 = vpop.xlane.xlu0 %612
      %v614 = vadd.f32 %v503, %v505
      %v615 = vadd.f32 %v614, %v576
      %v616 = vadd.f32 %v615, %v578
      %617 = vadd.xlane.f32.xlu0 %v616
      %v618 = vpop.xlane.xlu0 %617
      %v619 = vadd.f32 %v507, %v509
      %v620 = vadd.f32 %v619, %v580
      %v621 = vadd.f32 %v620, %v582
      %622 = vadd.xlane.f32.xlu0 %v621
      %v623 = vpop.xlane.xlu0 %622
      %v624 = vmul.f32 %v588, 0.001953125
      %v625 = vmul.f32 %v593, 0.001953125
      %v626 = vmul.f32 %v598, 0.001953125
      %v627 = vmul.f32 %v603, 0.001953125
      %v628 = vmul.f32 %v608, 0.001953125
      %v629 = vmul.f32 %v613, 0.001953125
      %v630 = vmul.f32 %v618, 0.001953125
      %v631 = vmul.f32 %v623, 0.001953125
      %v632 = vmul.f32 %v473, %v473
      %v633 = vmul.f32 %v475, %v475
      %v634 = vmul.f32 %v546, %v546
      %v635 = vmul.f32 %v548, %v548
      %v636 = vmul.f32 %v477, %v477
      %v637 = vmul.f32 %v479, %v479
      %v638 = vmul.f32 %v550, %v550
      %v639 = vmul.f32 %v552, %v552
      %v640 = vmul.f32 %v483, %v483
      %v641 = vmul.f32 %v485, %v485
      %v642 = vmul.f32 %v556, %v556
      %v643 = vmul.f32 %v558, %v558
      %v644 = vmul.f32 %v487, %v487
      %v645 = vmul.f32 %v489, %v489
      %v646 = vmul.f32 %v560, %v560
      %v647 = vmul.f32 %v562, %v562
      %v648 = vmul.f32 %v493, %v493
      %v649 = vmul.f32 %v495, %v495
      %v650 = vmul.f32 %v566, %v566
      %v651 = vmul.f32 %v568, %v568
      %v652 = vmul.f32 %v497, %v497
      %v653 = vmul.f32 %v499, %v499
      %v654 = vmul.f32 %v570, %v570
      %v655 = vmul.f32 %v572, %v572
      %v656 = vmul.f32 %v503, %v503
      %v657 = vmul.f32 %v505, %v505
      %v658 = vmul.f32 %v576, %v576
      %v659 = vmul.f32 %v578, %v578
      %v660 = vmul.f32 %v507, %v507
      %v661 = vmul.f32 %v509, %v509
      %v662 = vmul.f32 %v580, %v580
      %v663 = vmul.f32 %v582, %v582
      %v664 = vadd.f32 %v632, %v633
      %v665 = vadd.f32 %v664, %v634
      %v666 = vadd.f32 %v665, %v635
      %667 = vadd.xlane.f32.xlu0 %v666
      %v668 = vpop.xlane.xlu0 %667
      %v669 = vadd.f32 %v636, %v637
      %v670 = vadd.f32 %v669, %v638
      %v671 = vadd.f32 %v670, %v639
      %672 = vadd.xlane.f32.xlu0 %v671
      %v673 = vpop.xlane.xlu0 %672
      %v674 = vadd.f32 %v640, %v641
      %v675 = vadd.f32 %v674, %v642
      %v676 = vadd.f32 %v675, %v643
      %677 = vadd.xlane.f32.xlu0 %v676
      %v678 = vpop.xlane.xlu0 %677
      %v679 = vadd.f32 %v644, %v645
      %v680 = vadd.f32 %v679, %v646
      %v681 = vadd.f32 %v680, %v647
      %682 = vadd.xlane.f32.xlu0 %v681
      %v683 = vpop.xlane.xlu0 %682
      %v684 = vadd.f32 %v648, %v649
      %v685 = vadd.f32 %v684, %v650
      %v686 = vadd.f32 %v685, %v651
      %687 = vadd.xlane.f32.xlu0 %v686
      %v688 = vpop.xlane.xlu0 %687
      %v689 = vadd.f32 %v652, %v653
      %v690 = vadd.f32 %v689, %v654
      %v691 = vadd.f32 %v690, %v655
      %692 = vadd.xlane.f32.xlu0 %v691
      %v693 = vpop.xlane.xlu0 %692
      %v694 = vadd.f32 %v656, %v657
      %v695 = vadd.f32 %v694, %v658
      %v696 = vadd.f32 %v695, %v659
      %697 = vadd.xlane.f32.xlu0 %v696
      %v698 = vpop.xlane.xlu0 %697
      %v699 = vadd.f32 %v660, %v661
      %v700 = vadd.f32 %v699, %v662
      %v701 = vadd.f32 %v700, %v663
      %702 = vadd.xlane.f32.xlu0 %v701
      %v703 = vpop.xlane.xlu0 %702
      %v704 = vmul.f32 %v668, 0.001953125
      %v705 = vmul.f32 %v673, 0.001953125
      %v706 = vmul.f32 %v678, 0.001953125
      %v707 = vmul.f32 %v683, 0.001953125
      %v708 = vmul.f32 %v688, 0.001953125
      %v709 = vmul.f32 %v693, 0.001953125
      %v710 = vmul.f32 %v698, 0.001953125
      %v711 = vmul.f32 %v703, 0.001953125
      %v712 = vmul.f32 %v624, %v624
      %v713 = vmul.f32 %v625, %v625
      %v714 = vmul.f32 %v626, %v626
      %v715 = vmul.f32 %v627, %v627
      %v716 = vmul.f32 %v628, %v628
      %v717 = vmul.f32 %v629, %v629
      %v718 = vmul.f32 %v630, %v630
      %v719 = vmul.f32 %v631, %v631
      %v720 = vsub.f32 %v704, %v712
      %v721 = vsub.f32 %v705, %v713
      %v722 = vsub.f32 %v706, %v714
      %v723 = vsub.f32 %v707, %v715
      %v724 = vsub.f32 %v708, %v716
      %v725 = vsub.f32 %v709, %v717
      %v726 = vsub.f32 %v710, %v718
      %v727 = vsub.f32 %v711, %v719
      %v728 = vmax.f32 %v720, 0.0
      %v729 = vmax.f32 %v721, 0.0
      %v730 = vmax.f32 %v722, 0.0
      %v731 = vmax.f32 %v723, 0.0
      %v732 = vmax.f32 %v724, 0.0
      %v733 = vmax.f32 %v725, 0.0
      %v734 = vmax.f32 %v726, 0.0
      %v735 = vmax.f32 %v727, 0.0
      %v736 = vsub.f32 %v473, %v624
      %v737 = vsub.f32 %v475, %v624
      %v738 = vsub.f32 %v546, %v624
      %v739 = vsub.f32 %v548, %v624
      %v740 = vsub.f32 %v477, %v625
      %v741 = vsub.f32 %v479, %v625
      %v742 = vsub.f32 %v550, %v625
      %v743 = vsub.f32 %v552, %v625
      %v744 = vsub.f32 %v483, %v626
      %v745 = vsub.f32 %v485, %v626
      %v746 = vsub.f32 %v556, %v626
      %v747 = vsub.f32 %v558, %v626
      %v748 = vsub.f32 %v487, %v627
      %v749 = vsub.f32 %v489, %v627
      %v750 = vsub.f32 %v560, %v627
      %v751 = vsub.f32 %v562, %v627
      %v752 = vsub.f32 %v493, %v628
      %v753 = vsub.f32 %v495, %v628
      %v754 = vsub.f32 %v566, %v628
      %v755 = vsub.f32 %v568, %v628
      %v756 = vsub.f32 %v497, %v629
      %v757 = vsub.f32 %v499, %v629
      %v758 = vsub.f32 %v570, %v629
      %v759 = vsub.f32 %v572, %v629
      %v760 = vsub.f32 %v503, %v630
      %v761 = vsub.f32 %v505, %v630
      %v762 = vsub.f32 %v576, %v630
      %v763 = vsub.f32 %v578, %v630
      %v764 = vsub.f32 %v507, %v631
      %v765 = vsub.f32 %v509, %v631
      %v766 = vsub.f32 %v580, %v631
      %v767 = vsub.f32 %v582, %v631
      %v768 = vadd.f32 %v728, 1e-05
      %v769 = vadd.f32 %v729, 1e-05
      %v770 = vadd.f32 %v730, 1e-05
      %v771 = vadd.f32 %v731, 1e-05
      %v772 = vadd.f32 %v732, 1e-05
      %v773 = vadd.f32 %v733, 1e-05
      %v774 = vadd.f32 %v734, 1e-05
      %v775 = vadd.f32 %v735, 1e-05
      %v776 = vrsqrt.pop %v768
      %v777 = vrsqrt.pop %v769
      %v778 = vrsqrt.pop %v770
      %v779 = vrsqrt.pop %v771
      %v780 = vrsqrt.pop %v772
      %v781 = vrsqrt.pop %v773
      %v782 = vrsqrt.pop %v774
      %v783 = vrsqrt.pop %v775
      %v784 = vmul.f32 %v736, %v776
      %v785 = vmul.f32 %v737, %v776
      %v786 = vmul.f32 %v738, %v776
      %v787 = vmul.f32 %v739, %v776
      %v788 = vmul.f32 %v740, %v777
      %v789 = vmul.f32 %v741, %v777
      %v790 = vmul.f32 %v742, %v777
      %v791 = vmul.f32 %v743, %v777
      %v792 = vmul.f32 %v744, %v778
      %v793 = vmul.f32 %v745, %v778
      %v794 = vmul.f32 %v746, %v778
      %v795 = vmul.f32 %v747, %v778
      %v796 = vmul.f32 %v748, %v779
      %v797 = vmul.f32 %v749, %v779
      %v798 = vmul.f32 %v750, %v779
      %v799 = vmul.f32 %v751, %v779
      %v800 = vmul.f32 %v752, %v780
      %v801 = vmul.f32 %v753, %v780
      %v802 = vmul.f32 %v754, %v780
      %v803 = vmul.f32 %v755, %v780
      %v804 = vmul.f32 %v756, %v781
      %v805 = vmul.f32 %v757, %v781
      %v806 = vmul.f32 %v758, %v781
      %v807 = vmul.f32 %v759, %v781
      %v808 = vmul.f32 %v760, %v782
      %v809 = vmul.f32 %v761, %v782
      %v810 = vmul.f32 %v762, %v782
      %v811 = vmul.f32 %v763, %v782
      %v812 = vmul.f32 %v764, %v783
      %v813 = vmul.f32 %v765, %v783
      %v814 = vmul.f32 %v766, %v783
      %v815 = vmul.f32 %v767, %v783
      %vm816 = vcmp.ge.f32.partialorder %v784, 0.0
      %vm817 = vcmp.ge.f32.partialorder %v785, 0.0
      %vm818 = vcmp.ge.f32.partialorder %v786, 0.0
      %vm819 = vcmp.ge.f32.partialorder %v787, 0.0
      %vm820 = vcmp.ge.f32.partialorder %v788, 0.0
      %vm821 = vcmp.ge.f32.partialorder %v789, 0.0
      %vm822 = vcmp.ge.f32.partialorder %v790, 0.0
      %vm823 = vcmp.ge.f32.partialorder %v791, 0.0
      %vm824 = vcmp.ge.f32.partialorder %v792, 0.0
      %vm825 = vcmp.ge.f32.partialorder %v793, 0.0
      %vm826 = vcmp.ge.f32.partialorder %v794, 0.0
      %vm827 = vcmp.ge.f32.partialorder %v795, 0.0
      %vm828 = vcmp.ge.f32.partialorder %v796, 0.0
      %vm829 = vcmp.ge.f32.partialorder %v797, 0.0
      %vm830 = vcmp.ge.f32.partialorder %v798, 0.0
      %vm831 = vcmp.ge.f32.partialorder %v799, 0.0
      %vm832 = vcmp.ge.f32.partialorder %v800, 0.0
      %vm833 = vcmp.ge.f32.partialorder %v801, 0.0
      %vm834 = vcmp.ge.f32.partialorder %v802, 0.0
      %vm835 = vcmp.ge.f32.partialorder %v803, 0.0
      %vm836 = vcmp.ge.f32.partialorder %v804, 0.0
      %vm837 = vcmp.ge.f32.partialorder %v805, 0.0
      %vm838 = vcmp.ge.f32.partialorder %v806, 0.0
      %vm839 = vcmp.ge.f32.partialorder %v807, 0.0
      %vm840 = vcmp.ge.f32.partialorder %v808, 0.0
      %vm841 = vcmp.ge.f32.partialorder %v809, 0.0
      %vm842 = vcmp.ge.f32.partialorder %v810, 0.0
      %vm843 = vcmp.ge.f32.partialorder %v811, 0.0
      %vm844 = vcmp.ge.f32.partialorder %v812, 0.0
      %vm845 = vcmp.ge.f32.partialorder %v813, 0.0
      %vm846 = vcmp.ge.f32.partialorder %v814, 0.0
      %vm847 = vcmp.ge.f32.partialorder %v815, 0.0
      %v848 = vmul.f32 %v784, 0.01
      %v849 = vmul.f32 %v785, 0.01
      %v850 = vmul.f32 %v786, 0.01
      %v851 = vmul.f32 %v787, 0.01
      %v852 = vmul.f32 %v788, 0.01
      %v853 = vmul.f32 %v789, 0.01
      %v854 = vmul.f32 %v790, 0.01
      %v855 = vmul.f32 %v791, 0.01
      %v856 = vmul.f32 %v792, 0.01
      %v857 = vmul.f32 %v793, 0.01
      %v858 = vmul.f32 %v794, 0.01
      %v859 = vmul.f32 %v795, 0.01
      %v860 = vmul.f32 %v796, 0.01
      %v861 = vmul.f32 %v797, 0.01
      %v862 = vmul.f32 %v798, 0.01
      %v863 = vmul.f32 %v799, 0.01
      %v864 = vmul.f32 %v800, 0.01
      %v865 = vmul.f32 %v801, 0.01
      %v866 = vmul.f32 %v802, 0.01
      %v867 = vmul.f32 %v803, 0.01
      %v868 = vmul.f32 %v804, 0.01
      %v869 = vmul.f32 %v805, 0.01
      %v870 = vmul.f32 %v806, 0.01
      %v871 = vmul.f32 %v807, 0.01
      %v872 = vmul.f32 %v808, 0.01
      %v873 = vmul.f32 %v809, 0.01
      %v874 = vmul.f32 %v810, 0.01
      %v875 = vmul.f32 %v811, 0.01
      %v876 = vmul.f32 %v812, 0.01
      %v877 = vmul.f32 %v813, 0.01
      %v878 = vmul.f32 %v814, 0.01
      %v879 = vmul.f32 %v815, 0.01
      %v880 = vsel %vm816, %v784, %v848
      %v881 = vsel %vm817, %v785, %v849
      %v882 = vsel %vm818, %v786, %v850
      %v883 = vsel %vm819, %v787, %v851
      %v884 = vsel %vm820, %v788, %v852
      %v885 = vsel %vm821, %v789, %v853
      %v886 = vsel %vm822, %v790, %v854
      %v887 = vsel %vm823, %v791, %v855
      %v888 = vsel %vm824, %v792, %v856
      %v889 = vsel %vm825, %v793, %v857
      %v890 = vsel %vm826, %v794, %v858
      %v891 = vsel %vm827, %v795, %v859
      %v892 = vsel %vm828, %v796, %v860
      %v893 = vsel %vm829, %v797, %v861
      %v894 = vsel %vm830, %v798, %v862
      %v895 = vsel %vm831, %v799, %v863
      %v896 = vsel %vm832, %v800, %v864
      %v897 = vsel %vm833, %v801, %v865
      %v898 = vsel %vm834, %v802, %v866
      %v899 = vsel %vm835, %v803, %v867
      %v900 = vsel %vm836, %v804, %v868
      %v901 = vsel %vm837, %v805, %v869
      %v902 = vsel %vm838, %v806, %v870
      %v903 = vsel %vm839, %v807, %v871
      %v904 = vsel %vm840, %v808, %v872
      %v905 = vsel %vm841, %v809, %v873
      %v906 = vsel %vm842, %v810, %v874
      %v907 = vsel %vm843, %v811, %v875
      %v908 = vsel %vm844, %v812, %v876
      %v909 = vsel %vm845, %v813, %v877
      %v910 = vsel %vm846, %v814, %v878
      %v911 = vsel %vm847, %v815, %v879
      %912 = vst [vmem:[%s170] sm:$0xff] %v880
      %913 = vst [vmem:[%s170 + $0x8] sm:$0xff] %v881
      %914 = vst [vmem:[%s170 + $0x10] sm:$0xff] %v882
      %915 = vst [vmem:[%s170 + $0x18] sm:$0xff] %v883
      %916 = vst [vmem:[%s170 + $0x20] sm:$0xff] %v884
      %917 = vst [vmem:[%s170 + $0x28] sm:$0xff] %v885
      %918 = vst [vmem:[%s170 + $0x30] sm:$0xff] %v886
      %919 = vst [vmem:[%s170 + $0x38] sm:$0xff] %v887
      %920 = vst [vmem:[%s170 + $0x40] sm:$0xff] %v888
      %921 = vst [vmem:[%s170 + $0x48] sm:$0xff] %v889
      %922 = vst [vmem:[%s170 + $0x50] sm:$0xff] %v890
      %923 = vst [vmem:[%s170 + $0x58] sm:$0xff] %v891
      %924 = vst [vmem:[%s170 + $0x60] sm:$0xff] %v892
      %925 = vst [vmem:[%s170 + $0x68] sm:$0xff] %v893
      %926 = vst [vmem:[%s170 + $0x70] sm:$0xff] %v894
      %927 = vst [vmem:[%s170 + $0x78] sm:$0xff] %v895
      %928 = vst [vmem:[%s170 + $0x80] sm:$0xff] %v896
      %929 = vst [vmem:[%s170 + $0x88] sm:$0xff] %v897
      %930 = vst [vmem:[%s170 + $0x90] sm:$0xff] %v898
      %931 = vst [vmem:[%s170 + $0x98] sm:$0xff] %v899
      %932 = vst [vmem:[%s170 + $0xa0] sm:$0xff] %v900
      %933 = vst [vmem:[%s170 + $0xa8] sm:$0xff] %v901
      %934 = vst [vmem:[%s170 + $0xb0] sm:$0xff] %v902
      %935 = vst [vmem:[%s170 + $0xb8] sm:$0xff] %v903
      %936 = vst [vmem:[%s170 + $0xc0] sm:$0xff] %v904
      %937 = vst [vmem:[%s170 + $0xc8] sm:$0xff] %v905
      %938 = vst [vmem:[%s170 + $0xd0] sm:$0xff] %v906
      %939 = vst [vmem:[%s170 + $0xd8] sm:$0xff] %v907
      %940 = vst [vmem:[%s170 + $0xe0] sm:$0xff] %v908
      %941 = vst [vmem:[%s170 + $0xe8] sm:$0xff] %v909
      %942 = vst [vmem:[%s170 + $0xf0] sm:$0xff] %v910
      %943 = vst [vmem:[%s170 + $0xf8] sm:$0xff] %v911
      %p944 = scmp.lt.s32.totalorder %s14, 1
      %s945 = scalar_select %p944, %s14, 1
      %s946 = smul.addr %s945, 32
      %s947 = smul.addr %s946, 8
      %s948 = scalar_lea.vmem %s3, %s947
      // Predicated region
      $region33: #{conv_block_pallas.2} parent=31 // pred_check
        %p949 = pneg %p100
      $region34: #{conv_block_pallas.2} parent=31 // pred_check_branch
        %951 = sbr.rel (%p949) target = $region36
      $region35: #{conv_block_pallas.2} parent=31 // pred_region
        _
      $region36: #{conv_block_pallas.2} parent=31 // pred_fallthru
        _
    $region32: #{conv_block_pallas.2} parent=5 // pred_fallthru
      _
    %p952 = scmp.le.s32.totalorder 2, %s9
    // Predicated region
    $region37: #{conv_block_pallas.2} parent=5 // pred_check
      %p953 = pneg %p952
    $region38: #{conv_block_pallas.2} parent=5 // pred_check_branch
      %955 = sbr.rel (%p953) target = $region40
    $region39: #{conv_block_pallas.2} parent=5 // pred_region
      %s956 = ssub.s32 %s9, 2
      // Predicated region
      $region41: #{conv_block_pallas.2} parent=39 // pred_check
        %p957 = pneg %p106
      $region42: #{conv_block_pallas.2} parent=39 // pred_check_branch
        %959 = sbr.rel (%p957) target = $region44
      $region43: #{conv_block_pallas.2} parent=39 // pred_region
        %p960 = scmp.lt.s32.totalorder %s15, 1
        %s961 = scalar_select %p960, %s15, 1
        %s962 = smul.addr %s961, 32
        %s963 = smul.addr %s962, 8
        %s964 = scalar_lea.vmem %s3, %s963
      $region44: #{conv_block_pallas.2} parent=39 // pred_fallthru
        _
    $region40: #{conv_block_pallas.2} parent=5 // pred_fallthru
      _
  $region6: #{conv_block_pallas.2} parent=0 // loop_footer
    %s13 = sadd.s32 1, %s9
  $region7: #{conv_block_pallas.2} parent=0 // loop_footer_branch
    %8 = sbr.rel target = $region3
  $region8: #{conv_block_pallas.2} parent=0 // loop_exit
    _

// kernel: conv_block_pallas.3
$region0: #{conv_block_pallas.3}
  #allocation0 [shape = 'u32[]', space=smem, size = 0x4, offset = 0x4, fixed_abs, tag = 'smem constant byte address 0x4 - core index']
  #allocation1 [shape = 'u32[144,128]{1,0:T(1,128)}', space=vmem, size = 0x12000, scoped, tag = 'internal scratch']
  %s0 = inlined_call_operand.vmem [shape: bf16[2,1728,512], index: 0, kind: input, shape index: {}]
  %s1 = inlined_call_operand.vmem [shape: bf16[64,1728], index: 1, kind: input, shape index: {}]
  %s2 = inlined_call_operand.vmem [shape: f32[64,1], index: 2, kind: input, shape index: {}]
  %s3 = inlined_call_operand.vmem [shape: f32[2,64,512], index: 3, kind: output, shape index: {}]
  %s4 = sld [smem:[#allocation0]]
  $region45: #{conv_block_pallas.3} parent=0
    _
  %s6 = ssub.s32 1, %s4
  %s7 = scalar_select 0, %s6, %s4
  loop: start=0, step=1, limit=4
  $region2: #{conv_block_pallas.3} parent=0 // loop_pre_header
    _
  $region3: #{conv_block_pallas.3} parent=0 // loop_header
    %s9 = sphi 0, %s13
    %p10 = scmp.ge.s32.totalorder %s9, 4
    %s19 = sphi 0, %s21
    %s22 = sphi 0, %s19
    %s23 = sphi 0, %s22
    %s39 = sphi 0, %s23
    %s43 = sphi 0, %s43
    %s45 = sphi 0, %s43
    %s46 = sphi 0, %s45
    %s60 = sphi 0, %s46
    %s64 = sphi 0, %s64
    %s66 = sphi 0, %s64
    %s67 = sphi 0, %s66
    %s81 = sphi 0, %s67
    %s87 = sphi 0, %s89
    %s90 = sphi 0, %s87
    %s91 = sphi 0, %s90
    %s107 = sphi 0, %s91
  $region4: #{conv_block_pallas.3} parent=0 // loop_header_branch
    %12 = sbr.rel (%p10) target = $region8
  $region5: #{conv_block_pallas.3} parent=0 // loop_body
    %s14 = ssub.s32 %s9, 1
    %s15 = ssub.s32 %s9, 2
    %s16 = sadd.s32 %s9, 1
    %s17 = ssub.s32 %s9, %s16
    %p18 = scmp.eq.s32.totalorder %s17, 0
    %s20 = sadd.s32 %s19, 1
    %s21 = scalar_select %p18, %s19, %s20
    %p24 = pneg %p18
    %p25 = scmp.eq.s32.totalorder %s9, 1
    %p26 = por %p24, %p25
    %p27 = scmp.ne.s32.totalorder %s19, %s22
    %p28 = scmp.eq.s32.totalorder %s9, 0
    %p29 = por %p27, %p28
    %p30 = scmp.ne.s32.totalorder %s19, %s22
    %p31 = scmp.eq.s32.totalorder %s14, 1
    %p32 = por %p30, %p31
    %p33 = scmp.ne.s32.totalorder %s22, %s23
    %p34 = scmp.eq.s32.totalorder %s14, 0
    %p35 = por %p33, %p34
    %p36 = scmp.ne.s32.totalorder %s22, %s23
    %p37 = scmp.eq.s32.totalorder %s15, 1
    %p38 = por %p36, %p37
    %p40 = scmp.ne.s32.totalorder %s23, %s39
    %p41 = scmp.eq.s32.totalorder %s15, 0
    %p42 = por %p40, %p41
    %s44 = sadd.s32 %s43, 1
    %p47 = scmp.eq.s32.totalorder %s9, 1
    %p48 = scmp.ne.s32.totalorder %s43, %s45
    %p49 = scmp.eq.s32.totalorder %s9, 0
    %p50 = por %p48, %p49
    %p51 = scmp.ne.s32.totalorder %s43, %s45
    %p52 = scmp.eq.s32.totalorder %s14, 1
    %p53 = por %p51, %p52
    %p54 = scmp.ne.s32.totalorder %s45, %s46
    %p55 = scmp.eq.s32.totalorder %s14, 0
    %p56 = por %p54, %p55
    %p57 = scmp.ne.s32.totalorder %s45, %s46
    %p58 = scmp.eq.s32.totalorder %s15, 1
    %p59 = por %p57, %p58
    %p61 = scmp.ne.s32.totalorder %s46, %s60
    %p62 = scmp.eq.s32.totalorder %s15, 0
    %p63 = por %p61, %p62
    %s65 = sadd.s32 %s64, 1
    %p68 = scmp.eq.s32.totalorder %s9, 1
    %p69 = scmp.ne.s32.totalorder %s64, %s66
    %p70 = scmp.eq.s32.totalorder %s9, 0
    %p71 = por %p69, %p70
    %p72 = scmp.ne.s32.totalorder %s64, %s66
    %p73 = scmp.eq.s32.totalorder %s14, 1
    %p74 = por %p72, %p73
    %p75 = scmp.ne.s32.totalorder %s66, %s67
    %p76 = scmp.eq.s32.totalorder %s14, 0
    %p77 = por %p75, %p76
    %p78 = scmp.ne.s32.totalorder %s66, %s67
    %p79 = scmp.eq.s32.totalorder %s15, 1
    %p80 = por %p78, %p79
    %p82 = scmp.ne.s32.totalorder %s67, %s81
    %p83 = scmp.eq.s32.totalorder %s15, 0
    %p84 = por %p82, %p83
    %s85 = ssub.s32 %s9, %s16
    %p86 = scmp.eq.s32.totalorder %s85, 0
    %s88 = sadd.s32 %s87, 1
    %s89 = scalar_select %p86, %s87, %s88
    %p92 = pneg %p86
    %p93 = scmp.eq.s32.totalorder %s9, 1
    %p94 = por %p92, %p93
    %p95 = scmp.ne.s32.totalorder %s87, %s90
    %p96 = scmp.eq.s32.totalorder %s9, 0
    %p97 = por %p95, %p96
    %p98 = scmp.ne.s32.totalorder %s87, %s90
    %p99 = scmp.eq.s32.totalorder %s14, 1
    %p100 = por %p98, %p99
    %p101 = scmp.ne.s32.totalorder %s90, %s91
    %p102 = scmp.eq.s32.totalorder %s14, 0
    %p103 = por %p101, %p102
    %p104 = scmp.ne.s32.totalorder %s90, %s91
    %p105 = scmp.eq.s32.totalorder %s15, 1
    %p106 = por %p104, %p105
    %p108 = scmp.ne.s32.totalorder %s91, %s107
    %p109 = scmp.eq.s32.totalorder %s15, 0
    %p110 = por %p108, %p109
    %p111 = scmp.le.s32.totalorder 1, %s9
    %p112 = scmp.lt.s32.totalorder %s9, 3
    %p113 = pnand %p111, %p112
    %p114 = pneg %p113
    // Predicated region
    $region9: #{conv_block_pallas.3} parent=5 // pred_check
      _
    $region10: #{conv_block_pallas.3} parent=5 // pred_check_branch
      %116 = sbr.rel (%p113) target = $region12
    $region11: #{conv_block_pallas.3} parent=5 // pred_region
      %s117 = ssub.s32 %s9, 1
      // Predicated region
      $region13: #{conv_block_pallas.3} parent=11 // pred_check
        %p118 = pneg %p56
      $region14: #{conv_block_pallas.3} parent=11 // pred_check_branch
        %120 = sbr.rel (%p118) target = $region16
      $region15: #{conv_block_pallas.3} parent=11 // pred_region
        _
      $region16: #{conv_block_pallas.3} parent=11 // pred_fallthru
        _
      // Predicated region
      $region17: #{conv_block_pallas.3} parent=11 // pred_check
        %p121 = pneg %p77
      $region18: #{conv_block_pallas.3} parent=11 // pred_check_branch
        %123 = sbr.rel (%p121) target = $region20
      $region19: #{conv_block_pallas.3} parent=11 // pred_region
        _
      $region20: #{conv_block_pallas.3} parent=11 // pred_fallthru
        _
    $region12: #{conv_block_pallas.3} parent=5 // pred_fallthru
      _
    %p124 = scmp.lt.s32.totalorder %s9, 2
    // Predicated region
    $region21: #{conv_block_pallas.3} parent=5 // pred_check
      %p125 = pneg %p124
    $region22: #{conv_block_pallas.3} parent=5 // pred_check_branch
      %127 = sbr.rel (%p125) target = $region24
    $region23: #{conv_block_pallas.3} parent=5 // pred_region
      // Predicated region
      $region25: #{conv_block_pallas.3} parent=23 // pred_check
        %p128 = pneg %p29
      $region26: #{conv_block_pallas.3} parent=23 // pred_check_branch
        %130 = sbr.rel (%p128) target = $region28
      $region27: #{conv_block_pallas.3} parent=23 // pred_region
        %p131 = scmp.lt.s32.totalorder %s9, 1
        %s132 = scalar_select %p131, %s9, 1
        %s133 = smul.addr %s132, 864
        %s134 = smul.addr %s133, 4
        %s135 = scalar_lea.vmem %s0, %s134
      $region28: #{conv_block_pallas.3} parent=23 // pred_fallthru
        _
    $region24: #{conv_block_pallas.3} parent=5 // pred_fallthru
      _
    %p136 = scmp.le.s32.totalorder 1, %s9
    %p137 = scmp.lt.s32.totalorder %s9, 3
    %p138 = pnand %p136, %p137
    %p139 = pneg %p138
    // Predicated region
    $region29: #{conv_block_pallas.3} parent=5 // pred_check
      _
    $region30: #{conv_block_pallas.3} parent=5 // pred_check_branch
      %141 = sbr.rel (%p138) target = $region32
    $region31: #{conv_block_pallas.3} parent=5 // pred_region
      %s142 = ssub.s32 %s9, 1
      %p143 = scmp.lt.s32.totalorder %s14, 1
      %s144 = scalar_select %p143, %s14, 1
      %s145 = smul.addr %s144, 864
      %s146 = smul.addr %s145, 4
      %s147 = scalar_lea.vmem %s0, %s146
      %p148 = pneg %p35
      %p149 = pneg %p32
      %p150 = pneg %p56
      %p151 = pneg %p53
      %p152 = pneg %p77
      %p153 = pneg %p74
      %p154 = pneg %p103
      %p155 = pneg %p100
      %p156 = scmp.lt.s32.totalorder %s14, 1
      %s157 = scalar_select %p156, %s14, 1
      %s158 = smul.addr %s157, 32
      %s159 = smul.addr %s158, 8
      %s160 = scalar_lea.vmem %s3, %s159
      %p161 = scmp.lt.s32.totalorder %s14, 1
      %s162 = scalar_select %p161, %s14, 1
      %s163 = smul.addr %s162, 864
      %s164 = smul.addr %s163, 4
      %s165 = scalar_lea.vmem %s0, %s164
      %p166 = scmp.lt.s32.totalorder %s14, 1
      %s167 = scalar_select %p166, %s14, 1
      %s168 = smul.addr %s167, 32
      %s169 = smul.addr %s168, 8
      %s170 = scalar_lea.vmem %s3, %s169
      %v172 = vld [vmem:[%s1] sm:$0xff]
      %v173 = vld [vmem:[%s1 + $0x8] sm:$0xff]
      %v174 = vld [vmem:[%s1 + $0x10] sm:$0xff]
      %v175 = vld [vmem:[%s1 + $0x18] sm:$0xff]
      %v176 = vld [vmem:[%s1 + $0x20] sm:$0xff]
      %v177 = vld [vmem:[%s1 + $0x28] sm:$0xff]
      %v178 = vld [vmem:[%s1 + $0x30] sm:$0xff]
      %v179 = vld [vmem:[%s1 + $0x38] sm:$0xff]
      %v180 = vld [vmem:[%s1 + $0x40] sm:$0xff]
      %v181 = vld [vmem:[%s1 + $0x48] sm:$0xff]
      %v182 = vld [vmem:[%s1 + $0x50] sm:$0xff]
      %v183 = vld [vmem:[%s1 + $0x58] sm:$0xff]
      %v184 = vld [vmem:[%s1 + $0x60] sm:$0xff]
      %v185 = vld [vmem:[%s1 + $0x68] sm:$0xff]
      %v186 = vld [vmem:[%s1 + $0x70] sm:$0xff]
      %v187 = vld [vmem:[%s1 + $0x78] sm:$0xff]
      %v188 = vld [vmem:[%s1 + $0x80] sm:$0xff]
      %v189 = vld [vmem:[%s1 + $0x88] sm:$0xff]
      %v190 = vld [vmem:[%s1 + $0x90] sm:$0xff]
      %v191 = vld [vmem:[%s1 + $0x98] sm:$0xff]
      %v192 = vld [vmem:[%s1 + $0xa0] sm:$0xff]
      %v193 = vld [vmem:[%s1 + $0xa8] sm:$0xff]
      %v194 = vld [vmem:[%s1 + $0xb0] sm:$0xff]
      %v195 = vld [vmem:[%s1 + $0xb8] sm:$0xff]
      %v196 = vld [vmem:[%s1 + $0xc0] sm:$0xff]
      %v197 = vld [vmem:[%s1 + $0xc8] sm:$0xff]
      %v198 = vld [vmem:[%s1 + $0xd0] sm:$0xff]
      %v199 = vld [vmem:[%s1 + $0xd8] sm:$0xff]
      %v200 = vld [vmem:[%s1 + $0xe0] sm:$0xff]
      %v201 = vld [vmem:[%s1 + $0xe8] sm:$0xff]
      %v202 = vld [vmem:[%s1 + $0xf0] sm:$0xff]
      %v203 = vld [vmem:[%s1 + $0xf8] sm:$0xff]
      %v204 = vld [vmem:[%s1 + $0x100] sm:$0xff]
      %v205 = vld [vmem:[%s1 + $0x108] sm:$0xff]
      %v206 = vld [vmem:[%s1 + $0x110] sm:$0xff]
      %v207 = vld [vmem:[%s1 + $0x118] sm:$0xff]
      %v208 = vld [vmem:[%s1 + $0x120] sm:$0xff]
      %v209 = vld [vmem:[%s1 + $0x128] sm:$0xff]
      %v210 = vld [vmem:[%s1 + $0x130] sm:$0xff]
      %v211 = vld [vmem:[%s1 + $0x138] sm:$0xff]
      %v212 = vld [vmem:[%s1 + $0x140] sm:$0xff]
      %v213 = vld [vmem:[%s1 + $0x148] sm:$0xff]
      %v214 = vld [vmem:[%s1 + $0x150] sm:$0xff]
      %v215 = vld [vmem:[%s1 + $0x158] sm:$0xff]
      %v216 = vld [vmem:[%s1 + $0x160] sm:$0xff]
      %v217 = vld [vmem:[%s1 + $0x168] sm:$0xff]
      %v218 = vld [vmem:[%s1 + $0x170] sm:$0xff]
      %v219 = vld [vmem:[%s1 + $0x178] sm:$0xff]
      %v220 = vld [vmem:[%s1 + $0x180] sm:$0xff]
      %v221 = vld [vmem:[%s1 + $0x188] sm:$0xff]
      %v222 = vld [vmem:[%s1 + $0x190] sm:$0xff]
      %v223 = vld [vmem:[%s1 + $0x198] sm:$0xff]
      %v224 = vld [vmem:[%s1 + $0x1a0] sm:$0xff]
      %v225 = vld [vmem:[%s1 + $0x1a8] sm:$0xff]
      %v226 = vld [vmem:[%s1 + $0x1b0] sm:$0xff]
      %v227 = vld [vmem:[%s1 + $0x1b8] sm:$0xff]
      %v228 = vld [vmem:[%s165] sm:$0xff]
      %v229 = vld [vmem:[%s165 + $0x8] sm:$0xff]
      %v230 = vld [vmem:[%s165 + $0x10] sm:$0xff]
      %v231 = vld [vmem:[%s165 + $0x18] sm:$0xff]
      %v232 = vld [vmem:[%s165 + $0x20] sm:$0xff]
      %v233 = vld [vmem:[%s165 + $0x28] sm:$0xff]
      %v234 = vld [vmem:[%s165 + $0x30] sm:$0xff]
      %v235 = vld [vmem:[%s165 + $0x38] sm:$0xff]
      %v236 = vld [vmem:[%s165 + $0x40] sm:$0xff]
      %v237 = vld [vmem:[%s165 + $0x48] sm:$0xff]
      %v238 = vld [vmem:[%s165 + $0x50] sm:$0xff]
      %v239 = vld [vmem:[%s165 + $0x58] sm:$0xff]
      %v240 = vld [vmem:[%s165 + $0x60] sm:$0xff]
      %v241 = vld [vmem:[%s165 + $0x68] sm:$0xff]
      %v242 = vld [vmem:[%s165 + $0x70] sm:$0xff]
      %v243 = vld [vmem:[%s165 + $0x78] sm:$0xff]
      %v244 = vld [vmem:[%s165 + $0x80] sm:$0xff]
      %v245 = vld [vmem:[%s165 + $0x88] sm:$0xff]
      %v246 = vld [vmem:[%s165 + $0x90] sm:$0xff]
      %v247 = vld [vmem:[%s165 + $0x98] sm:$0xff]
      %v248 = vld [vmem:[%s165 + $0xa0] sm:$0xff]
      %v249 = vld [vmem:[%s165 + $0xa8] sm:$0xff]
      %v250 = vld [vmem:[%s165 + $0xb0] sm:$0xff]
      %v251 = vld [vmem:[%s165 + $0xb8] sm:$0xff]
      %v252 = vld [vmem:[%s165 + $0xc0] sm:$0xff]
      %v253 = vld [vmem:[%s165 + $0xc8] sm:$0xff]
      %v254 = vld [vmem:[%s165 + $0xd0] sm:$0xff]
      %v255 = vld [vmem:[%s165 + $0xd8] sm:$0xff]
      %v256 = vld [vmem:[%s165 + $0xe0] sm:$0xff]
      %v257 = vld [vmem:[%s165 + $0xe8] sm:$0xff]
      %v258 = vld [vmem:[%s165 + $0xf0] sm:$0xff]
      %v259 = vld [vmem:[%s165 + $0xf8] sm:$0xff]
      %v260 = vld [vmem:[%s165 + $0x100] sm:$0xff]
      %v261 = vld [vmem:[%s165 + $0x108] sm:$0xff]
      %v262 = vld [vmem:[%s165 + $0x110] sm:$0xff]
      %v263 = vld [vmem:[%s165 + $0x118] sm:$0xff]
      %v264 = vld [vmem:[%s165 + $0x120] sm:$0xff]
      %v265 = vld [vmem:[%s165 + $0x128] sm:$0xff]
      %v266 = vld [vmem:[%s165 + $0x130] sm:$0xff]
      %v267 = vld [vmem:[%s165 + $0x138] sm:$0xff]
      %v268 = vld [vmem:[%s165 + $0x140] sm:$0xff]
      %v269 = vld [vmem:[%s165 + $0x148] sm:$0xff]
      %v270 = vld [vmem:[%s165 + $0x150] sm:$0xff]
      %v271 = vld [vmem:[%s165 + $0x158] sm:$0xff]
      %v272 = vld [vmem:[%s165 + $0x160] sm:$0xff]
      %v273 = vld [vmem:[%s165 + $0x168] sm:$0xff]
      %v274 = vld [vmem:[%s165 + $0x170] sm:$0xff]
      %v275 = vld [vmem:[%s165 + $0x178] sm:$0xff]
      %v276 = vld [vmem:[%s165 + $0x180] sm:$0xff]
      %v277 = vld [vmem:[%s165 + $0x188] sm:$0xff]
      %v278 = vld [vmem:[%s165 + $0x190] sm:$0xff]
      %v279 = vld [vmem:[%s165 + $0x198] sm:$0xff]
      %v280 = vld [vmem:[%s165 + $0x1a0] sm:$0xff]
      %v281 = vld [vmem:[%s165 + $0x1a8] sm:$0xff]
      %v282 = vld [vmem:[%s165 + $0x1b0] sm:$0xff]
      %v283 = vld [vmem:[%s165 + $0x1b8] sm:$0xff]
      %v284 = vld [vmem:[%s165 + $0x1c0] sm:$0xff]
      %v285 = vld [vmem:[%s165 + $0x1c8] sm:$0xff]
      %v286 = vld [vmem:[%s165 + $0x1d0] sm:$0xff]
      %v287 = vld [vmem:[%s165 + $0x1d8] sm:$0xff]
      %v288 = vld [vmem:[%s165 + $0x1e0] sm:$0xff]
      %v289 = vld [vmem:[%s165 + $0x1e8] sm:$0xff]
      %v290 = vld [vmem:[%s165 + $0x1f0] sm:$0xff]
      %v291 = vld [vmem:[%s165 + $0x1f8] sm:$0xff]
      %v292 = vld [vmem:[%s165 + $0x200] sm:$0xff]
      %v293 = vld [vmem:[%s165 + $0x208] sm:$0xff]
      %v294 = vld [vmem:[%s165 + $0x210] sm:$0xff]
      %v295 = vld [vmem:[%s165 + $0x218] sm:$0xff]
      %v296 = vld [vmem:[%s165 + $0x220] sm:$0xff]
      %v297 = vld [vmem:[%s165 + $0x228] sm:$0xff]
      %v298 = vld [vmem:[%s165 + $0x230] sm:$0xff]
      %v299 = vld [vmem:[%s165 + $0x238] sm:$0xff]
      %v300 = vld [vmem:[%s165 + $0x240] sm:$0xff]
      %v301 = vld [vmem:[%s165 + $0x248] sm:$0xff]
      %v302 = vld [vmem:[%s165 + $0x250] sm:$0xff]
      %v303 = vld [vmem:[%s165 + $0x258] sm:$0xff]
      %v304 = vld [vmem:[%s165 + $0x260] sm:$0xff]
      %v305 = vld [vmem:[%s165 + $0x268] sm:$0xff]
      %v306 = vld [vmem:[%s165 + $0x270] sm:$0xff]
      %v307 = vld [vmem:[%s165 + $0x278] sm:$0xff]
      %v308 = vld [vmem:[%s165 + $0x280] sm:$0xff]
      %v309 = vld [vmem:[%s165 + $0x288] sm:$0xff]
      %v310 = vld [vmem:[%s165 + $0x290] sm:$0xff]
      %v311 = vld [vmem:[%s165 + $0x298] sm:$0xff]
      %v312 = vld [vmem:[%s165 + $0x2a0] sm:$0xff]
      %v313 = vld [vmem:[%s165 + $0x2a8] sm:$0xff]
      %v314 = vld [vmem:[%s165 + $0x2b0] sm:$0xff]
      %v315 = vld [vmem:[%s165 + $0x2b8] sm:$0xff]
      %v316 = vld [vmem:[%s165 + $0x2c0] sm:$0xff]
      %v317 = vld [vmem:[%s165 + $0x2c8] sm:$0xff]
      %v318 = vld [vmem:[%s165 + $0x2d0] sm:$0xff]
      %v319 = vld [vmem:[%s165 + $0x2d8] sm:$0xff]
      %v320 = vld [vmem:[%s165 + $0x2e0] sm:$0xff]
      %v321 = vld [vmem:[%s165 + $0x2e8] sm:$0xff]
      %v322 = vld [vmem:[%s165 + $0x2f0] sm:$0xff]
      %v323 = vld [vmem:[%s165 + $0x2f8] sm:$0xff]
      %v324 = vld [vmem:[%s165 + $0x300] sm:$0xff]
      %v325 = vld [vmem:[%s165 + $0x308] sm:$0xff]
      %v326 = vld [vmem:[%s165 + $0x310] sm:$0xff]
      %v327 = vld [vmem:[%s165 + $0x318] sm:$0xff]
      %v328 = vld [vmem:[%s165 + $0x320] sm:$0xff]
      %v329 = vld [vmem:[%s165 + $0x328] sm:$0xff]
      %v330 = vld [vmem:[%s165 + $0x330] sm:$0xff]
      %v331 = vld [vmem:[%s165 + $0x338] sm:$0xff]
      %v332 = vld [vmem:[%s165 + $0x340] sm:$0xff]
      %v333 = vld [vmem:[%s165 + $0x348] sm:$0xff]
      %v334 = vld [vmem:[%s165 + $0x350] sm:$0xff]
      %v335 = vld [vmem:[%s165 + $0x358] sm:$0xff]
      %v336 = vld [vmem:[%s165 + $0x360] sm:$0xff]
      %v337 = vld [vmem:[%s165 + $0x368] sm:$0xff]
      %v338 = vld [vmem:[%s165 + $0x370] sm:$0xff]
      %v339 = vld [vmem:[%s165 + $0x378] sm:$0xff]
      %v340 = vld [vmem:[%s165 + $0x380] sm:$0xff]
      %v341 = vld [vmem:[%s165 + $0x388] sm:$0xff]
      %v342 = vld [vmem:[%s165 + $0x390] sm:$0xff]
      %v343 = vld [vmem:[%s165 + $0x398] sm:$0xff]
      %v344 = vld [vmem:[%s165 + $0x3a0] sm:$0xff]
      %v345 = vld [vmem:[%s165 + $0x3a8] sm:$0xff]
      %v346 = vld [vmem:[%s165 + $0x3b0] sm:$0xff]
      %v347 = vld [vmem:[%s165 + $0x3b8] sm:$0xff]
      %v348 = vld [vmem:[%s165 + $0x3c0] sm:$0xff]
      %v349 = vld [vmem:[%s165 + $0x3c8] sm:$0xff]
      %v350 = vld [vmem:[%s165 + $0x3d0] sm:$0xff]
      %v351 = vld [vmem:[%s165 + $0x3d8] sm:$0xff]
      %v352 = vld [vmem:[%s165 + $0x3e0] sm:$0xff]
      %v353 = vld [vmem:[%s165 + $0x3e8] sm:$0xff]
      %v354 = vld [vmem:[%s165 + $0x3f0] sm:$0xff]
      %v355 = vld [vmem:[%s165 + $0x3f8] sm:$0xff]
      %v356 = vld [vmem:[%s165 + $0x400] sm:$0xff]
      %v357 = vld [vmem:[%s165 + $0x408] sm:$0xff]
      %v358 = vld [vmem:[%s165 + $0x410] sm:$0xff]
      %v359 = vld [vmem:[%s165 + $0x418] sm:$0xff]
      %v360 = vld [vmem:[%s165 + $0x420] sm:$0xff]
      %v361 = vld [vmem:[%s165 + $0x428] sm:$0xff]
      %v362 = vld [vmem:[%s165 + $0x430] sm:$0xff]
      %v363 = vld [vmem:[%s165 + $0x438] sm:$0xff]
      %v364 = vld [vmem:[%s165 + $0x440] sm:$0xff]
      %v365 = vld [vmem:[%s165 + $0x448] sm:$0xff]
      %v366 = vld [vmem:[%s165 + $0x450] sm:$0xff]
      %v367 = vld [vmem:[%s165 + $0x458] sm:$0xff]
      %v368 = vld [vmem:[%s165 + $0x460] sm:$0xff]
      %v369 = vld [vmem:[%s165 + $0x468] sm:$0xff]
      %v370 = vld [vmem:[%s165 + $0x470] sm:$0xff]
      %v371 = vld [vmem:[%s165 + $0x478] sm:$0xff]
      %v372 = vld [vmem:[%s165 + $0x480] sm:$0xff]
      %v373 = vld [vmem:[%s165 + $0x488] sm:$0xff]
      %v374 = vld [vmem:[%s165 + $0x490] sm:$0xff]
      %v375 = vld [vmem:[%s165 + $0x498] sm:$0xff]
      %v376 = vld [vmem:[%s165 + $0x4a0] sm:$0xff]
      %v377 = vld [vmem:[%s165 + $0x4a8] sm:$0xff]
      %v378 = vld [vmem:[%s165 + $0x4b0] sm:$0xff]
      %v379 = vld [vmem:[%s165 + $0x4b8] sm:$0xff]
      %v380 = vld [vmem:[%s165 + $0x4c0] sm:$0xff]
      %v381 = vld [vmem:[%s165 + $0x4c8] sm:$0xff]
      %v382 = vld [vmem:[%s165 + $0x4d0] sm:$0xff]
      %v383 = vld [vmem:[%s165 + $0x4d8] sm:$0xff]
      %v384 = vld [vmem:[%s165 + $0x4e0] sm:$0xff]
      %v385 = vld [vmem:[%s165 + $0x4e8] sm:$0xff]
      %v386 = vld [vmem:[%s165 + $0x4f0] sm:$0xff]
      %v387 = vld [vmem:[%s165 + $0x4f8] sm:$0xff]
      %v388 = vld [vmem:[%s165 + $0x500] sm:$0xff]
      %v389 = vld [vmem:[%s165 + $0x508] sm:$0xff]
      %v390 = vld [vmem:[%s165 + $0x510] sm:$0xff]
      %v391 = vld [vmem:[%s165 + $0x518] sm:$0xff]
      %v392 = vld [vmem:[%s165 + $0x520] sm:$0xff]
      %v393 = vld [vmem:[%s165 + $0x528] sm:$0xff]
      %v394 = vld [vmem:[%s165 + $0x530] sm:$0xff]
      %v395 = vld [vmem:[%s165 + $0x538] sm:$0xff]
      %v396 = vld [vmem:[%s165 + $0x540] sm:$0xff]
      %v397 = vld [vmem:[%s165 + $0x548] sm:$0xff]
      %v398 = vld [vmem:[%s165 + $0x550] sm:$0xff]
      %v399 = vld [vmem:[%s165 + $0x558] sm:$0xff]
      %v400 = vld [vmem:[%s165 + $0x560] sm:$0xff]
      %v401 = vld [vmem:[%s165 + $0x568] sm:$0xff]
      %v402 = vld [vmem:[%s165 + $0x570] sm:$0xff]
      %v403 = vld [vmem:[%s165 + $0x578] sm:$0xff]
      %v404 = vld [vmem:[%s165 + $0x580] sm:$0xff]
      %v405 = vld [vmem:[%s165 + $0x588] sm:$0xff]
      %v406 = vld [vmem:[%s165 + $0x590] sm:$0xff]
      %v407 = vld [vmem:[%s165 + $0x598] sm:$0xff]
      %v408 = vld [vmem:[%s165 + $0x5a0] sm:$0xff]
      %v409 = vld [vmem:[%s165 + $0x5a8] sm:$0xff]
      %v410 = vld [vmem:[%s165 + $0x5b0] sm:$0xff]
      %v411 = vld [vmem:[%s165 + $0x5b8] sm:$0xff]
      %v412 = vld [vmem:[%s165 + $0x5c0] sm:$0xff]
      %v413 = vld [vmem:[%s165 + $0x5c8] sm:$0xff]
      %v414 = vld [vmem:[%s165 + $0x5d0] sm:$0xff]
      %v415 = vld [vmem:[%s165 + $0x5d8] sm:$0xff]
      %v416 = vld [vmem:[%s165 + $0x5e0] sm:$0xff]
      %v417 = vld [vmem:[%s165 + $0x5e8] sm:$0xff]
      %v418 = vld [vmem:[%s165 + $0x5f0] sm:$0xff]
      %v419 = vld [vmem:[%s165 + $0x5f8] sm:$0xff]
      %v420 = vld [vmem:[%s165 + $0x600] sm:$0xff]
      %v421 = vld [vmem:[%s165 + $0x608] sm:$0xff]
      %v422 = vld [vmem:[%s165 + $0x610] sm:$0xff]
      %v423 = vld [vmem:[%s165 + $0x618] sm:$0xff]
      %v424 = vld [vmem:[%s165 + $0x620] sm:$0xff]
      %v425 = vld [vmem:[%s165 + $0x628] sm:$0xff]
      %v426 = vld [vmem:[%s165 + $0x630] sm:$0xff]
      %v427 = vld [vmem:[%s165 + $0x638] sm:$0xff]
      %v428 = vld [vmem:[%s165 + $0x640] sm:$0xff]
      %v429 = vld [vmem:[%s165 + $0x648] sm:$0xff]
      %v430 = vld [vmem:[%s165 + $0x650] sm:$0xff]
      %v431 = vld [vmem:[%s165 + $0x658] sm:$0xff]
      %v432 = vld [vmem:[%s165 + $0x660] sm:$0xff]
      %v433 = vld [vmem:[%s165 + $0x668] sm:$0xff]
      %v434 = vld [vmem:[%s165 + $0x670] sm:$0xff]
      %v435 = vld [vmem:[%s165 + $0x678] sm:$0xff]
      %v436 = vld [vmem:[%s165 + $0x680] sm:$0xff]
      %v437 = vld [vmem:[%s165 + $0x688] sm:$0xff]
      %v438 = vld [vmem:[%s165 + $0x690] sm:$0xff]
      %v439 = vld [vmem:[%s165 + $0x698] sm:$0xff]
      %v440 = vld [vmem:[%s165 + $0x6a0] sm:$0xff]
      %v441 = vld [vmem:[%s165 + $0x6a8] sm:$0xff]
      %v442 = vld [vmem:[%s165 + $0x6b0] sm:$0xff]
      %v443 = vld [vmem:[%s165 + $0x6b8] sm:$0xff]
      %v444 = vld [vmem:[%s165 + $0x6c0] sm:$0xff]
      %v445 = vld [vmem:[%s165 + $0x6c8] sm:$0xff]
      %v446 = vld [vmem:[%s165 + $0x6d0] sm:$0xff]
      %v447 = vld [vmem:[%s165 + $0x6d8] sm:$0xff]
      %v448 = vld [vmem:[%s165 + $0x6e0] sm:$0xff]
      %v449 = vld [vmem:[%s165 + $0x6e8] sm:$0xff]
      %v450 = vld [vmem:[%s165 + $0x6f0] sm:$0xff]
      %v451 = vld [vmem:[%s165 + $0x6f8] sm:$0xff]
      %v452 = vld [vmem:[%s165 + $0x700] sm:$0xff]
      %v453 = vld [vmem:[%s165 + $0x708] sm:$0xff]
      %v454 = vld [vmem:[%s165 + $0x710] sm:$0xff]
      %v455 = vld [vmem:[%s165 + $0x718] sm:$0xff]
      %v456 = vld [vmem:[%s165 + $0x720] sm:$0xff]
      %v457 = vld [vmem:[%s165 + $0x728] sm:$0xff]
      %v458 = vld [vmem:[%s165 + $0x730] sm:$0xff]
      %v459 = vld [vmem:[%s165 + $0x738] sm:$0xff]
      %v460 = vld [vmem:[%s165 + $0x740] sm:$0xff]
      %v461 = vld [vmem:[%s165 + $0x748] sm:$0xff]
      %v462 = vld [vmem:[%s165 + $0x750] sm:$0xff]
      %v463 = vld [vmem:[%s165 + $0x758] sm:$0xff]
      %v464 = vld [vmem:[%s165 + $0x760] sm:$0xff]
      %v465 = vld [vmem:[%s165 + $0x768] sm:$0xff]
      %v466 = vld [vmem:[%s165 + $0x770] sm:$0xff]
      %v467 = vld [vmem:[%s165 + $0x778] sm:$0xff]
      %v468 = vld [vmem:[%s165 + $0x780] sm:$0xff]
      %v469 = vld [vmem:[%s165 + $0x788] sm:$0xff]
      %v470 = vld [vmem:[%s165 + $0x790] sm:$0xff]
      %v471 = vld [vmem:[%s165 + $0x798] sm:$0xff]
      %v472 = vld [vmem:[%s165 + $0x7a0] sm:$0xff]
      %v473 = vld [vmem:[%s165 + $0x7a8] sm:$0xff]
      %v474 = vld [vmem:[%s165 + $0x7b0] sm:$0xff]
      %v475 = vld [vmem:[%s165 + $0x7b8] sm:$0xff]
      %v476 = vld [vmem:[%s165 + $0x7c0] sm:$0xff]
      %v477 = vld [vmem:[%s165 + $0x7c8] sm:$0xff]
      %v478 = vld [vmem:[%s165 + $0x7d0] sm:$0xff]
      %v479 = vld [vmem:[%s165 + $0x7d8] sm:$0xff]
      %v480 = vld [vmem:[%s165 + $0x7e0] sm:$0xff]
      %v481 = vld [vmem:[%s165 + $0x7e8] sm:$0xff]
      %v482 = vld [vmem:[%s165 + $0x7f0] sm:$0xff]
      %v483 = vld [vmem:[%s165 + $0x7f8] sm:$0xff]
      %v484 = vld [vmem:[%s165 + $0x800] sm:$0xff]
      %v485 = vld [vmem:[%s165 + $0x808] sm:$0xff]
      %v486 = vld [vmem:[%s165 + $0x810] sm:$0xff]
      %v487 = vld [vmem:[%s165 + $0x818] sm:$0xff]
      %v488 = vld [vmem:[%s165 + $0x820] sm:$0xff]
      %v489 = vld [vmem:[%s165 + $0x828] sm:$0xff]
      %v490 = vld [vmem:[%s165 + $0x830] sm:$0xff]
      %v491 = vld [vmem:[%s165 + $0x838] sm:$0xff]
      %v492 = vld [vmem:[%s165 + $0x840] sm:$0xff]
      %v493 = vld [vmem:[%s165 + $0x848] sm:$0xff]
      %v494 = vld [vmem:[%s165 + $0x850] sm:$0xff]
      %v495 = vld [vmem:[%s165 + $0x858] sm:$0xff]
      %v496 = vld [vmem:[%s165 + $0x860] sm:$0xff]
      %v497 = vld [vmem:[%s165 + $0x868] sm:$0xff]
      %v498 = vld [vmem:[%s165 + $0x870] sm:$0xff]
      %v499 = vld [vmem:[%s165 + $0x878] sm:$0xff]
      %v500 = vld [vmem:[%s165 + $0x880] sm:$0xff]
      %v501 = vld [vmem:[%s165 + $0x888] sm:$0xff]
      %v502 = vld [vmem:[%s165 + $0x890] sm:$0xff]
      %v503 = vld [vmem:[%s165 + $0x898] sm:$0xff]
      %v504 = vld [vmem:[%s165 + $0x8a0] sm:$0xff]
      %v505 = vld [vmem:[%s165 + $0x8a8] sm:$0xff]
      %v506 = vld [vmem:[%s165 + $0x8b0] sm:$0xff]
      %v507 = vld [vmem:[%s165 + $0x8b8] sm:$0xff]
      %v508 = vld [vmem:[%s165 + $0x8c0] sm:$0xff]
      %v509 = vld [vmem:[%s165 + $0x8c8] sm:$0xff]
      %v510 = vld [vmem:[%s165 + $0x8d0] sm:$0xff]
      %v511 = vld [vmem:[%s165 + $0x8d8] sm:$0xff]
      %v512 = vld [vmem:[%s165 + $0x8e0] sm:$0xff]
      %v513 = vld [vmem:[%s165 + $0x8e8] sm:$0xff]
      %v514 = vld [vmem:[%s165 + $0x8f0] sm:$0xff]
      %v515 = vld [vmem:[%s165 + $0x8f8] sm:$0xff]
      %v516 = vld [vmem:[%s165 + $0x900] sm:$0xff]
      %v517 = vld [vmem:[%s165 + $0x908] sm:$0xff]
      %v518 = vld [vmem:[%s165 + $0x910] sm:$0xff]
      %v519 = vld [vmem:[%s165 + $0x918] sm:$0xff]
      %v520 = vld [vmem:[%s165 + $0x920] sm:$0xff]
      %v521 = vld [vmem:[%s165 + $0x928] sm:$0xff]
      %v522 = vld [vmem:[%s165 + $0x930] sm:$0xff]
      %v523 = vld [vmem:[%s165 + $0x938] sm:$0xff]
      %v524 = vld [vmem:[%s165 + $0x940] sm:$0xff]
      %v525 = vld [vmem:[%s165 + $0x948] sm:$0xff]
      %v526 = vld [vmem:[%s165 + $0x950] sm:$0xff]
      %v527 = vld [vmem:[%s165 + $0x958] sm:$0xff]
      %v528 = vld [vmem:[%s165 + $0x960] sm:$0xff]
      %v529 = vld [vmem:[%s165 + $0x968] sm:$0xff]
      %v530 = vld [vmem:[%s165 + $0x970] sm:$0xff]
      %v531 = vld [vmem:[%s165 + $0x978] sm:$0xff]
      %v532 = vld [vmem:[%s165 + $0x980] sm:$0xff]
      %v533 = vld [vmem:[%s165 + $0x988] sm:$0xff]
      %v534 = vld [vmem:[%s165 + $0x990] sm:$0xff]
      %v535 = vld [vmem:[%s165 + $0x998] sm:$0xff]
      %v536 = vld [vmem:[%s165 + $0x9a0] sm:$0xff]
      %v537 = vld [vmem:[%s165 + $0x9a8] sm:$0xff]
      %v538 = vld [vmem:[%s165 + $0x9b0] sm:$0xff]
      %v539 = vld [vmem:[%s165 + $0x9b8] sm:$0xff]
      %v540 = vld [vmem:[%s165 + $0x9c0] sm:$0xff]
      %v541 = vld [vmem:[%s165 + $0x9c8] sm:$0xff]
      %v542 = vld [vmem:[%s165 + $0x9d0] sm:$0xff]
      %v543 = vld [vmem:[%s165 + $0x9d8] sm:$0xff]
      %v544 = vld [vmem:[%s165 + $0x9e0] sm:$0xff]
      %v545 = vld [vmem:[%s165 + $0x9e8] sm:$0xff]
      %v546 = vld [vmem:[%s165 + $0x9f0] sm:$0xff]
      %v547 = vld [vmem:[%s165 + $0x9f8] sm:$0xff]
      %v548 = vld [vmem:[%s165 + $0xa00] sm:$0xff]
      %v549 = vld [vmem:[%s165 + $0xa08] sm:$0xff]
      %v550 = vld [vmem:[%s165 + $0xa10] sm:$0xff]
      %v551 = vld [vmem:[%s165 + $0xa18] sm:$0xff]
      %v552 = vld [vmem:[%s165 + $0xa20] sm:$0xff]
      %v553 = vld [vmem:[%s165 + $0xa28] sm:$0xff]
      %v554 = vld [vmem:[%s165 + $0xa30] sm:$0xff]
      %v555 = vld [vmem:[%s165 + $0xa38] sm:$0xff]
      %v556 = vld [vmem:[%s165 + $0xa40] sm:$0xff]
      %v557 = vld [vmem:[%s165 + $0xa48] sm:$0xff]
      %v558 = vld [vmem:[%s165 + $0xa50] sm:$0xff]
      %v559 = vld [vmem:[%s165 + $0xa58] sm:$0xff]
      %v560 = vld [vmem:[%s165 + $0xa60] sm:$0xff]
      %v561 = vld [vmem:[%s165 + $0xa68] sm:$0xff]
      %v562 = vld [vmem:[%s165 + $0xa70] sm:$0xff]
      %v563 = vld [vmem:[%s165 + $0xa78] sm:$0xff]
      %v564 = vld [vmem:[%s165 + $0xa80] sm:$0xff]
      %v565 = vld [vmem:[%s165 + $0xa88] sm:$0xff]
      %v566 = vld [vmem:[%s165 + $0xa90] sm:$0xff]
      %v567 = vld [vmem:[%s165 + $0xa98] sm:$0xff]
      %v568 = vld [vmem:[%s165 + $0xaa0] sm:$0xff]
      %v569 = vld [vmem:[%s165 + $0xaa8] sm:$0xff]
      %v570 = vld [vmem:[%s165 + $0xab0] sm:$0xff]
      %v571 = vld [vmem:[%s165 + $0xab8] sm:$0xff]
      %v572 = vld [vmem:[%s165 + $0xac0] sm:$0xff]
      %v573 = vld [vmem:[%s165 + $0xac8] sm:$0xff]
      %v574 = vld [vmem:[%s165 + $0xad0] sm:$0xff]
      %v575 = vld [vmem:[%s165 + $0xad8] sm:$0xff]
      %v576 = vld [vmem:[%s165 + $0xae0] sm:$0xff]
      %v577 = vld [vmem:[%s165 + $0xae8] sm:$0xff]
      %v578 = vld [vmem:[%s165 + $0xaf0] sm:$0xff]
      %v579 = vld [vmem:[%s165 + $0xaf8] sm:$0xff]
      %v580 = vld [vmem:[%s165 + $0xb00] sm:$0xff]
      %v581 = vld [vmem:[%s165 + $0xb08] sm:$0xff]
      %v582 = vld [vmem:[%s165 + $0xb10] sm:$0xff]
      %v583 = vld [vmem:[%s165 + $0xb18] sm:$0xff]
      %v584 = vld [vmem:[%s165 + $0xb20] sm:$0xff]
      %v585 = vld [vmem:[%s165 + $0xb28] sm:$0xff]
      %v586 = vld [vmem:[%s165 + $0xb30] sm:$0xff]
      %v587 = vld [vmem:[%s165 + $0xb38] sm:$0xff]
      %v588 = vld [vmem:[%s165 + $0xb40] sm:$0xff]
      %v589 = vld [vmem:[%s165 + $0xb48] sm:$0xff]
      %v590 = vld [vmem:[%s165 + $0xb50] sm:$0xff]
      %v591 = vld [vmem:[%s165 + $0xb58] sm:$0xff]
      %v592 = vld [vmem:[%s165 + $0xb60] sm:$0xff]
      %v593 = vld [vmem:[%s165 + $0xb68] sm:$0xff]
      %v594 = vld [vmem:[%s165 + $0xb70] sm:$0xff]
      %v595 = vld [vmem:[%s165 + $0xb78] sm:$0xff]
      %v596 = vld [vmem:[%s165 + $0xb80] sm:$0xff]
      %v597 = vld [vmem:[%s165 + $0xb88] sm:$0xff]
      %v598 = vld [vmem:[%s165 + $0xb90] sm:$0xff]
      %v599 = vld [vmem:[%s165 + $0xb98] sm:$0xff]
      %v600 = vld [vmem:[%s165 + $0xba0] sm:$0xff]
      %v601 = vld [vmem:[%s165 + $0xba8] sm:$0xff]
      %v602 = vld [vmem:[%s165 + $0xbb0] sm:$0xff]
      %v603 = vld [vmem:[%s165 + $0xbb8] sm:$0xff]
      %v604 = vld [vmem:[%s165 + $0xbc0] sm:$0xff]
      %v605 = vld [vmem:[%s165 + $0xbc8] sm:$0xff]
      %v606 = vld [vmem:[%s165 + $0xbd0] sm:$0xff]
      %v607 = vld [vmem:[%s165 + $0xbd8] sm:$0xff]
      %v608 = vld [vmem:[%s165 + $0xbe0] sm:$0xff]
      %v609 = vld [vmem:[%s165 + $0xbe8] sm:$0xff]
      %v610 = vld [vmem:[%s165 + $0xbf0] sm:$0xff]
      %v611 = vld [vmem:[%s165 + $0xbf8] sm:$0xff]
      %v612 = vld [vmem:[%s165 + $0xc00] sm:$0xff]
      %v613 = vld [vmem:[%s165 + $0xc08] sm:$0xff]
      %v614 = vld [vmem:[%s165 + $0xc10] sm:$0xff]
      %v615 = vld [vmem:[%s165 + $0xc18] sm:$0xff]
      %v616 = vld [vmem:[%s165 + $0xc20] sm:$0xff]
      %v617 = vld [vmem:[%s165 + $0xc28] sm:$0xff]
      %v618 = vld [vmem:[%s165 + $0xc30] sm:$0xff]
      %v619 = vld [vmem:[%s165 + $0xc38] sm:$0xff]
      %v620 = vld [vmem:[%s165 + $0xc40] sm:$0xff]
      %v621 = vld [vmem:[%s165 + $0xc48] sm:$0xff]
      %v622 = vld [vmem:[%s165 + $0xc50] sm:$0xff]
      %v623 = vld [vmem:[%s165 + $0xc58] sm:$0xff]
      %v624 = vld [vmem:[%s165 + $0xc60] sm:$0xff]
      %v625 = vld [vmem:[%s165 + $0xc68] sm:$0xff]
      %v626 = vld [vmem:[%s165 + $0xc70] sm:$0xff]
      %v627 = vld [vmem:[%s165 + $0xc78] sm:$0xff]
      %v628 = vld [vmem:[%s165 + $0xc80] sm:$0xff]
      %v629 = vld [vmem:[%s165 + $0xc88] sm:$0xff]
      %v630 = vld [vmem:[%s165 + $0xc90] sm:$0xff]
      %v631 = vld [vmem:[%s165 + $0xc98] sm:$0xff]
      %v632 = vld [vmem:[%s165 + $0xca0] sm:$0xff]
      %v633 = vld [vmem:[%s165 + $0xca8] sm:$0xff]
      %v634 = vld [vmem:[%s165 + $0xcb0] sm:$0xff]
      %v635 = vld [vmem:[%s165 + $0xcb8] sm:$0xff]
      %v636 = vld [vmem:[%s165 + $0xcc0] sm:$0xff]
      %v637 = vld [vmem:[%s165 + $0xcc8] sm:$0xff]
      %v638 = vld [vmem:[%s165 + $0xcd0] sm:$0xff]
      %v639 = vld [vmem:[%s165 + $0xcd8] sm:$0xff]
      %v640 = vld [vmem:[%s165 + $0xce0] sm:$0xff]
      %v641 = vld [vmem:[%s165 + $0xce8] sm:$0xff]
      %v642 = vld [vmem:[%s165 + $0xcf0] sm:$0xff]
      %v643 = vld [vmem:[%s165 + $0xcf8] sm:$0xff]
      %v644 = vld [vmem:[%s165 + $0xd00] sm:$0xff]
      %v645 = vld [vmem:[%s165 + $0xd08] sm:$0xff]
      %v646 = vld [vmem:[%s165 + $0xd10] sm:$0xff]
      %v647 = vld [vmem:[%s165 + $0xd18] sm:$0xff]
      %v648 = vld [vmem:[%s165 + $0xd20] sm:$0xff]
      %v649 = vld [vmem:[%s165 + $0xd28] sm:$0xff]
      %v650 = vld [vmem:[%s165 + $0xd30] sm:$0xff]
      %v651 = vld [vmem:[%s165 + $0xd38] sm:$0xff]
      %v652 = vld [vmem:[%s165 + $0xd40] sm:$0xff]
      %v653 = vld [vmem:[%s165 + $0xd48] sm:$0xff]
      %v654 = vld [vmem:[%s165 + $0xd50] sm:$0xff]
      %v655 = vld [vmem:[%s165 + $0xd58] sm:$0xff]
      %v656 = vld [vmem:[%s165 + $0xd60] sm:$0xff]
      %v657 = vld [vmem:[%s165 + $0xd68] sm:$0xff]
      %v658 = vld [vmem:[%s165 + $0xd70] sm:$0xff]
      %v659 = vld [vmem:[%s165 + $0xd78] sm:$0xff]
      %v660 = vld [vmem:[%s2] sm:$0xff]
      %v661 = vld [vmem:[%s2 + $0x8] sm:$0xff]
      %v662 = vld [vmem:[%s2 + $0x10] sm:$0xff]
      %v663 = vld [vmem:[%s2 + $0x18] sm:$0xff]
      %v664 = vld [vmem:[%s2 + $0x20] sm:$0xff]
      %v665 = vld [vmem:[%s2 + $0x28] sm:$0xff]
      %v666 = vld [vmem:[%s2 + $0x30] sm:$0xff]
      %v667 = vld [vmem:[%s2 + $0x38] sm:$0xff]
      %669 = vset.pattern.permute.xlu0 0
      %670 = vperm.xlu0 %669, %v660
      %v671 = vpop.permute.xlu0 %670
      %674 = vset.pattern.permute.xlu0 0
      %675 = vperm.xlu0 %674, %v661
      %v676 = vpop.permute.xlu0 %675
      %679 = vset.pattern.permute.xlu0 0
      %680 = vperm.xlu0 %679, %v662
      %v681 = vpop.permute.xlu0 %680
      %684 = vset.pattern.permute.xlu0 0
      %685 = vperm.xlu0 %684, %v663
      %v686 = vpop.permute.xlu0 %685
      %689 = vset.pattern.permute.xlu0 0
      %690 = vperm.xlu0 %689, %v664
      %v691 = vpop.permute.xlu0 %690
      %694 = vset.pattern.permute.xlu0 0
      %695 = vperm.xlu0 %694, %v665
      %v696 = vpop.permute.xlu0 %695
      %699 = vset.pattern.permute.xlu0 0
      %700 = vperm.xlu0 %699, %v666
      %v701 = vpop.permute.xlu0 %700
      %704 = vset.pattern.permute.xlu0 0
      %705 = vperm.xlu0 %704, %v667
      %v706 = vpop.permute.xlu0 %705
      %v764 = vunpack.c.l.b16 %v172
      %v765 = vunpack.c.h.b16 %v172
      %v766 = vunpack.c.l.b16 %v173
      %v767 = vunpack.c.h.b16 %v173
      %v768 = vunpack.c.l.b16 %v174
      %v769 = vunpack.c.h.b16 %v174
      %v770 = vunpack.c.l.b16 %v175
      %v771 = vunpack.c.h.b16 %v175
      %v772 = vunpack.c.l.b16 %v176
      %v773 = vunpack.c.h.b16 %v176
      %v774 = vunpack.c.l.b16 %v177
      %v775 = vunpack.c.h.b16 %v177
      %v776 = vunpack.c.l.b16 %v178
      %v777 = vunpack.c.h.b16 %v178
      %v778 = vunpack.c.l.b16 %v179
      %v779 = vunpack.c.h.b16 %v179
      %v780 = vunpack.c.l.b16 %v180
      %v781 = vunpack.c.h.b16 %v180
      %v782 = vunpack.c.l.b16 %v181
      %v783 = vunpack.c.h.b16 %v181
      %v784 = vunpack.c.l.b16 %v182
      %v785 = vunpack.c.h.b16 %v182
      %v786 = vunpack.c.l.b16 %v183
      %v787 = vunpack.c.h.b16 %v183
      %v788 = vunpack.c.l.b16 %v184
      %v789 = vunpack.c.h.b16 %v184
      %v790 = vunpack.c.l.b16 %v185
      %v791 = vunpack.c.h.b16 %v185
      %v792 = vunpack.c.l.b16 %v186
      %v793 = vunpack.c.h.b16 %v186
      %v794 = vunpack.c.l.b16 %v187
      %v795 = vunpack.c.h.b16 %v187
      %v796 = vunpack.c.l.b16 %v188
      %v797 = vunpack.c.h.b16 %v188
      %v798 = vunpack.c.l.b16 %v189
      %v799 = vunpack.c.h.b16 %v189
      %v800 = vunpack.c.l.b16 %v190
      %v801 = vunpack.c.h.b16 %v190
      %v802 = vunpack.c.l.b16 %v191
      %v803 = vunpack.c.h.b16 %v191
      %v804 = vunpack.c.l.b16 %v192
      %v805 = vunpack.c.h.b16 %v192
      %v806 = vunpack.c.l.b16 %v193
      %v807 = vunpack.c.h.b16 %v193
      %v808 = vunpack.c.l.b16 %v194
      %v809 = vunpack.c.h.b16 %v194
      %v810 = vunpack.c.l.b16 %v195
      %v811 = vunpack.c.h.b16 %v195
      %v812 = vunpack.c.l.b16 %v196
      %v813 = vunpack.c.h.b16 %v196
      %v814 = vunpack.c.l.b16 %v197
      %v815 = vunpack.c.h.b16 %v197
      %v816 = vunpack.c.l.b16 %v198
      %v817 = vunpack.c.h.b16 %v198
      %v818 = vunpack.c.l.b16 %v199
      %v819 = vunpack.c.h.b16 %v199
      %v820 = vunpack.c.l.b16 %v200
      %v821 = vunpack.c.h.b16 %v200
      %v822 = vunpack.c.l.b16 %v201
      %v823 = vunpack.c.h.b16 %v201
      %v824 = vunpack.c.l.b16 %v202
      %v825 = vunpack.c.h.b16 %v202
      %v826 = vunpack.c.l.b16 %v203
      %v827 = vunpack.c.h.b16 %v203
      %v828 = vunpack.c.l.b16 %v204
      %v829 = vunpack.c.h.b16 %v204
      %v830 = vunpack.c.l.b16 %v205
      %v831 = vunpack.c.h.b16 %v205
      %v832 = vunpack.c.l.b16 %v206
      %v833 = vunpack.c.h.b16 %v206
      %v834 = vunpack.c.l.b16 %v207
      %v835 = vunpack.c.h.b16 %v207
      %v836 = vunpack.c.l.b16 %v208
      %v837 = vunpack.c.h.b16 %v208
      %v838 = vunpack.c.l.b16 %v209
      %v839 = vunpack.c.h.b16 %v209
      %v840 = vunpack.c.l.b16 %v210
      %v841 = vunpack.c.h.b16 %v210
      %v842 = vunpack.c.l.b16 %v211
      %v843 = vunpack.c.h.b16 %v211
      %v844 = vunpack.c.l.b16 %v212
      %v845 = vunpack.c.h.b16 %v212
      %v846 = vunpack.c.l.b16 %v213
      %v847 = vunpack.c.h.b16 %v213
      %v848 = vunpack.c.l.b16 %v214
      %v849 = vunpack.c.h.b16 %v214
      %v850 = vunpack.c.l.b16 %v215
      %v851 = vunpack.c.h.b16 %v215
      %v852 = vunpack.c.l.b16 %v216
      %v853 = vunpack.c.h.b16 %v216
      %v854 = vunpack.c.l.b16 %v217
      %v855 = vunpack.c.h.b16 %v217
      %v856 = vunpack.c.l.b16 %v218
      %v857 = vunpack.c.h.b16 %v218
      %v858 = vunpack.c.l.b16 %v219
      %v859 = vunpack.c.h.b16 %v219
      %v860 = vunpack.c.l.b16 %v220
      %v861 = vunpack.c.h.b16 %v220
      %v862 = vunpack.c.l.b16 %v221
      %v863 = vunpack.c.h.b16 %v221
      %v864 = vunpack.c.l.b16 %v222
      %v865 = vunpack.c.h.b16 %v222
      %v866 = vunpack.c.l.b16 %v223
      %v867 = vunpack.c.h.b16 %v223
      %v868 = vunpack.c.l.b16 %v224
      %v869 = vunpack.c.h.b16 %v224
      %v870 = vunpack.c.l.b16 %v225
      %v871 = vunpack.c.h.b16 %v225
      %v872 = vunpack.c.l.b16 %v226
      %v873 = vunpack.c.h.b16 %v226
      %v874 = vunpack.c.l.b16 %v227
      %v875 = vunpack.c.h.b16 %v227
      %v876 = vpack.c.b16 %v778, %v764
      %v877 = vpack.c.b16 %v779, %v765
      %v878 = vpack.c.b16 %v780, %v766
      %v879 = vpack.c.b16 %v781, %v767
      %v880 = vpack.c.b16 %v782, %v768
      %v881 = vpack.c.b16 %v783, %v769
      %v882 = vpack.c.b16 %v784, %v770
      %v883 = vpack.c.b16 %v785, %v771
      %v884 = vpack.c.b16 %v786, %v772
      %v885 = vpack.c.b16 %v787, %v773
      %v886 = vpack.c.b16 %v788, %v774
      %v887 = vpack.c.b16 %v789, %v775
      %v888 = vpack.c.b16 %v790, %v776
      %v889 = vpack.c.b16 %v791, %v777
      %v890 = vpack.c.b16 %v806, %v792
      %v891 = vpack.c.b16 %v807, %v793
      %v892 = vpack.c.b16 %v808, %v794
      %v893 = vpack.c.b16 %v809, %v795
      %v894 = vpack.c.b16 %v810, %v796
      %v895 = vpack.c.b16 %v811, %v797
      %v896 = vpack.c.b16 %v812, %v798
      %v897 = vpack.c.b16 %v813, %v799
      %v898 = vpack.c.b16 %v814, %v800
      %v899 = vpack.c.b16 %v815, %v801
      %v900 = vpack.c.b16 %v816, %v802
      %v901 = vpack.c.b16 %v817, %v803
      %v902 = vpack.c.b16 %v818, %v804
      %v903 = vpack.c.b16 %v819, %v805
      %v904 = vpack.c.b16 %v834, %v820
      %v905 = vpack.c.b16 %v835, %v821
      %v906 = vpack.c.b16 %v836, %v822
      %v907 = vpack.c.b16 %v837, %v823
      %v908 = vpack.c.b16 %v838, %v824
      %v909 = vpack.c.b16 %v839, %v825
      %v910 = vpack.c.b16 %v840, %v826
      %v911 = vpack.c.b16 %v841, %v827
      %v912 = vpack.c.b16 %v842, %v828
      %v913 = vpack.c.b16 %v843, %v829
      %v914 = vpack.c.b16 %v844, %v830
      %v915 = vpack.c.b16 %v845, %v831
      %v916 = vpack.c.b16 %v846, %v832
      %v917 = vpack.c.b16 %v847, %v833
      %v918 = vpack.c.b16 %v862, %v848
      %v919 = vpack.c.b16 %v863, %v849
      %v920 = vpack.c.b16 %v864, %v850
      %v921 = vpack.c.b16 %v865, %v851
      %v922 = vpack.c.b16 %v866, %v852
      %v923 = vpack.c.b16 %v867, %v853
      %v924 = vpack.c.b16 %v868, %v854
      %v925 = vpack.c.b16 %v869, %v855
      %v926 = vpack.c.b16 %v870, %v856
      %v927 = vpack.c.b16 %v871, %v857
      %v928 = vpack.c.b16 %v872, %v858
      %v929 = vpack.c.b16 %v873, %v859
      %v930 = vpack.c.b16 %v874, %v860
      %v931 = vpack.c.b16 %v875, %v861
      %v1416 = vunpack.c.l.b16 %v228
      %v1417 = vunpack.c.h.b16 %v228
      %v1418 = vunpack.c.l.b16 %v229
      %v1419 = vunpack.c.h.b16 %v229
      %v1420 = vunpack.c.l.b16 %v230
      %v1421 = vunpack.c.h.b16 %v230
      %v1422 = vunpack.c.l.b16 %v231
      %v1423 = vunpack.c.h.b16 %v231
      %v1424 = vunpack.c.l.b16 %v232
      %v1425 = vunpack.c.h.b16 %v232
      %v1426 = vunpack.c.l.b16 %v233
      %v1427 = vunpack.c.h.b16 %v233
      %v1428 = vunpack.c.l.b16 %v234
      %v1429 = vunpack.c.h.b16 %v234
      %v1430 = vunpack.c.l.b16 %v235
      %v1431 = vunpack.c.h.b16 %v235
      %v1432 = vunpack.c.l.b16 %v236
      %v1433 = vunpack.c.h.b16 %v236
      %v1434 = vunpack.c.l.b16 %v237
      %v1435 = vunpack.c.h.b16 %v237
      %v1436 = vunpack.c.l.b16 %v238
      %v1437 = vunpack.c.h.b16 %v238
      %v1438 = vunpack.c.l.b16 %v239
      %v1439 = vunpack.c.h.b16 %v239
      %v1440 = vunpack.c.l.b16 %v240
      %v1441 = vunpack.c.h.b16 %v240
      %v1442 = vunpack.c.l.b16 %v241
      %v1443 = vunpack.c.h.b16 %v241
      %v1444 = vunpack.c.l.b16 %v242
      %v1445 = vunpack.c.h.b16 %v242
      %v1446 = vunpack.c.l.b16 %v243
      %v1447 = vunpack.c.h.b16 %v243
      %v1448 = vunpack.c.l.b16 %v244
      %v1449 = vunpack.c.h.b16 %v244
      %v1450 = vunpack.c.l.b16 %v245
      %v1451 = vunpack.c.h.b16 %v245
      %v1452 = vunpack.c.l.b16 %v246
      %v1453 = vunpack.c.h.b16 %v246
      %v1454 = vunpack.c.l.b16 %v247
      %v1455 = vunpack.c.h.b16 %v247
      %v1456 = vunpack.c.l.b16 %v248
      %v1457 = vunpack.c.h.b16 %v248
      %v1458 = vunpack.c.l.b16 %v249
      %v1459 = vunpack.c.h.b16 %v249
      %v1460 = vunpack.c.l.b16 %v250
      %v1461 = vunpack.c.h.b16 %v250
      %v1462 = vunpack.c.l.b16 %v251
      %v1463 = vunpack.c.h.b16 %v251
      %v1464 = vunpack.c.l.b16 %v252
      %v1465 = vunpack.c.h.b16 %v252
      %v1466 = vunpack.c.l.b16 %v253
      %v1467 = vunpack.c.h.b16 %v253
      %v1468 = vunpack.c.l.b16 %v254
      %v1469 = vunpack.c.h.b16 %v254
      %v1470 = vunpack.c.l.b16 %v255
      %v1471 = vunpack.c.h.b16 %v255
      %v1472 = vunpack.c.l.b16 %v256
      %v1473 = vunpack.c.h.b16 %v256
      %v1474 = vunpack.c.l.b16 %v257
      %v1475 = vunpack.c.h.b16 %v257
      %v1476 = vunpack.c.l.b16 %v258
      %v1477 = vunpack.c.h.b16 %v258
      %v1478 = vunpack.c.l.b16 %v259
      %v1479 = vunpack.c.h.b16 %v259
      %v1480 = vunpack.c.l.b16 %v260
      %v1481 = vunpack.c.h.b16 %v260
      %v1482 = vunpack.c.l.b16 %v261
      %v1483 = vunpack.c.h.b16 %v261
      %v1484 = vunpack.c.l.b16 %v262
      %v1485 = vunpack.c.h.b16 %v262
      %v1486 = vunpack.c.l.b16 %v263
      %v1487 = vunpack.c.h.b16 %v263
      %v1488 = vunpack.c.l.b16 %v264
      %v1489 = vunpack.c.h.b16 %v264
      %v1490 = vunpack.c.l.b16 %v265
      %v1491 = vunpack.c.h.b16 %v265
      %v1492 = vunpack.c.l.b16 %v266
      %v1493 = vunpack.c.h.b16 %v266
      %v1494 = vunpack.c.l.b16 %v267
      %v1495 = vunpack.c.h.b16 %v267
      %v1496 = vunpack.c.l.b16 %v268
      %v1497 = vunpack.c.h.b16 %v268
      %v1498 = vunpack.c.l.b16 %v269
      %v1499 = vunpack.c.h.b16 %v269
      %v1500 = vunpack.c.l.b16 %v270
      %v1501 = vunpack.c.h.b16 %v270
      %v1502 = vunpack.c.l.b16 %v271
      %v1503 = vunpack.c.h.b16 %v271
      %v1504 = vunpack.c.l.b16 %v272
      %v1505 = vunpack.c.h.b16 %v272
      %v1506 = vunpack.c.l.b16 %v273
      %v1507 = vunpack.c.h.b16 %v273
      %v1508 = vunpack.c.l.b16 %v274
      %v1509 = vunpack.c.h.b16 %v274
      %v1510 = vunpack.c.l.b16 %v275
      %v1511 = vunpack.c.h.b16 %v275
      %v1512 = vunpack.c.l.b16 %v276
      %v1513 = vunpack.c.h.b16 %v276
      %v1514 = vunpack.c.l.b16 %v277
      %v1515 = vunpack.c.h.b16 %v277
      %v1516 = vunpack.c.l.b16 %v278
      %v1517 = vunpack.c.h.b16 %v278
      %v1518 = vunpack.c.l.b16 %v279
      %v1519 = vunpack.c.h.b16 %v279
      %v1520 = vunpack.c.l.b16 %v280
      %v1521 = vunpack.c.h.b16 %v280
      %v1522 = vunpack.c.l.b16 %v281
      %v1523 = vunpack.c.h.b16 %v281
      %v1524 = vunpack.c.l.b16 %v282
      %v1525 = vunpack.c.h.b16 %v282
      %v1526 = vunpack.c.l.b16 %v283
      %v1527 = vunpack.c.h.b16 %v283
      %v1528 = vunpack.c.l.b16 %v284
      %v1529 = vunpack.c.h.b16 %v284
      %v1530 = vunpack.c.l.b16 %v285
      %v1531 = vunpack.c.h.b16 %v285
      %v1532 = vunpack.c.l.b16 %v286
      %v1533 = vunpack.c.h.b16 %v286
      %v1534 = vunpack.c.l.b16 %v287
      %v1535 = vunpack.c.h.b16 %v287
      %v1536 = vunpack.c.l.b16 %v288
      %v1537 = vunpack.c.h.b16 %v288
      %v1538 = vunpack.c.l.b16 %v289
      %v1539 = vunpack.c.h.b16 %v289
      %v1540 = vunpack.c.l.b16 %v290
      %v1541 = vunpack.c.h.b16 %v290
      %v1542 = vunpack.c.l.b16 %v291
      %v1543 = vunpack.c.h.b16 %v291
      %v1544 = vunpack.c.l.b16 %v292
      %v1545 = vunpack.c.h.b16 %v292
      %v1546 = vunpack.c.l.b16 %v293
      %v1547 = vunpack.c.h.b16 %v293
      %v1548 = vunpack.c.l.b16 %v294
      %v1549 = vunpack.c.h.b16 %v294
      %v1550 = vunpack.c.l.b16 %v295
      %v1551 = vunpack.c.h.b16 %v295
      %v1552 = vunpack.c.l.b16 %v296
      %v1553 = vunpack.c.h.b16 %v296
      %v1554 = vunpack.c.l.b16 %v297
      %v1555 = vunpack.c.h.b16 %v297
      %v1556 = vunpack.c.l.b16 %v298
      %v1557 = vunpack.c.h.b16 %v298
      %v1558 = vunpack.c.l.b16 %v299
      %v1559 = vunpack.c.h.b16 %v299
      %v1560 = vunpack.c.l.b16 %v300
      %v1561 = vunpack.c.h.b16 %v300
      %v1562 = vunpack.c.l.b16 %v301
      %v1563 = vunpack.c.h.b16 %v301
      %v1564 = vunpack.c.l.b16 %v302
      %v1565 = vunpack.c.h.b16 %v302
      %v1566 = vunpack.c.l.b16 %v303
      %v1567 = vunpack.c.h.b16 %v303
      %v1568 = vunpack.c.l.b16 %v304
      %v1569 = vunpack.c.h.b16 %v304
      %v1570 = vunpack.c.l.b16 %v305
      %v1571 = vunpack.c.h.b16 %v305
      %v1572 = vunpack.c.l.b16 %v306
      %v1573 = vunpack.c.h.b16 %v306
      %v1574 = vunpack.c.l.b16 %v307
      %v1575 = vunpack.c.h.b16 %v307
      %v1576 = vunpack.c.l.b16 %v308
      %v1577 = vunpack.c.h.b16 %v308
      %v1578 = vunpack.c.l.b16 %v309
      %v1579 = vunpack.c.h.b16 %v309
      %v1580 = vunpack.c.l.b16 %v310
      %v1581 = vunpack.c.h.b16 %v310
      %v1582 = vunpack.c.l.b16 %v311
      %v1583 = vunpack.c.h.b16 %v311
      %v1584 = vunpack.c.l.b16 %v312
      %v1585 = vunpack.c.h.b16 %v312
      %v1586 = vunpack.c.l.b16 %v313
      %v1587 = vunpack.c.h.b16 %v313
      %v1588 = vunpack.c.l.b16 %v314
      %v1589 = vunpack.c.h.b16 %v314
      %v1590 = vunpack.c.l.b16 %v315
      %v1591 = vunpack.c.h.b16 %v315
      %v1592 = vunpack.c.l.b16 %v316
      %v1593 = vunpack.c.h.b16 %v316
      %v1594 = vunpack.c.l.b16 %v317
      %v1595 = vunpack.c.h.b16 %v317
      %v1596 = vunpack.c.l.b16 %v318
      %v1597 = vunpack.c.h.b16 %v318
      %v1598 = vunpack.c.l.b16 %v319
      %v1599 = vunpack.c.h.b16 %v319
      %v1600 = vunpack.c.l.b16 %v320
      %v1601 = vunpack.c.h.b16 %v320
      %v1602 = vunpack.c.l.b16 %v321
      %v1603 = vunpack.c.h.b16 %v321
      %v1604 = vunpack.c.l.b16 %v322
      %v1605 = vunpack.c.h.b16 %v322
      %v1606 = vunpack.c.l.b16 %v323
      %v1607 = vunpack.c.h.b16 %v323
      %v1608 = vunpack.c.l.b16 %v324
      %v1609 = vunpack.c.h.b16 %v324
      %v1610 = vunpack.c.l.b16 %v325
      %v1611 = vunpack.c.h.b16 %v325
      %v1612 = vunpack.c.l.b16 %v326
      %v1613 = vunpack.c.h.b16 %v326
      %v1614 = vunpack.c.l.b16 %v327
      %v1615 = vunpack.c.h.b16 %v327
      %v1616 = vunpack.c.l.b16 %v328
      %v1617 = vunpack.c.h.b16 %v328
      %v1618 = vunpack.c.l.b16 %v329
      %v1619 = vunpack.c.h.b16 %v329
      %v1620 = vunpack.c.l.b16 %v330
      %v1621 = vunpack.c.h.b16 %v330
      %v1622 = vunpack.c.l.b16 %v331
      %v1623 = vunpack.c.h.b16 %v331
      %v1624 = vunpack.c.l.b16 %v332
      %v1625 = vunpack.c.h.b16 %v332
      %v1626 = vunpack.c.l.b16 %v333
      %v1627 = vunpack.c.h.b16 %v333
      %v1628 = vunpack.c.l.b16 %v334
      %v1629 = vunpack.c.h.b16 %v334
      %v1630 = vunpack.c.l.b16 %v335
      %v1631 = vunpack.c.h.b16 %v335
      %v1632 = vunpack.c.l.b16 %v336
      %v1633 = vunpack.c.h.b16 %v336
      %v1634 = vunpack.c.l.b16 %v337
      %v1635 = vunpack.c.h.b16 %v337
      %v1636 = vunpack.c.l.b16 %v338
      %v1637 = vunpack.c.h.b16 %v338
      %v1638 = vunpack.c.l.b16 %v339
      %v1639 = vunpack.c.h.b16 %v339
      %v1640 = vunpack.c.l.b16 %v340
      %v1641 = vunpack.c.h.b16 %v340
      %v1642 = vunpack.c.l.b16 %v341
      %v1643 = vunpack.c.h.b16 %v341
      %v1644 = vunpack.c.l.b16 %v342
      %v1645 = vunpack.c.h.b16 %v342
      %v1646 = vunpack.c.l.b16 %v343
      %v1647 = vunpack.c.h.b16 %v343
      %v1648 = vunpack.c.l.b16 %v344
      %v1649 = vunpack.c.h.b16 %v344
      %v1650 = vunpack.c.l.b16 %v345
      %v1651 = vunpack.c.h.b16 %v345
      %v1652 = vunpack.c.l.b16 %v346
      %v1653 = vunpack.c.h.b16 %v346
      %v1654 = vunpack.c.l.b16 %v347
      %v1655 = vunpack.c.h.b16 %v347
      %v1656 = vunpack.c.l.b16 %v348
      %v1657 = vunpack.c.h.b16 %v348
      %v1658 = vunpack.c.l.b16 %v349
      %v1659 = vunpack.c.h.b16 %v349
      %v1660 = vunpack.c.l.b16 %v350
      %v1661 = vunpack.c.h.b16 %v350
      %v1662 = vunpack.c.l.b16 %v351
      %v1663 = vunpack.c.h.b16 %v351
      %v1664 = vunpack.c.l.b16 %v352
      %v1665 = vunpack.c.h.b16 %v352
      %v1666 = vunpack.c.l.b16 %v353
      %v1667 = vunpack.c.h.b16 %v353
      %v1668 = vunpack.c.l.b16 %v354
      %v1669 = vunpack.c.h.b16 %v354
      %v1670 = vunpack.c.l.b16 %v355
      %v1671 = vunpack.c.h.b16 %v355
      %v1672 = vunpack.c.l.b16 %v356
      %v1673 = vunpack.c.h.b16 %v356
      %v1674 = vunpack.c.l.b16 %v357
      %v1675 = vunpack.c.h.b16 %v357
      %v1676 = vunpack.c.l.b16 %v358
      %v1677 = vunpack.c.h.b16 %v358
      %v1678 = vunpack.c.l.b16 %v359
      %v1679 = vunpack.c.h.b16 %v359
      %v1680 = vunpack.c.l.b16 %v360
      %v1681 = vunpack.c.h.b16 %v360
      %v1682 = vunpack.c.l.b16 %v361
      %v1683 = vunpack.c.h.b16 %v361
      %v1684 = vunpack.c.l.b16 %v362
      %v1685 = vunpack.c.h.b16 %v362
      %v1686 = vunpack.c.l.b16 %v363
      %v1687 = vunpack.c.h.b16 %v363
      %v1688 = vunpack.c.l.b16 %v364
      %v1689 = vunpack.c.h.b16 %v364
      %v1690 = vunpack.c.l.b16 %v365
      %v1691 = vunpack.c.h.b16 %v365
      %v1692 = vunpack.c.l.b16 %v366
      %v1693 = vunpack.c.h.b16 %v366
      %v1694 = vunpack.c.l.b16 %v367
      %v1695 = vunpack.c.h.b16 %v367
      %v1696 = vunpack.c.l.b16 %v368
      %v1697 = vunpack.c.h.b16 %v368
      %v1698 = vunpack.c.l.b16 %v369
      %v1699 = vunpack.c.h.b16 %v369
      %v1700 = vunpack.c.l.b16 %v370
      %v1701 = vunpack.c.h.b16 %v370
      %v1702 = vunpack.c.l.b16 %v371
      %v1703 = vunpack.c.h.b16 %v371
      %v1704 = vunpack.c.l.b16 %v372
      %v1705 = vunpack.c.h.b16 %v372
      %v1706 = vunpack.c.l.b16 %v373
      %v1707 = vunpack.c.h.b16 %v373
      %v1708 = vunpack.c.l.b16 %v374
      %v1709 = vunpack.c.h.b16 %v374
      %v1710 = vunpack.c.l.b16 %v375
      %v1711 = vunpack.c.h.b16 %v375
      %v1712 = vunpack.c.l.b16 %v376
      %v1713 = vunpack.c.h.b16 %v376
      %v1714 = vunpack.c.l.b16 %v377
      %v1715 = vunpack.c.h.b16 %v377
      %v1716 = vunpack.c.l.b16 %v378
      %v1717 = vunpack.c.h.b16 %v378
      %v1718 = vunpack.c.l.b16 %v379
      %v1719 = vunpack.c.h.b16 %v379
      %v1720 = vunpack.c.l.b16 %v380
      %v1721 = vunpack.c.h.b16 %v380
      %v1722 = vunpack.c.l.b16 %v381
      %v1723 = vunpack.c.h.b16 %v381
      %v1724 = vunpack.c.l.b16 %v382
      %v1725 = vunpack.c.h.b16 %v382
      %v1726 = vunpack.c.l.b16 %v383
      %v1727 = vunpack.c.h.b16 %v383
      %v1728 = vunpack.c.l.b16 %v384
      %v1729 = vunpack.c.h.b16 %v384
      %v1730 = vunpack.c.l.b16 %v385
      %v1731 = vunpack.c.h.b16 %v385
      %v1732 = vunpack.c.l.b16 %v386
      %v1733 = vunpack.c.h.b16 %v386
      %v1734 = vunpack.c.l.b16 %v387
      %v1735 = vunpack.c.h.b16 %v387
      %v1736 = vunpack.c.l.b16 %v388
      %v1737 = vunpack.c.h.b16 %v388
      %v1738 = vunpack.c.l.b16 %v389
      %v1739 = vunpack.c.h.b16 %v389
      %v1740 = vunpack.c.l.b16 %v390
      %v1741 = vunpack.c.h.b16 %v390
      %v1742 = vunpack.c.l.b16 %v391
      %v1743 = vunpack.c.h.b16 %v391
      %v1744 = vunpack.c.l.b16 %v392
      %v1745 = vunpack.c.h.b16 %v392
      %v1746 = vunpack.c.l.b16 %v393
      %v1747 = vunpack.c.h.b16 %v393
      %v1748 = vunpack.c.l.b16 %v394
      %v1749 = vunpack.c.h.b16 %v394
      %v1750 = vunpack.c.l.b16 %v395
      %v1751 = vunpack.c.h.b16 %v395
      %v1752 = vunpack.c.l.b16 %v396
      %v1753 = vunpack.c.h.b16 %v396
      %v1754 = vunpack.c.l.b16 %v397
      %v1755 = vunpack.c.h.b16 %v397
      %v1756 = vunpack.c.l.b16 %v398
      %v1757 = vunpack.c.h.b16 %v398
      %v1758 = vunpack.c.l.b16 %v399
      %v1759 = vunpack.c.h.b16 %v399
      %v1760 = vunpack.c.l.b16 %v400
      %v1761 = vunpack.c.h.b16 %v400
      %v1762 = vunpack.c.l.b16 %v401
      %v1763 = vunpack.c.h.b16 %v401
      %v1764 = vunpack.c.l.b16 %v402
      %v1765 = vunpack.c.h.b16 %v402
      %v1766 = vunpack.c.l.b16 %v403
      %v1767 = vunpack.c.h.b16 %v403
      %v1768 = vunpack.c.l.b16 %v404
      %v1769 = vunpack.c.h.b16 %v404
      %v1770 = vunpack.c.l.b16 %v405
      %v1771 = vunpack.c.h.b16 %v405
      %v1772 = vunpack.c.l.b16 %v406
      %v1773 = vunpack.c.h.b16 %v406
      %v1774 = vunpack.c.l.b16 %v407
      %v1775 = vunpack.c.h.b16 %v407
      %v1776 = vunpack.c.l.b16 %v408
      %v1777 = vunpack.c.h.b16 %v408
      %v1778 = vunpack.c.l.b16 %v409
      %v1779 = vunpack.c.h.b16 %v409
      %v1780 = vunpack.c.l.b16 %v410
      %v1781 = vunpack.c.h.b16 %v410
      %v1782 = vunpack.c.l.b16 %v411
      %v1783 = vunpack.c.h.b16 %v411
      %v1784 = vunpack.c.l.b16 %v412
      %v1785 = vunpack.c.h.b16 %v412
      %v1786 = vunpack.c.l.b16 %v413
      %v1787 = vunpack.c.h.b16 %v413
      %v1788 = vunpack.c.l.b16 %v414
      %v1789 = vunpack.c.h.b16 %v414
      %v1790 = vunpack.c.l.b16 %v415
      %v1791 = vunpack.c.h.b16 %v415
      %v1792 = vunpack.c.l.b16 %v416
      %v1793 = vunpack.c.h.b16 %v416
      %v1794 = vunpack.c.l.b16 %v417
      %v1795 = vunpack.c.h.b16 %v417
      %v1796 = vunpack.c.l.b16 %v418
      %v1797 = vunpack.c.h.b16 %v418
      %v1798 = vunpack.c.l.b16 %v419
      %v1799 = vunpack.c.h.b16 %v419
      %v1800 = vunpack.c.l.b16 %v420
      %v1801 = vunpack.c.h.b16 %v420
      %v1802 = vunpack.c.l.b16 %v421
      %v1803 = vunpack.c.h.b16 %v421
      %v1804 = vunpack.c.l.b16 %v422
      %v1805 = vunpack.c.h.b16 %v422
      %v1806 = vunpack.c.l.b16 %v423
      %v1807 = vunpack.c.h.b16 %v423
      %v1808 = vunpack.c.l.b16 %v424
      %v1809 = vunpack.c.h.b16 %v424
      %v1810 = vunpack.c.l.b16 %v425
      %v1811 = vunpack.c.h.b16 %v425
      %v1812 = vunpack.c.l.b16 %v426
      %v1813 = vunpack.c.h.b16 %v426
      %v1814 = vunpack.c.l.b16 %v427
      %v1815 = vunpack.c.h.b16 %v427
      %v1816 = vunpack.c.l.b16 %v428
      %v1817 = vunpack.c.h.b16 %v428
      %v1818 = vunpack.c.l.b16 %v429
      %v1819 = vunpack.c.h.b16 %v429
      %v1820 = vunpack.c.l.b16 %v430
      %v1821 = vunpack.c.h.b16 %v430
      %v1822 = vunpack.c.l.b16 %v431
      %v1823 = vunpack.c.h.b16 %v431
      %v1824 = vunpack.c.l.b16 %v432
      %v1825 = vunpack.c.h.b16 %v432
      %v1826 = vunpack.c.l.b16 %v433
      %v1827 = vunpack.c.h.b16 %v433
      %v1828 = vunpack.c.l.b16 %v434
      %v1829 = vunpack.c.h.b16 %v434
      %v1830 = vunpack.c.l.b16 %v435
      %v1831 = vunpack.c.h.b16 %v435
      %v1832 = vunpack.c.l.b16 %v436
      %v1833 = vunpack.c.h.b16 %v436
      %v1834 = vunpack.c.l.b16 %v437
      %v1835 = vunpack.c.h.b16 %v437
      %v1836 = vunpack.c.l.b16 %v438
      %v1837 = vunpack.c.h.b16 %v438
      %v1838 = vunpack.c.l.b16 %v439
      %v1839 = vunpack.c.h.b16 %v439
      %v1840 = vunpack.c.l.b16 %v440
      %v1841 = vunpack.c.h.b16 %v440
      %v1842 = vunpack.c.l.b16 %v441
      %v1843 = vunpack.c.h.b16 %v441
      %v1844 = vunpack.c.l.b16 %v442
      %v1845 = vunpack.c.h.b16 %v442
      %v1846 = vunpack.c.l.b16 %v443
      %v1847 = vunpack.c.h.b16 %v443
      %v1848 = vunpack.c.l.b16 %v444
      %v1849 = vunpack.c.h.b16 %v444
      %v1850 = vunpack.c.l.b16 %v445
      %v1851 = vunpack.c.h.b16 %v445
      %v1852 = vunpack.c.l.b16 %v446
      %v1853 = vunpack.c.h.b16 %v446
      %v1854 = vunpack.c.l.b16 %v447
      %v1855 = vunpack.c.h.b16 %v447
      %v1856 = vunpack.c.l.b16 %v448
      %v1857 = vunpack.c.h.b16 %v448
      %v1858 = vunpack.c.l.b16 %v449
      %v1859 = vunpack.c.h.b16 %v449
      %v1860 = vunpack.c.l.b16 %v450
      %v1861 = vunpack.c.h.b16 %v450
      %v1862 = vunpack.c.l.b16 %v451
      %v1863 = vunpack.c.h.b16 %v451
      %v1864 = vunpack.c.l.b16 %v452
      %v1865 = vunpack.c.h.b16 %v452
      %v1866 = vunpack.c.l.b16 %v453
      %v1867 = vunpack.c.h.b16 %v453
      %v1868 = vunpack.c.l.b16 %v454
      %v1869 = vunpack.c.h.b16 %v454
      %v1870 = vunpack.c.l.b16 %v455
      %v1871 = vunpack.c.h.b16 %v455
      %v1872 = vunpack.c.l.b16 %v456
      %v1873 = vunpack.c.h.b16 %v456
      %v1874 = vunpack.c.l.b16 %v457
      %v1875 = vunpack.c.h.b16 %v457
      %v1876 = vunpack.c.l.b16 %v458
      %v1877 = vunpack.c.h.b16 %v458
      %v1878 = vunpack.c.l.b16 %v459
      %v1879 = vunpack.c.h.b16 %v459
      %v1880 = vunpack.c.l.b16 %v460
      %v1881 = vunpack.c.h.b16 %v460
      %v1882 = vunpack.c.l.b16 %v461
      %v1883 = vunpack.c.h.b16 %v461
      %v1884 = vunpack.c.l.b16 %v462
      %v1885 = vunpack.c.h.b16 %v462
      %v1886 = vunpack.c.l.b16 %v463
      %v1887 = vunpack.c.h.b16 %v463
      %v1888 = vunpack.c.l.b16 %v464
      %v1889 = vunpack.c.h.b16 %v464
      %v1890 = vunpack.c.l.b16 %v465
      %v1891 = vunpack.c.h.b16 %v465
      %v1892 = vunpack.c.l.b16 %v466
      %v1893 = vunpack.c.h.b16 %v466
      %v1894 = vunpack.c.l.b16 %v467
      %v1895 = vunpack.c.h.b16 %v467
      %v1896 = vunpack.c.l.b16 %v468
      %v1897 = vunpack.c.h.b16 %v468
      %v1898 = vunpack.c.l.b16 %v469
      %v1899 = vunpack.c.h.b16 %v469
      %v1900 = vunpack.c.l.b16 %v470
      %v1901 = vunpack.c.h.b16 %v470
      %v1902 = vunpack.c.l.b16 %v471
      %v1903 = vunpack.c.h.b16 %v471
      %v1904 = vunpack.c.l.b16 %v472
      %v1905 = vunpack.c.h.b16 %v472
      %v1906 = vunpack.c.l.b16 %v473
      %v1907 = vunpack.c.h.b16 %v473
      %v1908 = vunpack.c.l.b16 %v474
      %v1909 = vunpack.c.h.b16 %v474
      %v1910 = vunpack.c.l.b16 %v475
      %v1911 = vunpack.c.h.b16 %v475
      %v1912 = vunpack.c.l.b16 %v476
      %v1913 = vunpack.c.h.b16 %v476
      %v1914 = vunpack.c.l.b16 %v477
      %v1915 = vunpack.c.h.b16 %v477
      %v1916 = vunpack.c.l.b16 %v478
      %v1917 = vunpack.c.h.b16 %v478
      %v1918 = vunpack.c.l.b16 %v479
      %v1919 = vunpack.c.h.b16 %v479
      %v1920 = vunpack.c.l.b16 %v480
      %v1921 = vunpack.c.h.b16 %v480
      %v1922 = vunpack.c.l.b16 %v481
      %v1923 = vunpack.c.h.b16 %v481
      %v1924 = vunpack.c.l.b16 %v482
      %v1925 = vunpack.c.h.b16 %v482
      %v1926 = vunpack.c.l.b16 %v483
      %v1927 = vunpack.c.h.b16 %v483
      %v1928 = vunpack.c.l.b16 %v484
      %v1929 = vunpack.c.h.b16 %v484
      %v1930 = vunpack.c.l.b16 %v485
      %v1931 = vunpack.c.h.b16 %v485
      %v1932 = vunpack.c.l.b16 %v486
      %v1933 = vunpack.c.h.b16 %v486
      %v1934 = vunpack.c.l.b16 %v487
      %v1935 = vunpack.c.h.b16 %v487
      %v1936 = vunpack.c.l.b16 %v488
      %v1937 = vunpack.c.h.b16 %v488
      %v1938 = vunpack.c.l.b16 %v489
      %v1939 = vunpack.c.h.b16 %v489
      %v1940 = vunpack.c.l.b16 %v490
      %v1941 = vunpack.c.h.b16 %v490
      %v1942 = vunpack.c.l.b16 %v491
      %v1943 = vunpack.c.h.b16 %v491
      %v1944 = vunpack.c.l.b16 %v492
      %v1945 = vunpack.c.h.b16 %v492
      %v1946 = vunpack.c.l.b16 %v493
      %v1947 = vunpack.c.h.b16 %v493
      %v1948 = vunpack.c.l.b16 %v494
      %v1949 = vunpack.c.h.b16 %v494
      %v1950 = vunpack.c.l.b16 %v495
      %v1951 = vunpack.c.h.b16 %v495
      %v1952 = vunpack.c.l.b16 %v496
      %v1953 = vunpack.c.h.b16 %v496
      %v1954 = vunpack.c.l.b16 %v497
      %v1955 = vunpack.c.h.b16 %v497
      %v1956 = vunpack.c.l.b16 %v498
      %v1957 = vunpack.c.h.b16 %v498
      %v1958 = vunpack.c.l.b16 %v499
      %v1959 = vunpack.c.h.b16 %v499
      %v1960 = vunpack.c.l.b16 %v500
      %v1961 = vunpack.c.h.b16 %v500
      %v1962 = vunpack.c.l.b16 %v501
      %v1963 = vunpack.c.h.b16 %v501
      %v1964 = vunpack.c.l.b16 %v502
      %v1965 = vunpack.c.h.b16 %v502
      %v1966 = vunpack.c.l.b16 %v503
      %v1967 = vunpack.c.h.b16 %v503
      %v1968 = vunpack.c.l.b16 %v504
      %v1969 = vunpack.c.h.b16 %v504
      %v1970 = vunpack.c.l.b16 %v505
      %v1971 = vunpack.c.h.b16 %v505
      %v1972 = vunpack.c.l.b16 %v506
      %v1973 = vunpack.c.h.b16 %v506
      %v1974 = vunpack.c.l.b16 %v507
      %v1975 = vunpack.c.h.b16 %v507
      %v1976 = vunpack.c.l.b16 %v508
      %v1977 = vunpack.c.h.b16 %v508
      %v1978 = vunpack.c.l.b16 %v509
      %v1979 = vunpack.c.h.b16 %v509
      %v1980 = vunpack.c.l.b16 %v510
      %v1981 = vunpack.c.h.b16 %v510
      %v1982 = vunpack.c.l.b16 %v511
      %v1983 = vunpack.c.h.b16 %v511
      %v1984 = vunpack.c.l.b16 %v512
      %v1985 = vunpack.c.h.b16 %v512
      %v1986 = vunpack.c.l.b16 %v513
      %v1987 = vunpack.c.h.b16 %v513
      %v1988 = vunpack.c.l.b16 %v514
      %v1989 = vunpack.c.h.b16 %v514
      %v1990 = vunpack.c.l.b16 %v515
      %v1991 = vunpack.c.h.b16 %v515
      %v1992 = vunpack.c.l.b16 %v516
      %v1993 = vunpack.c.h.b16 %v516
      %v1994 = vunpack.c.l.b16 %v517
      %v1995 = vunpack.c.h.b16 %v517
      %v1996 = vunpack.c.l.b16 %v518
      %v1997 = vunpack.c.h.b16 %v518
      %v1998 = vunpack.c.l.b16 %v519
      %v1999 = vunpack.c.h.b16 %v519
      %v2000 = vunpack.c.l.b16 %v520
      %v2001 = vunpack.c.h.b16 %v520
      %v2002 = vunpack.c.l.b16 %v521
      %v2003 = vunpack.c.h.b16 %v521
      %v2004 = vunpack.c.l.b16 %v522
      %v2005 = vunpack.c.h.b16 %v522
      %v2006 = vunpack.c.l.b16 %v523
      %v2007 = vunpack.c.h.b16 %v523
      %v2008 = vunpack.c.l.b16 %v524
      %v2009 = vunpack.c.h.b16 %v524
      %v2010 = vunpack.c.l.b16 %v525
      %v2011 = vunpack.c.h.b16 %v525
      %v2012 = vunpack.c.l.b16 %v526
      %v2013 = vunpack.c.h.b16 %v526
      %v2014 = vunpack.c.l.b16 %v527
      %v2015 = vunpack.c.h.b16 %v527
      %v2016 = vunpack.c.l.b16 %v528
      %v2017 = vunpack.c.h.b16 %v528
      %v2018 = vunpack.c.l.b16 %v529
      %v2019 = vunpack.c.h.b16 %v529
      %v2020 = vunpack.c.l.b16 %v530
      %v2021 = vunpack.c.h.b16 %v530
      %v2022 = vunpack.c.l.b16 %v531
      %v2023 = vunpack.c.h.b16 %v531
      %v2024 = vunpack.c.l.b16 %v532
      %v2025 = vunpack.c.h.b16 %v532
      %v2026 = vunpack.c.l.b16 %v533
      %v2027 = vunpack.c.h.b16 %v533
      %v2028 = vunpack.c.l.b16 %v534
      %v2029 = vunpack.c.h.b16 %v534
      %v2030 = vunpack.c.l.b16 %v535
      %v2031 = vunpack.c.h.b16 %v535
      %v2032 = vunpack.c.l.b16 %v536
      %v2033 = vunpack.c.h.b16 %v536
      %v2034 = vunpack.c.l.b16 %v537
      %v2035 = vunpack.c.h.b16 %v537
      %v2036 = vunpack.c.l.b16 %v538
      %v2037 = vunpack.c.h.b16 %v538
      %v2038 = vunpack.c.l.b16 %v539
      %v2039 = vunpack.c.h.b16 %v539
      %v2040 = vunpack.c.l.b16 %v540
      %v2041 = vunpack.c.h.b16 %v540
      %v2042 = vunpack.c.l.b16 %v541
      %v2043 = vunpack.c.h.b16 %v541
      %v2044 = vunpack.c.l.b16 %v542
      %v2045 = vunpack.c.h.b16 %v542
      %v2046 = vunpack.c.l.b16 %v543
      %v2047 = vunpack.c.h.b16 %v543
      %v2048 = vunpack.c.l.b16 %v544
      %v2049 = vunpack.c.h.b16 %v544
      %v2050 = vunpack.c.l.b16 %v545
      %v2051 = vunpack.c.h.b16 %v545
      %v2052 = vunpack.c.l.b16 %v546
      %v2053 = vunpack.c.h.b16 %v546
      %v2054 = vunpack.c.l.b16 %v547
      %v2055 = vunpack.c.h.b16 %v547
      %v2056 = vunpack.c.l.b16 %v548
      %v2057 = vunpack.c.h.b16 %v548
      %v2058 = vunpack.c.l.b16 %v549
      %v2059 = vunpack.c.h.b16 %v549
      %v2060 = vunpack.c.l.b16 %v550
      %v2061 = vunpack.c.h.b16 %v550
      %v2062 = vunpack.c.l.b16 %v551
      %v2063 = vunpack.c.h.b16 %v551
      %v2064 = vunpack.c.l.b16 %v552
      %v2065 = vunpack.c.h.b16 %v552
      %v2066 = vunpack.c.l.b16 %v553
      %v2067 = vunpack.c.h.b16 %v553
      %v2068 = vunpack.c.l.b16 %v554
      %v2069 = vunpack.c.h.b16 %v554
      %v2070 = vunpack.c.l.b16 %v555
      %v2071 = vunpack.c.h.b16 %v555
      %v2072 = vunpack.c.l.b16 %v556
      %v2073 = vunpack.c.h.b16 %v556
      %v2074 = vunpack.c.l.b16 %v557
      %v2075 = vunpack.c.h.b16 %v557
      %v2076 = vunpack.c.l.b16 %v558
      %v2077 = vunpack.c.h.b16 %v558
      %v2078 = vunpack.c.l.b16 %v559
      %v2079 = vunpack.c.h.b16 %v559
      %v2080 = vunpack.c.l.b16 %v560
      %v2081 = vunpack.c.h.b16 %v560
      %v2082 = vunpack.c.l.b16 %v561
      %v2083 = vunpack.c.h.b16 %v561
      %v2084 = vunpack.c.l.b16 %v562
      %v2085 = vunpack.c.h.b16 %v562
      %v2086 = vunpack.c.l.b16 %v563
      %v2087 = vunpack.c.h.b16 %v563
      %v2088 = vunpack.c.l.b16 %v564
      %v2089 = vunpack.c.h.b16 %v564
      %v2090 = vunpack.c.l.b16 %v565
      %v2091 = vunpack.c.h.b16 %v565
      %v2092 = vunpack.c.l.b16 %v566
      %v2093 = vunpack.c.h.b16 %v566
      %v2094 = vunpack.c.l.b16 %v567
      %v2095 = vunpack.c.h.b16 %v567
      %v2096 = vunpack.c.l.b16 %v568
      %v2097 = vunpack.c.h.b16 %v568
      %v2098 = vunpack.c.l.b16 %v569
      %v2099 = vunpack.c.h.b16 %v569
      %v2100 = vunpack.c.l.b16 %v570
      %v2101 = vunpack.c.h.b16 %v570
      %v2102 = vunpack.c.l.b16 %v571
      %v2103 = vunpack.c.h.b16 %v571
      %v2104 = vunpack.c.l.b16 %v572
      %v2105 = vunpack.c.h.b16 %v572
      %v2106 = vunpack.c.l.b16 %v573
      %v2107 = vunpack.c.h.b16 %v573
      %v2108 = vunpack.c.l.b16 %v574
      %v2109 = vunpack.c.h.b16 %v574
      %v2110 = vunpack.c.l.b16 %v575
      %v2111 = vunpack.c.h.b16 %v575
      %v2112 = vunpack.c.l.b16 %v576
      %v2113 = vunpack.c.h.b16 %v576
      %v2114 = vunpack.c.l.b16 %v577
      %v2115 = vunpack.c.h.b16 %v577
      %v2116 = vunpack.c.l.b16 %v578
      %v2117 = vunpack.c.h.b16 %v578
      %v2118 = vunpack.c.l.b16 %v579
      %v2119 = vunpack.c.h.b16 %v579
      %v2120 = vunpack.c.l.b16 %v580
      %v2121 = vunpack.c.h.b16 %v580
      %v2122 = vunpack.c.l.b16 %v581
      %v2123 = vunpack.c.h.b16 %v581
      %v2124 = vunpack.c.l.b16 %v582
      %v2125 = vunpack.c.h.b16 %v582
      %v2126 = vunpack.c.l.b16 %v583
      %v2127 = vunpack.c.h.b16 %v583
      %v2128 = vunpack.c.l.b16 %v584
      %v2129 = vunpack.c.h.b16 %v584
      %v2130 = vunpack.c.l.b16 %v585
      %v2131 = vunpack.c.h.b16 %v585
      %v2132 = vunpack.c.l.b16 %v586
      %v2133 = vunpack.c.h.b16 %v586
      %v2134 = vunpack.c.l.b16 %v587
      %v2135 = vunpack.c.h.b16 %v587
      %v2136 = vunpack.c.l.b16 %v588
      %v2137 = vunpack.c.h.b16 %v588
      %v2138 = vunpack.c.l.b16 %v589
      %v2139 = vunpack.c.h.b16 %v589
      %v2140 = vunpack.c.l.b16 %v590
      %v2141 = vunpack.c.h.b16 %v590
      %v2142 = vunpack.c.l.b16 %v591
      %v2143 = vunpack.c.h.b16 %v591
      %v2144 = vunpack.c.l.b16 %v592
      %v2145 = vunpack.c.h.b16 %v592
      %v2146 = vunpack.c.l.b16 %v593
      %v2147 = vunpack.c.h.b16 %v593
      %v2148 = vunpack.c.l.b16 %v594
      %v2149 = vunpack.c.h.b16 %v594
      %v2150 = vunpack.c.l.b16 %v595
      %v2151 = vunpack.c.h.b16 %v595
      %v2152 = vunpack.c.l.b16 %v596
      %v2153 = vunpack.c.h.b16 %v596
      %v2154 = vunpack.c.l.b16 %v597
      %v2155 = vunpack.c.h.b16 %v597
      %v2156 = vunpack.c.l.b16 %v598
      %v2157 = vunpack.c.h.b16 %v598
      %v2158 = vunpack.c.l.b16 %v599
      %v2159 = vunpack.c.h.b16 %v599
      %v2160 = vunpack.c.l.b16 %v600
      %v2161 = vunpack.c.h.b16 %v600
      %v2162 = vunpack.c.l.b16 %v601
      %v2163 = vunpack.c.h.b16 %v601
      %v2164 = vunpack.c.l.b16 %v602
      %v2165 = vunpack.c.h.b16 %v602
      %v2166 = vunpack.c.l.b16 %v603
      %v2167 = vunpack.c.h.b16 %v603
      %v2168 = vunpack.c.l.b16 %v604
      %v2169 = vunpack.c.h.b16 %v604
      %v2170 = vunpack.c.l.b16 %v605
      %v2171 = vunpack.c.h.b16 %v605
      %v2172 = vunpack.c.l.b16 %v606
      %v2173 = vunpack.c.h.b16 %v606
      %v2174 = vunpack.c.l.b16 %v607
      %v2175 = vunpack.c.h.b16 %v607
      %v2176 = vunpack.c.l.b16 %v608
      %v2177 = vunpack.c.h.b16 %v608
      %v2178 = vunpack.c.l.b16 %v609
      %v2179 = vunpack.c.h.b16 %v609
      %v2180 = vunpack.c.l.b16 %v610
      %v2181 = vunpack.c.h.b16 %v610
      %v2182 = vunpack.c.l.b16 %v611
      %v2183 = vunpack.c.h.b16 %v611
      %v2184 = vunpack.c.l.b16 %v612
      %v2185 = vunpack.c.h.b16 %v612
      %v2186 = vunpack.c.l.b16 %v613
      %v2187 = vunpack.c.h.b16 %v613
      %v2188 = vunpack.c.l.b16 %v614
      %v2189 = vunpack.c.h.b16 %v614
      %v2190 = vunpack.c.l.b16 %v615
      %v2191 = vunpack.c.h.b16 %v615
      %v2192 = vunpack.c.l.b16 %v616
      %v2193 = vunpack.c.h.b16 %v616
      %v2194 = vunpack.c.l.b16 %v617
      %v2195 = vunpack.c.h.b16 %v617
      %v2196 = vunpack.c.l.b16 %v618
      %v2197 = vunpack.c.h.b16 %v618
      %v2198 = vunpack.c.l.b16 %v619
      %v2199 = vunpack.c.h.b16 %v619
      %v2200 = vunpack.c.l.b16 %v620
      %v2201 = vunpack.c.h.b16 %v620
      %v2202 = vunpack.c.l.b16 %v621
      %v2203 = vunpack.c.h.b16 %v621
      %v2204 = vunpack.c.l.b16 %v622
      %v2205 = vunpack.c.h.b16 %v622
      %v2206 = vunpack.c.l.b16 %v623
      %v2207 = vunpack.c.h.b16 %v623
      %v2208 = vunpack.c.l.b16 %v624
      %v2209 = vunpack.c.h.b16 %v624
      %v2210 = vunpack.c.l.b16 %v625
      %v2211 = vunpack.c.h.b16 %v625
      %v2212 = vunpack.c.l.b16 %v626
      %v2213 = vunpack.c.h.b16 %v626
      %v2214 = vunpack.c.l.b16 %v627
      %v2215 = vunpack.c.h.b16 %v627
      %v2216 = vunpack.c.l.b16 %v628
      %v2217 = vunpack.c.h.b16 %v628
      %v2218 = vunpack.c.l.b16 %v629
      %v2219 = vunpack.c.h.b16 %v629
      %v2220 = vunpack.c.l.b16 %v630
      %v2221 = vunpack.c.h.b16 %v630
      %v2222 = vunpack.c.l.b16 %v631
      %v2223 = vunpack.c.h.b16 %v631
      %v2224 = vunpack.c.l.b16 %v632
      %v2225 = vunpack.c.h.b16 %v632
      %v2226 = vunpack.c.l.b16 %v633
      %v2227 = vunpack.c.h.b16 %v633
      %v2228 = vunpack.c.l.b16 %v634
      %v2229 = vunpack.c.h.b16 %v634
      %v2230 = vunpack.c.l.b16 %v635
      %v2231 = vunpack.c.h.b16 %v635
      %v2232 = vunpack.c.l.b16 %v636
      %v2233 = vunpack.c.h.b16 %v636
      %v2234 = vunpack.c.l.b16 %v637
      %v2235 = vunpack.c.h.b16 %v637
      %v2236 = vunpack.c.l.b16 %v638
      %v2237 = vunpack.c.h.b16 %v638
      %v2238 = vunpack.c.l.b16 %v639
      %v2239 = vunpack.c.h.b16 %v639
      %v2240 = vunpack.c.l.b16 %v640
      %v2241 = vunpack.c.h.b16 %v640
      %v2242 = vunpack.c.l.b16 %v641
      %v2243 = vunpack.c.h.b16 %v641
      %v2244 = vunpack.c.l.b16 %v642
      %v2245 = vunpack.c.h.b16 %v642
      %v2246 = vunpack.c.l.b16 %v643
      %v2247 = vunpack.c.h.b16 %v643
      %v2248 = vunpack.c.l.b16 %v644
      %v2249 = vunpack.c.h.b16 %v644
      %v2250 = vunpack.c.l.b16 %v645
      %v2251 = vunpack.c.h.b16 %v645
      %v2252 = vunpack.c.l.b16 %v646
      %v2253 = vunpack.c.h.b16 %v646
      %v2254 = vunpack.c.l.b16 %v647
      %v2255 = vunpack.c.h.b16 %v647
      %v2256 = vunpack.c.l.b16 %v648
      %v2257 = vunpack.c.h.b16 %v648
      %v2258 = vunpack.c.l.b16 %v649
      %v2259 = vunpack.c.h.b16 %v649
      %v2260 = vunpack.c.l.b16 %v650
      %v2261 = vunpack.c.h.b16 %v650
      %v2262 = vunpack.c.l.b16 %v651
      %v2263 = vunpack.c.h.b16 %v651
      %v2264 = vunpack.c.l.b16 %v652
      %v2265 = vunpack.c.h.b16 %v652
      %v2266 = vunpack.c.l.b16 %v653
      %v2267 = vunpack.c.h.b16 %v653
      %v2268 = vunpack.c.l.b16 %v654
      %v2269 = vunpack.c.h.b16 %v654
      %v2270 = vunpack.c.l.b16 %v655
      %v2271 = vunpack.c.h.b16 %v655
      %v2272 = vunpack.c.l.b16 %v656
      %v2273 = vunpack.c.h.b16 %v656
      %v2274 = vunpack.c.l.b16 %v657
      %v2275 = vunpack.c.h.b16 %v657
      %v2276 = vunpack.c.l.b16 %v658
      %v2277 = vunpack.c.h.b16 %v658
      %v2278 = vunpack.c.l.b16 %v659
      %v2279 = vunpack.c.h.b16 %v659
      %v2280 = vpack.c.b16 %v1420, %v1416
      %v2281 = vpack.c.b16 %v1421, %v1417
      %v2282 = vpack.c.b16 %v1422, %v1418
      %v2283 = vpack.c.b16 %v1423, %v1419
      %v2284 = vpack.c.b16 %v1428, %v1424
      %v2285 = vpack.c.b16 %v1429, %v1425
      %v2286 = vpack.c.b16 %v1430, %v1426
      %v2287 = vpack.c.b16 %v1431, %v1427
      %v2288 = vpack.c.b16 %v1436, %v1432
      %v2289 = vpack.c.b16 %v1437, %v1433
      %v2290 = vpack.c.b16 %v1438, %v1434
      %v2291 = vpack.c.b16 %v1439, %v1435
      %v2292 = vpack.c.b16 %v1444, %v1440
      %v2293 = vpack.c.b16 %v1445, %v1441
      %v2294 = vpack.c.b16 %v1446, %v1442
      %v2295 = vpack.c.b16 %v1447, %v1443
      %v2296 = vpack.c.b16 %v1452, %v1448
      %v2297 = vpack.c.b16 %v1453, %v1449
      %v2298 = vpack.c.b16 %v1454, %v1450
      %v2299 = vpack.c.b16 %v1455, %v1451
      %v2300 = vpack.c.b16 %v1460, %v1456
      %v2301 = vpack.c.b16 %v1461, %v1457
      %v2302 = vpack.c.b16 %v1462, %v1458
      %v2303 = vpack.c.b16 %v1463, %v1459
      %v2304 = vpack.c.b16 %v1468, %v1464
      %v2305 = vpack.c.b16 %v1469, %v1465
      %v2306 = vpack.c.b16 %v1470, %v1466
      %v2307 = vpack.c.b16 %v1471, %v1467
      %v2308 = vpack.c.b16 %v1476, %v1472
      %v2309 = vpack.c.b16 %v1477, %v1473
      %v2310 = vpack.c.b16 %v1478, %v1474
      %v2311 = vpack.c.b16 %v1479, %v1475
      %v2312 = vpack.c.b16 %v1484, %v1480
      %v2313 = vpack.c.b16 %v1485, %v1481
      %v2314 = vpack.c.b16 %v1486, %v1482
      %v2315 = vpack.c.b16 %v1487, %v1483
      %v2316 = vpack.c.b16 %v1492, %v1488
      %v2317 = vpack.c.b16 %v1493, %v1489
      %v2318 = vpack.c.b16 %v1494, %v1490
      %v2319 = vpack.c.b16 %v1495, %v1491
      %v2320 = vpack.c.b16 %v1500, %v1496
      %v2321 = vpack.c.b16 %v1501, %v1497
      %v2322 = vpack.c.b16 %v1502, %v1498
      %v2323 = vpack.c.b16 %v1503, %v1499
      %v2324 = vpack.c.b16 %v1508, %v1504
      %v2325 = vpack.c.b16 %v1509, %v1505
      %v2326 = vpack.c.b16 %v1510, %v1506
      %v2327 = vpack.c.b16 %v1511, %v1507
      %v2328 = vpack.c.b16 %v1516, %v1512
      %v2329 = vpack.c.b16 %v1517, %v1513
      %v2330 = vpack.c.b16 %v1518, %v1514
      %v2331 = vpack.c.b16 %v1519, %v1515
      %v2332 = vpack.c.b16 %v1524, %v1520
      %v2333 = vpack.c.b16 %v1525, %v1521
      %v2334 = vpack.c.b16 %v1526, %v1522
      %v2335 = vpack.c.b16 %v1527, %v1523
      %v2336 = vpack.c.b16 %v1532, %v1528
      %v2337 = vpack.c.b16 %v1533, %v1529
      %v2338 = vpack.c.b16 %v1534, %v1530
      %v2339 = vpack.c.b16 %v1535, %v1531
      %v2340 = vpack.c.b16 %v1540, %v1536
      %v2341 = vpack.c.b16 %v1541, %v1537
      %v2342 = vpack.c.b16 %v1542, %v1538
      %v2343 = vpack.c.b16 %v1543, %v1539
      %v2344 = vpack.c.b16 %v1548, %v1544
      %v2345 = vpack.c.b16 %v1549, %v1545
      %v2346 = vpack.c.b16 %v1550, %v1546
      %v2347 = vpack.c.b16 %v1551, %v1547
      %v2348 = vpack.c.b16 %v1556, %v1552
      %v2349 = vpack.c.b16 %v1557, %v1553
      %v2350 = vpack.c.b16 %v1558, %v1554
      %v2351 = vpack.c.b16 %v1559, %v1555
      %v2352 = vpack.c.b16 %v1564, %v1560
      %v2353 = vpack.c.b16 %v1565, %v1561
      %v2354 = vpack.c.b16 %v1566, %v1562
      %v2355 = vpack.c.b16 %v1567, %v1563
      %v2356 = vpack.c.b16 %v1572, %v1568
      %v2357 = vpack.c.b16 %v1573, %v1569
      %v2358 = vpack.c.b16 %v1574, %v1570
      %v2359 = vpack.c.b16 %v1575, %v1571
      %v2360 = vpack.c.b16 %v1580, %v1576
      %v2361 = vpack.c.b16 %v1581, %v1577
      %v2362 = vpack.c.b16 %v1582, %v1578
      %v2363 = vpack.c.b16 %v1583, %v1579
      %v2364 = vpack.c.b16 %v1588, %v1584
      %v2365 = vpack.c.b16 %v1589, %v1585
      %v2366 = vpack.c.b16 %v1590, %v1586
      %v2367 = vpack.c.b16 %v1591, %v1587
      %v2368 = vpack.c.b16 %v1596, %v1592
      %v2369 = vpack.c.b16 %v1597, %v1593
      %v2370 = vpack.c.b16 %v1598, %v1594
      %v2371 = vpack.c.b16 %v1599, %v1595
      %v2372 = vpack.c.b16 %v1604, %v1600
      %v2373 = vpack.c.b16 %v1605, %v1601
      %v2374 = vpack.c.b16 %v1606, %v1602
      %v2375 = vpack.c.b16 %v1607, %v1603
      %v2376 = vpack.c.b16 %v1612, %v1608
      %v2377 = vpack.c.b16 %v1613, %v1609
      %v2378 = vpack.c.b16 %v1614, %v1610
      %v2379 = vpack.c.b16 %v1615, %v1611
      %v2380 = vpack.c.b16 %v1620, %v1616
      %v2381 = vpack.c.b16 %v1621, %v1617
      %v2382 = vpack.c.b16 %v1622, %v1618
      %v2383 = vpack.c.b16 %v1623, %v1619
      %v2384 = vpack.c.b16 %v1628, %v1624
      %v2385 = vpack.c.b16 %v1629, %v1625
      %v2386 = vpack.c.b16 %v1630, %v1626
      %v2387 = vpack.c.b16 %v1631, %v1627
      %v2388 = vpack.c.b16 %v1636, %v1632
      %v2389 = vpack.c.b16 %v1637, %v1633
      %v2390 = vpack.c.b16 %v1638, %v1634
      %v2391 = vpack.c.b16 %v1639, %v1635
      %v2392 = vpack.c.b16 %v1644, %v1640
      %v2393 = vpack.c.b16 %v1645, %v1641
      %v2394 = vpack.c.b16 %v1646, %v1642
      %v2395 = vpack.c.b16 %v1647, %v1643
      %v2396 = vpack.c.b16 %v1652, %v1648
      %v2397 = vpack.c.b16 %v1653, %v1649
      %v2398 = vpack.c.b16 %v1654, %v1650
      %v2399 = vpack.c.b16 %v1655, %v1651
      %v2400 = vpack.c.b16 %v1660, %v1656
      %v2401 = vpack.c.b16 %v1661, %v1657
      %v2402 = vpack.c.b16 %v1662, %v1658
      %v2403 = vpack.c.b16 %v1663, %v1659
      %v2404 = vpack.c.b16 %v1668, %v1664
      %v2405 = vpack.c.b16 %v1669, %v1665
      %v2406 = vpack.c.b16 %v1670, %v1666
      %v2407 = vpack.c.b16 %v1671, %v1667
      %v2408 = vpack.c.b16 %v1676, %v1672
      %v2409 = vpack.c.b16 %v1677, %v1673
      %v2410 = vpack.c.b16 %v1678, %v1674
      %v2411 = vpack.c.b16 %v1679, %v1675
      %v2412 = vpack.c.b16 %v1684, %v1680
      %v2413 = vpack.c.b16 %v1685, %v1681
      %v2414 = vpack.c.b16 %v1686, %v1682
      %v2415 = vpack.c.b16 %v1687, %v1683
      %v2416 = vpack.c.b16 %v1692, %v1688
      %v2417 = vpack.c.b16 %v1693, %v1689
      %v2418 = vpack.c.b16 %v1694, %v1690
      %v2419 = vpack.c.b16 %v1695, %v1691
      %v2420 = vpack.c.b16 %v1700, %v1696
      %v2421 = vpack.c.b16 %v1701, %v1697
      %v2422 = vpack.c.b16 %v1702, %v1698
      %v2423 = vpack.c.b16 %v1703, %v1699
      %v2424 = vpack.c.b16 %v1708, %v1704
      %v2425 = vpack.c.b16 %v1709, %v1705
      %v2426 = vpack.c.b16 %v1710, %v1706
      %v2427 = vpack.c.b16 %v1711, %v1707
      %v2428 = vpack.c.b16 %v1716, %v1712
      %v2429 = vpack.c.b16 %v1717, %v1713
      %v2430 = vpack.c.b16 %v1718, %v1714
      %v2431 = vpack.c.b16 %v1719, %v1715
      %v2432 = vpack.c.b16 %v1724, %v1720
      %v2433 = vpack.c.b16 %v1725, %v1721
      %v2434 = vpack.c.b16 %v1726, %v1722
      %v2435 = vpack.c.b16 %v1727, %v1723
      %v2436 = vpack.c.b16 %v1732, %v1728
      %v2437 = vpack.c.b16 %v1733, %v1729
      %v2438 = vpack.c.b16 %v1734, %v1730
      %v2439 = vpack.c.b16 %v1735, %v1731
      %v2440 = vpack.c.b16 %v1740, %v1736
      %v2441 = vpack.c.b16 %v1741, %v1737
      %v2442 = vpack.c.b16 %v1742, %v1738
      %v2443 = vpack.c.b16 %v1743, %v1739
      %v2444 = vpack.c.b16 %v1748, %v1744
      %v2445 = vpack.c.b16 %v1749, %v1745
      %v2446 = vpack.c.b16 %v1750, %v1746
      %v2447 = vpack.c.b16 %v1751, %v1747
      %v2448 = vpack.c.b16 %v1756, %v1752
      %v2449 = vpack.c.b16 %v1757, %v1753
      %v2450 = vpack.c.b16 %v1758, %v1754
      %v2451 = vpack.c.b16 %v1759, %v1755
      %v2452 = vpack.c.b16 %v1764, %v1760
      %v2453 = vpack.c.b16 %v1765, %v1761
      %v2454 = vpack.c.b16 %v1766, %v1762
      %v2455 = vpack.c.b16 %v1767, %v1763
      %v2456 = vpack.c.b16 %v1772, %v1768
      %v2457 = vpack.c.b16 %v1773, %v1769
      %v2458 = vpack.c.b16 %v1774, %v1770
      %v2459 = vpack.c.b16 %v1775, %v1771
      %v2460 = vpack.c.b16 %v1780, %v1776
      %v2461 = vpack.c.b16 %v1781, %v1777
      %v2462 = vpack.c.b16 %v1782, %v1778
      %v2463 = vpack.c.b16 %v1783, %v1779
      %v2464 = vpack.c.b16 %v1788, %v1784
      %v2465 = vpack.c.b16 %v1789, %v1785
      %v2466 = vpack.c.b16 %v1790, %v1786
      %v2467 = vpack.c.b16 %v1791, %v1787
      %v2468 = vpack.c.b16 %v1796, %v1792
      %v2469 = vpack.c.b16 %v1797, %v1793
      %v2470 = vpack.c.b16 %v1798, %v1794
      %v2471 = vpack.c.b16 %v1799, %v1795
      %v2472 = vpack.c.b16 %v1804, %v1800
      %v2473 = vpack.c.b16 %v1805, %v1801
      %v2474 = vpack.c.b16 %v1806, %v1802
      %v2475 = vpack.c.b16 %v1807, %v1803
      %v2476 = vpack.c.b16 %v1812, %v1808
      %v2477 = vpack.c.b16 %v1813, %v1809
      %v2478 = vpack.c.b16 %v1814, %v1810
      %v2479 = vpack.c.b16 %v1815, %v1811
      %v2480 = vpack.c.b16 %v1820, %v1816
      %v2481 = vpack.c.b16 %v1821, %v1817
      %v2482 = vpack.c.b16 %v1822, %v1818
      %v2483 = vpack.c.b16 %v1823, %v1819
      %v2484 = vpack.c.b16 %v1828, %v1824
      %v2485 = vpack.c.b16 %v1829, %v1825
      %v2486 = vpack.c.b16 %v1830, %v1826
      %v2487 = vpack.c.b16 %v1831, %v1827
      %v2488 = vpack.c.b16 %v1836, %v1832
      %v2489 = vpack.c.b16 %v1837, %v1833
      %v2490 = vpack.c.b16 %v1838, %v1834
      %v2491 = vpack.c.b16 %v1839, %v1835
      %v2492 = vpack.c.b16 %v1844, %v1840
      %v2493 = vpack.c.b16 %v1845, %v1841
      %v2494 = vpack.c.b16 %v1846, %v1842
      %v2495 = vpack.c.b16 %v1847, %v1843
      %v2496 = vpack.c.b16 %v1852, %v1848
      %v2497 = vpack.c.b16 %v1853, %v1849
      %v2498 = vpack.c.b16 %v1854, %v1850
      %v2499 = vpack.c.b16 %v1855, %v1851
      %v2500 = vpack.c.b16 %v1860, %v1856
      %v2501 = vpack.c.b16 %v1861, %v1857
      %v2502 = vpack.c.b16 %v1862, %v1858
      %v2503 = vpack.c.b16 %v1863, %v1859
      %v2504 = vpack.c.b16 %v1868, %v1864
      %v2505 = vpack.c.b16 %v1869, %v1865
      %v2506 = vpack.c.b16 %v1870, %v1866
      %v2507 = vpack.c.b16 %v1871, %v1867
      %v2508 = vpack.c.b16 %v1876, %v1872
      %v2509 = vpack.c.b16 %v1877, %v1873
      %v2510 = vpack.c.b16 %v1878, %v1874
      %v2511 = vpack.c.b16 %v1879, %v1875
      %v2512 = vpack.c.b16 %v1884, %v1880
      %v2513 = vpack.c.b16 %v1885, %v1881
      %v2514 = vpack.c.b16 %v1886, %v1882
      %v2515 = vpack.c.b16 %v1887, %v1883
      %v2516 = vpack.c.b16 %v1892, %v1888
      %v2517 = vpack.c.b16 %v1893, %v1889
      %v2518 = vpack.c.b16 %v1894, %v1890
      %v2519 = vpack.c.b16 %v1895, %v1891
      %v2520 = vpack.c.b16 %v1900, %v1896
      %v2521 = vpack.c.b16 %v1901, %v1897
      %v2522 = vpack.c.b16 %v1902, %v1898
      %v2523 = vpack.c.b16 %v1903, %v1899
      %v2524 = vpack.c.b16 %v1908, %v1904
      %v2525 = vpack.c.b16 %v1909, %v1905
      %v2526 = vpack.c.b16 %v1910, %v1906
      %v2527 = vpack.c.b16 %v1911, %v1907
      %v2528 = vpack.c.b16 %v1916, %v1912
      %v2529 = vpack.c.b16 %v1917, %v1913
      %v2530 = vpack.c.b16 %v1918, %v1914
      %v2531 = vpack.c.b16 %v1919, %v1915
      %v2532 = vpack.c.b16 %v1924, %v1920
      %v2533 = vpack.c.b16 %v1925, %v1921
      %v2534 = vpack.c.b16 %v1926, %v1922
      %v2535 = vpack.c.b16 %v1927, %v1923
      %v2536 = vpack.c.b16 %v1932, %v1928
      %v2537 = vpack.c.b16 %v1933, %v1929
      %v2538 = vpack.c.b16 %v1934, %v1930
      %v2539 = vpack.c.b16 %v1935, %v1931
      %v2540 = vpack.c.b16 %v1940, %v1936
      %v2541 = vpack.c.b16 %v1941, %v1937
      %v2542 = vpack.c.b16 %v1942, %v1938
      %v2543 = vpack.c.b16 %v1943, %v1939
      %v2544 = vpack.c.b16 %v1948, %v1944
      %v2545 = vpack.c.b16 %v1949, %v1945
      %v2546 = vpack.c.b16 %v1950, %v1946
      %v2547 = vpack.c.b16 %v1951, %v1947
      %v2548 = vpack.c.b16 %v1956, %v1952
      %v2549 = vpack.c.b16 %v1957, %v1953
      %v2550 = vpack.c.b16 %v1958, %v1954
      %v2551 = vpack.c.b16 %v1959, %v1955
      %v2552 = vpack.c.b16 %v1964, %v1960
      %v2553 = vpack.c.b16 %v1965, %v1961
      %v2554 = vpack.c.b16 %v1966, %v1962
      %v2555 = vpack.c.b16 %v1967, %v1963
      %v2556 = vpack.c.b16 %v1972, %v1968
      %v2557 = vpack.c.b16 %v1973, %v1969
      %v2558 = vpack.c.b16 %v1974, %v1970
      %v2559 = vpack.c.b16 %v1975, %v1971
      %v2560 = vpack.c.b16 %v1980, %v1976
      %v2561 = vpack.c.b16 %v1981, %v1977
      %v2562 = vpack.c.b16 %v1982, %v1978
      %v2563 = vpack.c.b16 %v1983, %v1979
      %v2564 = vpack.c.b16 %v1988, %v1984
      %v2565 = vpack.c.b16 %v1989, %v1985
      %v2566 = vpack.c.b16 %v1990, %v1986
      %v2567 = vpack.c.b16 %v1991, %v1987
      %v2568 = vpack.c.b16 %v1996, %v1992
      %v2569 = vpack.c.b16 %v1997, %v1993
      %v2570 = vpack.c.b16 %v1998, %v1994
      %v2571 = vpack.c.b16 %v1999, %v1995
      %v2572 = vpack.c.b16 %v2004, %v2000
      %v2573 = vpack.c.b16 %v2005, %v2001
      %v2574 = vpack.c.b16 %v2006, %v2002
      %v2575 = vpack.c.b16 %v2007, %v2003
      %v2576 = vpack.c.b16 %v2012, %v2008
      %v2577 = vpack.c.b16 %v2013, %v2009
      %v2578 = vpack.c.b16 %v2014, %v2010
      %v2579 = vpack.c.b16 %v2015, %v2011
      %v2580 = vpack.c.b16 %v2020, %v2016
      %v2581 = vpack.c.b16 %v2021, %v2017
      %v2582 = vpack.c.b16 %v2022, %v2018
      %v2583 = vpack.c.b16 %v2023, %v2019
      %v2584 = vpack.c.b16 %v2028, %v2024
      %v2585 = vpack.c.b16 %v2029, %v2025
      %v2586 = vpack.c.b16 %v2030, %v2026
      %v2587 = vpack.c.b16 %v2031, %v2027
      %v2588 = vpack.c.b16 %v2036, %v2032
      %v2589 = vpack.c.b16 %v2037, %v2033
      %v2590 = vpack.c.b16 %v2038, %v2034
      %v2591 = vpack.c.b16 %v2039, %v2035
      %v2592 = vpack.c.b16 %v2044, %v2040
      %v2593 = vpack.c.b16 %v2045, %v2041
      %v2594 = vpack.c.b16 %v2046, %v2042
      %v2595 = vpack.c.b16 %v2047, %v2043
      %v2596 = vpack.c.b16 %v2052, %v2048
      %v2597 = vpack.c.b16 %v2053, %v2049
      %v2598 = vpack.c.b16 %v2054, %v2050
      %v2599 = vpack.c.b16 %v2055, %v2051
      %v2600 = vpack.c.b16 %v2060, %v2056
      %v2601 = vpack.c.b16 %v2061, %v2057
      %v2602 = vpack.c.b16 %v2062, %v2058
      %v2603 = vpack.c.b16 %v2063, %v2059
      %v2604 = vpack.c.b16 %v2068, %v2064
      %v2605 = vpack.c.b16 %v2069, %v2065
      %v2606 = vpack.c.b16 %v2070, %v2066
      %v2607 = vpack.c.b16 %v2071, %v2067
      %v2608 = vpack.c.b16 %v2076, %v2072
      %v2609 = vpack.c.b16 %v2077, %v2073
      %v2610 = vpack.c.b16 %v2078, %v2074
      %v2611 = vpack.c.b16 %v2079, %v2075
      %v2612 = vpack.c.b16 %v2084, %v2080
      %v2613 = vpack.c.b16 %v2085, %v2081
      %v2614 = vpack.c.b16 %v2086, %v2082
      %v2615 = vpack.c.b16 %v2087, %v2083
      %v2616 = vpack.c.b16 %v2092, %v2088
      %v2617 = vpack.c.b16 %v2093, %v2089
      %v2618 = vpack.c.b16 %v2094, %v2090
      %v2619 = vpack.c.b16 %v2095, %v2091
      %v2620 = vpack.c.b16 %v2100, %v2096
      %v2621 = vpack.c.b16 %v2101, %v2097
      %v2622 = vpack.c.b16 %v2102, %v2098
      %v2623 = vpack.c.b16 %v2103, %v2099
      %v2624 = vpack.c.b16 %v2108, %v2104
      %v2625 = vpack.c.b16 %v2109, %v2105
      %v2626 = vpack.c.b16 %v2110, %v2106
      %v2627 = vpack.c.b16 %v2111, %v2107
      %v2628 = vpack.c.b16 %v2116, %v2112
      %v2629 = vpack.c.b16 %v2117, %v2113
      %v2630 = vpack.c.b16 %v2118, %v2114
      %v2631 = vpack.c.b16 %v2119, %v2115
      %v2632 = vpack.c.b16 %v2124, %v2120
      %v2633 = vpack.c.b16 %v2125, %v2121
      %v2634 = vpack.c.b16 %v2126, %v2122
      %v2635 = vpack.c.b16 %v2127, %v2123
      %v2636 = vpack.c.b16 %v2132, %v2128
      %v2637 = vpack.c.b16 %v2133, %v2129
      %v2638 = vpack.c.b16 %v2134, %v2130
      %v2639 = vpack.c.b16 %v2135, %v2131
      %v2640 = vpack.c.b16 %v2140, %v2136
      %v2641 = vpack.c.b16 %v2141, %v2137
      %v2642 = vpack.c.b16 %v2142, %v2138
      %v2643 = vpack.c.b16 %v2143, %v2139
      %v2644 = vpack.c.b16 %v2148, %v2144
      %v2645 = vpack.c.b16 %v2149, %v2145
      %v2646 = vpack.c.b16 %v2150, %v2146
      %v2647 = vpack.c.b16 %v2151, %v2147
      %v2648 = vpack.c.b16 %v2156, %v2152
      %v2649 = vpack.c.b16 %v2157, %v2153
      %v2650 = vpack.c.b16 %v2158, %v2154
      %v2651 = vpack.c.b16 %v2159, %v2155
      %v2652 = vpack.c.b16 %v2164, %v2160
      %v2653 = vpack.c.b16 %v2165, %v2161
      %v2654 = vpack.c.b16 %v2166, %v2162
      %v2655 = vpack.c.b16 %v2167, %v2163
      %v2656 = vpack.c.b16 %v2172, %v2168
      %v2657 = vpack.c.b16 %v2173, %v2169
      %v2658 = vpack.c.b16 %v2174, %v2170
      %v2659 = vpack.c.b16 %v2175, %v2171
      %v2660 = vpack.c.b16 %v2180, %v2176
      %v2661 = vpack.c.b16 %v2181, %v2177
      %v2662 = vpack.c.b16 %v2182, %v2178
      %v2663 = vpack.c.b16 %v2183, %v2179
      %v2664 = vpack.c.b16 %v2188, %v2184
      %v2665 = vpack.c.b16 %v2189, %v2185
      %v2666 = vpack.c.b16 %v2190, %v2186
      %v2667 = vpack.c.b16 %v2191, %v2187
      %v2668 = vpack.c.b16 %v2196, %v2192
      %v2669 = vpack.c.b16 %v2197, %v2193
      %v2670 = vpack.c.b16 %v2198, %v2194
      %v2671 = vpack.c.b16 %v2199, %v2195
      %v2672 = vpack.c.b16 %v2204, %v2200
      %v2673 = vpack.c.b16 %v2205, %v2201
      %v2674 = vpack.c.b16 %v2206, %v2202
      %v2675 = vpack.c.b16 %v2207, %v2203
      %v2676 = vpack.c.b16 %v2212, %v2208
      %v2677 = vpack.c.b16 %v2213, %v2209
      %v2678 = vpack.c.b16 %v2214, %v2210
      %v2679 = vpack.c.b16 %v2215, %v2211
      %v2680 = vpack.c.b16 %v2220, %v2216
      %v2681 = vpack.c.b16 %v2221, %v2217
      %v2682 = vpack.c.b16 %v2222, %v2218
      %v2683 = vpack.c.b16 %v2223, %v2219
      %v2684 = vpack.c.b16 %v2228, %v2224
      %v2685 = vpack.c.b16 %v2229, %v2225
      %v2686 = vpack.c.b16 %v2230, %v2226
      %v2687 = vpack.c.b16 %v2231, %v2227
      %v2688 = vpack.c.b16 %v2236, %v2232
      %v2689 = vpack.c.b16 %v2237, %v2233
      %v2690 = vpack.c.b16 %v2238, %v2234
      %v2691 = vpack.c.b16 %v2239, %v2235
      %v2692 = vpack.c.b16 %v2244, %v2240
      %v2693 = vpack.c.b16 %v2245, %v2241
      %v2694 = vpack.c.b16 %v2246, %v2242
      %v2695 = vpack.c.b16 %v2247, %v2243
      %v2696 = vpack.c.b16 %v2252, %v2248
      %v2697 = vpack.c.b16 %v2253, %v2249
      %v2698 = vpack.c.b16 %v2254, %v2250
      %v2699 = vpack.c.b16 %v2255, %v2251
      %v2700 = vpack.c.b16 %v2260, %v2256
      %v2701 = vpack.c.b16 %v2261, %v2257
      %v2702 = vpack.c.b16 %v2262, %v2258
      %v2703 = vpack.c.b16 %v2263, %v2259
      %v2704 = vpack.c.b16 %v2268, %v2264
      %v2705 = vpack.c.b16 %v2269, %v2265
      %v2706 = vpack.c.b16 %v2270, %v2266
      %v2707 = vpack.c.b16 %v2271, %v2267
      %v2708 = vpack.c.b16 %v2276, %v2272
      %v2709 = vpack.c.b16 %v2277, %v2273
      %v2710 = vpack.c.b16 %v2278, %v2274
      %v2711 = vpack.c.b16 %v2279, %v2275
      %vm3144 = vcmask 523264
      %v3146 = vsel %vm3144, %v889, 0
      %v3149 = vsel %vm3144, %v903, 0
      %v3152 = vsel %vm3144, %v917, 0
      %v3155 = vsel %vm3144, %v931, 0
      %3157 = vmatprep.subr.bf16.mxu0 %v2309
      %3158 = vmatpush1.bf16.msra.mxu0 %v2308
      %3159 = vmatprep.subr.bf16.mxu0 %v2305
      %3160 = vmatpush1.bf16.msra.mxu0 %v2304
      %3161 = vmatprep.subr.bf16.mxu0 %v2301
      %3162 = vmatpush1.bf16.msra.mxu0 %v2300
      %3163 = vmatprep.subr.bf16.mxu0 %v2297
      %3164 = vmatpush1.bf16.msra.mxu0 %v2296
      %3165 = vmatprep.subr.bf16.mxu0 %v2293
      %3166 = vmatpush1.bf16.msra.mxu0 %v2292
      %3167 = vmatprep.subr.bf16.mxu0 %v2289
      %3168 = vmatpush1.bf16.msra.mxu0 %v2288
      %3169 = vmatprep.subr.bf16.mxu0 %v2285
      %3170 = vmatpush1.bf16.msra.mxu0 %v2284
      %3171 = vmatprep.subr.bf16.mxu0 %v2281
      %3172 = vmatpush1.bf16.msra.mxu0 %v2280
      %3173 = vmatprep.subr.bf16.mxu0 %v2341
      %3174 = vmatpush2.bf16.msra.mxu0 %v2340
      %3175 = vmatprep.subr.bf16.mxu0 %v2337
      %3176 = vmatpush2.bf16.msra.mxu0 %v2336
      %3177 = vmatprep.subr.bf16.mxu0 %v2333
      %3178 = vmatpush2.bf16.msra.mxu0 %v2332
      %3179 = vmatprep.subr.bf16.mxu0 %v2329
      %3180 = vmatpush2.bf16.msra.mxu0 %v2328
      %3181 = vmatprep.subr.bf16.mxu0 %v2325
      %3182 = vmatpush2.bf16.msra.mxu0 %v2324
      %3183 = vmatprep.subr.bf16.mxu0 %v2321
      %3184 = vmatpush2.bf16.msra.mxu0 %v2320
      %3185 = vmatprep.subr.bf16.mxu0 %v2317
      %3186 = vmatpush2.bf16.msra.mxu0 %v2316
      %3187 = vmatprep.subr.bf16.mxu0 %v2313
      %3188 = vmatpush2.bf16.msra.mxu0 %v2312
      %3189 = vmatprep.mubr.bf16.mxu0 %v877
      %3190 = vmatmul.mubr.bf16.gmra.mxu0 %v876
      %v3191 = vpop.f32.mrf.mxu0
      %v3192 = vadd.f32 %v671, %v3191
      %v3193 = vpop.f32.mrf.mxu0
      %v3194 = vadd.f32 %v671, %v3193
      %v3195 = vpop.f32.mrf.mxu0
      %v3196 = vadd.f32 %v676, %v3195
      %v3197 = vpop.f32.mrf.mxu0
      %v3198 = vadd.f32 %v676, %v3197
      %3199 = vmatprep.mubr.bf16.mxu0 %v891
      %3200 = vmatmul.mubr.bf16.gmra.mxu0 %v890
      %v3201 = vpop.f32.mrf.mxu0
      %v3202 = vadd.f32 %v681, %v3201
      %v3203 = vpop.f32.mrf.mxu0
      %v3204 = vadd.f32 %v681, %v3203
      %v3205 = vpop.f32.mrf.mxu0
      %v3206 = vadd.f32 %v686, %v3205
      %v3207 = vpop.f32.mrf.mxu0
      %v3208 = vadd.f32 %v686, %v3207
      %3209 = vmatprep.mubr.bf16.mxu0 %v905
      %3210 = vmatmul.mubr.bf16.gmra.mxu0 %v904
      %v3211 = vpop.f32.mrf.mxu0
      %v3212 = vadd.f32 %v691, %v3211
      %v3213 = vpop.f32.mrf.mxu0
      %v3214 = vadd.f32 %v691, %v3213
      %v3215 = vpop.f32.mrf.mxu0
      %v3216 = vadd.f32 %v696, %v3215
      %v3217 = vpop.f32.mrf.mxu0
      %v3218 = vadd.f32 %v696, %v3217
      %3219 = vmatprep.mubr.bf16.mxu0 %v919
      %3220 = vmatmul.mubr.bf16.gmra.mxu0 %v918
      %v3221 = vpop.f32.mrf.mxu0
      %v3222 = vadd.f32 %v701, %v3221
      %v3223 = vpop.f32.mrf.mxu0
      %v3224 = vadd.f32 %v701, %v3223
      %v3225 = vpop.f32.mrf.mxu0
      %v3226 = vadd.f32 %v706, %v3225
      %v3227 = vpop.f32.mrf.mxu0
      %v3228 = vadd.f32 %v706, %v3227
      %3229 = vdwg.mxu0
      %3230 = vmatprep.subr.bf16.mxu0 %v2373
      %3231 = vmatpush1.bf16.msra.mxu0 %v2372
      %3232 = vmatprep.subr.bf16.mxu0 %v2369
      %3233 = vmatpush1.bf16.msra.mxu0 %v2368
      %3234 = vmatprep.subr.bf16.mxu0 %v2365
      %3235 = vmatpush1.bf16.msra.mxu0 %v2364
      %3236 = vmatprep.subr.bf16.mxu0 %v2361
      %3237 = vmatpush1.bf16.msra.mxu0 %v2360
      %3238 = vmatprep.subr.bf16.mxu0 %v2357
      %3239 = vmatpush1.bf16.msra.mxu0 %v2356
      %3240 = vmatprep.subr.bf16.mxu0 %v2353
      %3241 = vmatpush1.bf16.msra.mxu0 %v2352
      %3242 = vmatprep.subr.bf16.mxu0 %v2349
      %3243 = vmatpush1.bf16.msra.mxu0 %v2348
      %3244 = vmatprep.subr.bf16.mxu0 %v2345
      %3245 = vmatpush1.bf16.msra.mxu0 %v2344
      %3246 = vmatprep.subr.bf16.mxu0 %v2405
      %3247 = vmatpush2.bf16.msra.mxu0 %v2404
      %3248 = vmatprep.subr.bf16.mxu0 %v2401
      %3249 = vmatpush2.bf16.msra.mxu0 %v2400
      %3250 = vmatprep.subr.bf16.mxu0 %v2397
      %3251 = vmatpush2.bf16.msra.mxu0 %v2396
      %3252 = vmatprep.subr.bf16.mxu0 %v2393
      %3253 = vmatpush2.bf16.msra.mxu0 %v2392
      %3254 = vmatprep.subr.bf16.mxu0 %v2389
      %3255 = vmatpush2.bf16.msra.mxu0 %v2388
      %3256 = vmatprep.subr.bf16.mxu0 %v2385
      %3257 = vmatpush2.bf16.msra.mxu0 %v2384
      %3258 = vmatprep.subr.bf16.mxu0 %v2381
      %3259 = vmatpush2.bf16.msra.mxu0 %v2380
      %3260 = vmatprep.subr.bf16.mxu0 %v2377
      %3261 = vmatpush2.bf16.msra.mxu0 %v2376
      %3262 = vmatprep.mubr.bf16.mxu0 %v879
      %3263 = vmatmul.mubr.bf16.gmra.mxu0 %v878
      %v3264 = vpop.f32.mrf.mxu0
      %v3265 = vadd.f32 %v3192, %v3264
      %v3266 = vpop.f32.mrf.mxu0
      %v3267 = vadd.f32 %v3194, %v3266
      %v3268 = vpop.f32.mrf.mxu0
      %v3269 = vadd.f32 %v3196, %v3268
      %v3270 = vpop.f32.mrf.mxu0
      %v3271 = vadd.f32 %v3198, %v3270
      %3272 = vmatprep.mubr.bf16.mxu0 %v893
      %3273 = vmatmul.mubr.bf16.gmra.mxu0 %v892
      %v3274 = vpop.f32.mrf.mxu0
      %v3275 = vadd.f32 %v3202, %v3274
      %v3276 = vpop.f32.mrf.mxu0
      %v3277 = vadd.f32 %v3204, %v3276
      %v3278 = vpop.f32.mrf.mxu0
      %v3279 = vadd.f32 %v3206, %v3278
      %v3280 = vpop.f32.mrf.mxu0
      %v3281 = vadd.f32 %v3208, %v3280
      %3282 = vmatprep.mubr.bf16.mxu0 %v907
      %3283 = vmatmul.mubr.bf16.gmra.mxu0 %v906
      %v3284 = vpop.f32.mrf.mxu0
      %v3285 = vadd.f32 %v3212, %v3284
      %v3286 = vpop.f32.mrf.mxu0
      %v3287 = vadd.f32 %v3214, %v3286
      %v3288 = vpop.f32.mrf.mxu0
      %v3289 = vadd.f32 %v3216, %v3288
      %v3290 = vpop.f32.mrf.mxu0
      %v3291 = vadd.f32 %v3218, %v3290
      %3292 = vmatprep.mubr.bf16.mxu0 %v921
      %3293 = vmatmul.mubr.bf16.gmra.mxu0 %v920
      %v3294 = vpop.f32.mrf.mxu0
      %v3295 = vadd.f32 %v3222, %v3294
      %v3296 = vpop.f32.mrf.mxu0
      %v3297 = vadd.f32 %v3224, %v3296
      %v3298 = vpop.f32.mrf.mxu0
      %v3299 = vadd.f32 %v3226, %v3298
      %v3300 = vpop.f32.mrf.mxu0
      %v3301 = vadd.f32 %v3228, %v3300
      %3302 = vdwg.mxu0
      %3303 = vmatprep.subr.bf16.mxu0 %v2437
      %3304 = vmatpush1.bf16.msra.mxu0 %v2436
      %3305 = vmatprep.subr.bf16.mxu0 %v2433
      %3306 = vmatpush1.bf16.msra.mxu0 %v2432
      %3307 = vmatprep.subr.bf16.mxu0 %v2429
      %3308 = vmatpush1.bf16.msra.mxu0 %v2428
      %3309 = vmatprep.subr.bf16.mxu0 %v2425
      %3310 = vmatpush1.bf16.msra.mxu0 %v2424
      %3311 = vmatprep.subr.bf16.mxu0 %v2421
      %3312 = vmatpush1.bf16.msra.mxu0 %v2420
      %3313 = vmatprep.subr.bf16.mxu0 %v2417
      %3314 = vmatpush1.bf16.msra.mxu0 %v2416
      %3315 = vmatprep.subr.bf16.mxu0 %v2413
      %3316 = vmatpush1.bf16.msra.mxu0 %v2412
      %3317 = vmatprep.subr.bf16.mxu0 %v2409
      %3318 = vmatpush1.bf16.msra.mxu0 %v2408
      %3319 = vmatprep.subr.bf16.mxu0 %v2469
      %3320 = vmatpush2.bf16.msra.mxu0 %v2468
      %3321 = vmatprep.subr.bf16.mxu0 %v2465
      %3322 = vmatpush2.bf16.msra.mxu0 %v2464
      %3323 = vmatprep.subr.bf16.mxu0 %v2461
      %3324 = vmatpush2.bf16.msra.mxu0 %v2460
      %3325 = vmatprep.subr.bf16.mxu0 %v2457
      %3326 = vmatpush2.bf16.msra.mxu0 %v2456
      %3327 = vmatprep.subr.bf16.mxu0 %v2453
      %3328 = vmatpush2.bf16.msra.mxu0 %v2452
      %3329 = vmatprep.subr.bf16.mxu0 %v2449
      %3330 = vmatpush2.bf16.msra.mxu0 %v2448
      %3331 = vmatprep.subr.bf16.mxu0 %v2445
      %3332 = vmatpush2.bf16.msra.mxu0 %v2444
      %3333 = vmatprep.subr.bf16.mxu0 %v2441
      %3334 = vmatpush2.bf16.msra.mxu0 %v2440
      %3335 = vmatprep.mubr.bf16.mxu0 %v881
      %3336 = vmatmul.mubr.bf16.gmra.mxu0 %v880
      %v3337 = vpop.f32.mrf.mxu0
      %v3338 = vadd.f32 %v3265, %v3337
      %v3339 = vpop.f32.mrf.mxu0
      %v3340 = vadd.f32 %v3267, %v3339
      %v3341 = vpop.f32.mrf.mxu0
      %v3342 = vadd.f32 %v3269, %v3341
      %v3343 = vpop.f32.mrf.mxu0
      %v3344 = vadd.f32 %v3271, %v3343
      %3345 = vmatprep.mubr.bf16.mxu0 %v895
      %3346 = vmatmul.mubr.bf16.gmra.mxu0 %v894
      %v3347 = vpop.f32.mrf.mxu0
      %v3348 = vadd.f32 %v3275, %v3347
      %v3349 = vpop.f32.mrf.mxu0
      %v3350 = vadd.f32 %v3277, %v3349
      %v3351 = vpop.f32.mrf.mxu0
      %v3352 = vadd.f32 %v3279, %v3351
      %v3353 = vpop.f32.mrf.mxu0
      %v3354 = vadd.f32 %v3281, %v3353
      %3355 = vmatprep.mubr.bf16.mxu0 %v909
      %3356 = vmatmul.mubr.bf16.gmra.mxu0 %v908
      %v3357 = vpop.f32.mrf.mxu0
      %v3358 = vadd.f32 %v3285, %v3357
      %v3359 = vpop.f32.mrf.mxu0
      %v3360 = vadd.f32 %v3287, %v3359
      %v3361 = vpop.f32.mrf.mxu0
      %v3362 = vadd.f32 %v3289, %v3361
      %v3363 = vpop.f32.mrf.mxu0
      %v3364 = vadd.f32 %v3291, %v3363
      %3365 = vmatprep.mubr.bf16.mxu0 %v923
      %3366 = vmatmul.mubr.bf16.gmra.mxu0 %v922
      %v3367 = vpop.f32.mrf.mxu0
      %v3368 = vadd.f32 %v3295, %v3367
      %v3369 = vpop.f32.mrf.mxu0
      %v3370 = vadd.f32 %v3297, %v3369
      %v3371 = vpop.f32.mrf.mxu0
      %v3372 = vadd.f32 %v3299, %v3371
      %v3373 = vpop.f32.mrf.mxu0
      %v3374 = vadd.f32 %v3301, %v3373
      %3375 = vdwg.mxu0
      %3376 = vmatprep.subr.bf16.mxu0 %v2501
      %3377 = vmatpush1.bf16.msra.mxu0 %v2500
      %3378 = vmatprep.subr.bf16.mxu0 %v2497
      %3379 = vmatpush1.bf16.msra.mxu0 %v2496
      %3380 = vmatprep.subr.bf16.mxu0 %v2493
      %3381 = vmatpush1.bf16.msra.mxu0 %v2492
      %3382 = vmatprep.subr.bf16.mxu0 %v2489
      %3383 = vmatpush1.bf16.msra.mxu0 %v2488
      %3384 = vmatprep.subr.bf16.mxu0 %v2485
      %3385 = vmatpush1.bf16.msra.mxu0 %v2484
      %3386 = vmatprep.subr.bf16.mxu0 %v2481
      %3387 = vmatpush1.bf16.msra.mxu0 %v2480
      %3388 = vmatprep.subr.bf16.mxu0 %v2477
      %3389 = vmatpush1.bf16.msra.mxu0 %v2476
      %3390 = vmatprep.subr.bf16.mxu0 %v2473
      %3391 = vmatpush1.bf16.msra.mxu0 %v2472
      %3392 = vmatprep.subr.bf16.mxu0 %v2533
      %3393 = vmatpush2.bf16.msra.mxu0 %v2532
      %3394 = vmatprep.subr.bf16.mxu0 %v2529
      %3395 = vmatpush2.bf16.msra.mxu0 %v2528
      %3396 = vmatprep.subr.bf16.mxu0 %v2525
      %3397 = vmatpush2.bf16.msra.mxu0 %v2524
      %3398 = vmatprep.subr.bf16.mxu0 %v2521
      %3399 = vmatpush2.bf16.msra.mxu0 %v2520
      %3400 = vmatprep.subr.bf16.mxu0 %v2517
      %3401 = vmatpush2.bf16.msra.mxu0 %v2516
      %3402 = vmatprep.subr.bf16.mxu0 %v2513
      %3403 = vmatpush2.bf16.msra.mxu0 %v2512
      %3404 = vmatprep.subr.bf16.mxu0 %v2509
      %3405 = vmatpush2.bf16.msra.mxu0 %v2508
      %3406 = vmatprep.subr.bf16.mxu0 %v2505
      %3407 = vmatpush2.bf16.msra.mxu0 %v2504
      %3408 = vmatprep.mubr.bf16.mxu0 %v883
      %3409 = vmatmul.mubr.bf16.gmra.mxu0 %v882
      %v3410 = vpop.f32.mrf.mxu0
      %v3411 = vadd.f32 %v3338, %v3410
      %v3412 = vpop.f32.mrf.mxu0
      %v3413 = vadd.f32 %v3340, %v3412
      %v3414 = vpop.f32.mrf.mxu0
      %v3415 = vadd.f32 %v3342, %v3414
      %v3416 = vpop.f32.mrf.mxu0
      %v3417 = vadd.f32 %v3344, %v3416
      %3418 = vmatprep.mubr.bf16.mxu0 %v897
      %3419 = vmatmul.mubr.bf16.gmra.mxu0 %v896
      %v3420 = vpop.f32.mrf.mxu0
      %v3421 = vadd.f32 %v3348, %v3420
      %v3422 = vpop.f32.mrf.mxu0
      %v3423 = vadd.f32 %v3350, %v3422
      %v3424 = vpop.f32.mrf.mxu0
      %v3425 = vadd.f32 %v3352, %v3424
      %v3426 = vpop.f32.mrf.mxu0
      %v3427 = vadd.f32 %v3354, %v3426
      %3428 = vmatprep.mubr.bf16.mxu0 %v911
      %3429 = vmatmul.mubr.bf16.gmra.mxu0 %v910
      %v3430 = vpop.f32.mrf.mxu0
      %v3431 = vadd.f32 %v3358, %v3430
      %v3432 = vpop.f32.mrf.mxu0
      %v3433 = vadd.f32 %v3360, %v3432
      %v3434 = vpop.f32.mrf.mxu0
      %v3435 = vadd.f32 %v3362, %v3434
      %v3436 = vpop.f32.mrf.mxu0
      %v3437 = vadd.f32 %v3364, %v3436
      %3438 = vmatprep.mubr.bf16.mxu0 %v925
      %3439 = vmatmul.mubr.bf16.gmra.mxu0 %v924
      %v3440 = vpop.f32.mrf.mxu0
      %v3441 = vadd.f32 %v3368, %v3440
      %v3442 = vpop.f32.mrf.mxu0
      %v3443 = vadd.f32 %v3370, %v3442
      %v3444 = vpop.f32.mrf.mxu0
      %v3445 = vadd.f32 %v3372, %v3444
      %v3446 = vpop.f32.mrf.mxu0
      %v3447 = vadd.f32 %v3374, %v3446
      %3448 = vdwg.mxu0
      %3449 = vmatprep.subr.bf16.mxu0 %v2565
      %3450 = vmatpush1.bf16.msra.mxu0 %v2564
      %3451 = vmatprep.subr.bf16.mxu0 %v2561
      %3452 = vmatpush1.bf16.msra.mxu0 %v2560
      %3453 = vmatprep.subr.bf16.mxu0 %v2557
      %3454 = vmatpush1.bf16.msra.mxu0 %v2556
      %3455 = vmatprep.subr.bf16.mxu0 %v2553
      %3456 = vmatpush1.bf16.msra.mxu0 %v2552
      %3457 = vmatprep.subr.bf16.mxu0 %v2549
      %3458 = vmatpush1.bf16.msra.mxu0 %v2548
      %3459 = vmatprep.subr.bf16.mxu0 %v2545
      %3460 = vmatpush1.bf16.msra.mxu0 %v2544
      %3461 = vmatprep.subr.bf16.mxu0 %v2541
      %3462 = vmatpush1.bf16.msra.mxu0 %v2540
      %3463 = vmatprep.subr.bf16.mxu0 %v2537
      %3464 = vmatpush1.bf16.msra.mxu0 %v2536
      %3465 = vmatprep.subr.bf16.mxu0 %v2597
      %3466 = vmatpush2.bf16.msra.mxu0 %v2596
      %3467 = vmatprep.subr.bf16.mxu0 %v2593
      %3468 = vmatpush2.bf16.msra.mxu0 %v2592
      %3469 = vmatprep.subr.bf16.mxu0 %v2589
      %3470 = vmatpush2.bf16.msra.mxu0 %v2588
      %3471 = vmatprep.subr.bf16.mxu0 %v2585
      %3472 = vmatpush2.bf16.msra.mxu0 %v2584
      %3473 = vmatprep.subr.bf16.mxu0 %v2581
      %3474 = vmatpush2.bf16.msra.mxu0 %v2580
      %3475 = vmatprep.subr.bf16.mxu0 %v2577
      %3476 = vmatpush2.bf16.msra.mxu0 %v2576
      %3477 = vmatprep.subr.bf16.mxu0 %v2573
      %3478 = vmatpush2.bf16.msra.mxu0 %v2572
      %3479 = vmatprep.subr.bf16.mxu0 %v2569
      %3480 = vmatpush2.bf16.msra.mxu0 %v2568
      %3481 = vmatprep.mubr.bf16.mxu0 %v885
      %3482 = vmatmul.mubr.bf16.gmra.mxu0 %v884
      %v3483 = vpop.f32.mrf.mxu0
      %v3484 = vadd.f32 %v3411, %v3483
      %v3485 = vpop.f32.mrf.mxu0
      %v3486 = vadd.f32 %v3413, %v3485
      %v3487 = vpop.f32.mrf.mxu0
      %v3488 = vadd.f32 %v3415, %v3487
      %v3489 = vpop.f32.mrf.mxu0
      %v3490 = vadd.f32 %v3417, %v3489
      %3491 = vmatprep.mubr.bf16.mxu0 %v899
      %3492 = vmatmul.mubr.bf16.gmra.mxu0 %v898
      %v3493 = vpop.f32.mrf.mxu0
      %v3494 = vadd.f32 %v3421, %v3493
      %v3495 = vpop.f32.mrf.mxu0
      %v3496 = vadd.f32 %v3423, %v3495
      %v3497 = vpop.f32.mrf.mxu0
      %v3498 = vadd.f32 %v3425, %v3497
      %v3499 = vpop.f32.mrf.mxu0
      %v3500 = vadd.f32 %v3427, %v3499
      %3501 = vmatprep.mubr.bf16.mxu0 %v913
      %3502 = vmatmul.mubr.bf16.gmra.mxu0 %v912
      %v3503 = vpop.f32.mrf.mxu0
      %v3504 = vadd.f32 %v3431, %v3503
      %v3505 = vpop.f32.mrf.mxu0
      %v3506 = vadd.f32 %v3433, %v3505
      %v3507 = vpop.f32.mrf.mxu0
      %v3508 = vadd.f32 %v3435, %v3507
      %v3509 = vpop.f32.mrf.mxu0
      %v3510 = vadd.f32 %v3437, %v3509
      %3511 = vmatprep.mubr.bf16.mxu0 %v927
      %3512 = vmatmul.mubr.bf16.gmra.mxu0 %v926
      %v3513 = vpop.f32.mrf.mxu0
      %v3514 = vadd.f32 %v3441, %v3513
      %v3515 = vpop.f32.mrf.mxu0
      %v3516 = vadd.f32 %v3443, %v3515
      %v3517 = vpop.f32.mrf.mxu0
      %v3518 = vadd.f32 %v3445, %v3517
      %v3519 = vpop.f32.mrf.mxu0
      %v3520 = vadd.f32 %v3447, %v3519
      %3521 = vdwg.mxu0
      %3522 = vmatprep.subr.bf16.mxu0 %v2629
      %3523 = vmatpush1.bf16.msra.mxu0 %v2628
      %3524 = vmatprep.subr.bf16.mxu0 %v2625
      %3525 = vmatpush1.bf16.msra.mxu0 %v2624
      %3526 = vmatprep.subr.bf16.mxu0 %v2621
      %3527 = vmatpush1.bf16.msra.mxu0 %v2620
      %3528 = vmatprep.subr.bf16.mxu0 %v2617
      %3529 = vmatpush1.bf16.msra.mxu0 %v2616
      %3530 = vmatprep.subr.bf16.mxu0 %v2613
      %3531 = vmatpush1.bf16.msra.mxu0 %v2612
      %3532 = vmatprep.subr.bf16.mxu0 %v2609
      %3533 = vmatpush1.bf16.msra.mxu0 %v2608
      %3534 = vmatprep.subr.bf16.mxu0 %v2605
      %3535 = vmatpush1.bf16.msra.mxu0 %v2604
      %3536 = vmatprep.subr.bf16.mxu0 %v2601
      %3537 = vmatpush1.bf16.msra.mxu0 %v2600
      %3538 = vmatprep.subr.bf16.mxu0 %v2661
      %3539 = vmatpush2.bf16.msra.mxu0 %v2660
      %3540 = vmatprep.subr.bf16.mxu0 %v2657
      %3541 = vmatpush2.bf16.msra.mxu0 %v2656
      %3542 = vmatprep.subr.bf16.mxu0 %v2653
      %3543 = vmatpush2.bf16.msra.mxu0 %v2652
      %3544 = vmatprep.subr.bf16.mxu0 %v2649
      %3545 = vmatpush2.bf16.msra.mxu0 %v2648
      %3546 = vmatprep.subr.bf16.mxu0 %v2645
      %3547 = vmatpush2.bf16.msra.mxu0 %v2644
      %3548 = vmatprep.subr.bf16.mxu0 %v2641
      %3549 = vmatpush2.bf16.msra.mxu0 %v2640
      %3550 = vmatprep.subr.bf16.mxu0 %v2637
      %3551 = vmatpush2.bf16.msra.mxu0 %v2636
      %3552 = vmatprep.subr.bf16.mxu0 %v2633
      %3553 = vmatpush2.bf16.msra.mxu0 %v2632
      %3554 = vmatprep.mubr.bf16.mxu0 %v887
      %3555 = vmatmul.mubr.bf16.gmra.mxu0 %v886
      %v3556 = vpop.f32.mrf.mxu0
      %v3557 = vadd.f32 %v3484, %v3556
      %v3558 = vpop.f32.mrf.mxu0
      %v3559 = vadd.f32 %v3486, %v3558
      %v3560 = vpop.f32.mrf.mxu0
      %v3561 = vadd.f32 %v3488, %v3560
      %v3562 = vpop.f32.mrf.mxu0
      %v3563 = vadd.f32 %v3490, %v3562
      %3564 = vmatprep.mubr.bf16.mxu0 %v901
      %3565 = vmatmul.mubr.bf16.gmra.mxu0 %v900
      %v3566 = vpop.f32.mrf.mxu0
      %v3567 = vadd.f32 %v3494, %v3566
      %v3568 = vpop.f32.mrf.mxu0
      %v3569 = vadd.f32 %v3496, %v3568
      %v3570 = vpop.f32.mrf.mxu0
      %v3571 = vadd.f32 %v3498, %v3570
      %v3572 = vpop.f32.mrf.mxu0
      %v3573 = vadd.f32 %v3500, %v3572
      %3574 = vmatprep.mubr.bf16.mxu0 %v915
      %3575 = vmatmul.mubr.bf16.gmra.mxu0 %v914
      %v3576 = vpop.f32.mrf.mxu0
      %v3577 = vadd.f32 %v3504, %v3576
      %v3578 = vpop.f32.mrf.mxu0
      %v3579 = vadd.f32 %v3506, %v3578
      %v3580 = vpop.f32.mrf.mxu0
      %v3581 = vadd.f32 %v3508, %v3580
      %v3582 = vpop.f32.mrf.mxu0
      %v3583 = vadd.f32 %v3510, %v3582
      %3584 = vmatprep.mubr.bf16.mxu0 %v929
      %3585 = vmatmul.mubr.bf16.gmra.mxu0 %v928
      %v3586 = vpop.f32.mrf.mxu0
      %v3587 = vadd.f32 %v3514, %v3586
      %v3588 = vpop.f32.mrf.mxu0
      %v3589 = vadd.f32 %v3516, %v3588
      %v3590 = vpop.f32.mrf.mxu0
      %v3591 = vadd.f32 %v3518, %v3590
      %v3592 = vpop.f32.mrf.mxu0
      %v3593 = vadd.f32 %v3520, %v3592
      %3594 = vdwg.mxu0
      %3595 = vmatprep.subr.bf16.mxu0 %v2693
      %3596 = vmatpush1.bf16.msra.mxu0 %v2692
      %3597 = vmatprep.subr.bf16.mxu0 %v2689
      %3598 = vmatpush1.bf16.msra.mxu0 %v2688
      %3599 = vmatprep.subr.bf16.mxu0 %v2685
      %3600 = vmatpush1.bf16.msra.mxu0 %v2684
      %3601 = vmatprep.subr.bf16.mxu0 %v2681
      %3602 = vmatpush1.bf16.msra.mxu0 %v2680
      %3603 = vmatprep.subr.bf16.mxu0 %v2677
      %3604 = vmatpush1.bf16.msra.mxu0 %v2676
      %3605 = vmatprep.subr.bf16.mxu0 %v2673
      %3606 = vmatpush1.bf16.msra.mxu0 %v2672
      %3607 = vmatprep.subr.bf16.mxu0 %v2669
      %3608 = vmatpush1.bf16.msra.mxu0 %v2668
      %3609 = vmatprep.subr.bf16.mxu0 %v2665
      %3610 = vmatpush1.bf16.msra.mxu0 %v2664
      %3611 = vmatprep.subr.bf16.mxu0 0
      %3612 = vmatpush2.bf16.msra.mxu0 0
      %3613 = vmatprep.subr.bf16.mxu0 0
      %3614 = vmatpush2.bf16.msra.mxu0 0
      %3615 = vmatprep.subr.bf16.mxu0 0
      %3616 = vmatpush2.bf16.msra.mxu0 0
      %3617 = vmatprep.subr.bf16.mxu0 0
      %3618 = vmatpush2.bf16.msra.mxu0 0
      %3619 = vmatprep.subr.bf16.mxu0 %v2709
      %3620 = vmatpush2.bf16.msra.mxu0 %v2708
      %3621 = vmatprep.subr.bf16.mxu0 %v2705
      %3622 = vmatpush2.bf16.msra.mxu0 %v2704
      %3623 = vmatprep.subr.bf16.mxu0 %v2701
      %3624 = vmatpush2.bf16.msra.mxu0 %v2700
      %3625 = vmatprep.subr.bf16.mxu0 %v2697
      %3626 = vmatpush2.bf16.msra.mxu0 %v2696
      %3627 = vmatprep.mubr.bf16.mxu0 %v3146
      %3628 = vmatmul.mubr.bf16.gmra.mxu0 %v888
      %v3629 = vpop.f32.mrf.mxu0
      %v3630 = vadd.f32 %v3557, %v3629
      %v3631 = vpop.f32.mrf.mxu0
      %v3632 = vadd.f32 %v3559, %v3631
      %v3633 = vpop.f32.mrf.mxu0
      %v3634 = vadd.f32 %v3561, %v3633
      %v3635 = vpop.f32.mrf.mxu0
      %v3636 = vadd.f32 %v3563, %v3635
      %3637 = vmatprep.mubr.bf16.mxu0 %v3149
      %3638 = vmatmul.mubr.bf16.gmra.mxu0 %v902
      %v3639 = vpop.f32.mrf.mxu0
      %v3640 = vadd.f32 %v3567, %v3639
      %v3641 = vpop.f32.mrf.mxu0
      %v3642 = vadd.f32 %v3569, %v3641
      %v3643 = vpop.f32.mrf.mxu0
      %v3644 = vadd.f32 %v3571, %v3643
      %v3645 = vpop.f32.mrf.mxu0
      %v3646 = vadd.f32 %v3573, %v3645
      %3647 = vmatprep.mubr.bf16.mxu0 %v3152
      %3648 = vmatmul.mubr.bf16.gmra.mxu0 %v916
      %v3649 = vpop.f32.mrf.mxu0
      %v3650 = vadd.f32 %v3577, %v3649
      %v3651 = vpop.f32.mrf.mxu0
      %v3652 = vadd.f32 %v3579, %v3651
      %v3653 = vpop.f32.mrf.mxu0
      %v3654 = vadd.f32 %v3581, %v3653
      %v3655 = vpop.f32.mrf.mxu0
      %v3656 = vadd.f32 %v3583, %v3655
      %3657 = vmatprep.mubr.bf16.mxu0 %v3155
      %3658 = vmatmul.mubr.bf16.gmra.mxu0 %v930
      %v3659 = vpop.f32.mrf.mxu0
      %v3660 = vadd.f32 %v3587, %v3659
      %v3661 = vpop.f32.mrf.mxu0
      %v3662 = vadd.f32 %v3589, %v3661
      %v3663 = vpop.f32.mrf.mxu0
      %v3664 = vadd.f32 %v3591, %v3663
      %v3665 = vpop.f32.mrf.mxu0
      %v3666 = vadd.f32 %v3593, %v3665
      %3667 = vdwg.mxu0
      %3668 = vmatprep.subr.bf16.mxu0 %v2311
      %3669 = vmatpush1.bf16.msra.mxu0 %v2310
      %3670 = vmatprep.subr.bf16.mxu0 %v2307
      %3671 = vmatpush1.bf16.msra.mxu0 %v2306
      %3672 = vmatprep.subr.bf16.mxu0 %v2303
      %3673 = vmatpush1.bf16.msra.mxu0 %v2302
      %3674 = vmatprep.subr.bf16.mxu0 %v2299
      %3675 = vmatpush1.bf16.msra.mxu0 %v2298
      %3676 = vmatprep.subr.bf16.mxu0 %v2295
      %3677 = vmatpush1.bf16.msra.mxu0 %v2294
      %3678 = vmatprep.subr.bf16.mxu0 %v2291
      %3679 = vmatpush1.bf16.msra.mxu0 %v2290
      %3680 = vmatprep.subr.bf16.mxu0 %v2287
      %3681 = vmatpush1.bf16.msra.mxu0 %v2286
      %3682 = vmatprep.subr.bf16.mxu0 %v2283
      %3683 = vmatpush1.bf16.msra.mxu0 %v2282
      %3684 = vmatprep.subr.bf16.mxu0 %v2343
      %3685 = vmatpush2.bf16.msra.mxu0 %v2342
      %3686 = vmatprep.subr.bf16.mxu0 %v2339
      %3687 = vmatpush2.bf16.msra.mxu0 %v2338
      %3688 = vmatprep.subr.bf16.mxu0 %v2335
      %3689 = vmatpush2.bf16.msra.mxu0 %v2334
      %3690 = vmatprep.subr.bf16.mxu0 %v2331
      %3691 = vmatpush2.bf16.msra.mxu0 %v2330
      %3692 = vmatprep.subr.bf16.mxu0 %v2327
      %3693 = vmatpush2.bf16.msra.mxu0 %v2326
      %3694 = vmatprep.subr.bf16.mxu0 %v2323
      %3695 = vmatpush2.bf16.msra.mxu0 %v2322
      %3696 = vmatprep.subr.bf16.mxu0 %v2319
      %3697 = vmatpush2.bf16.msra.mxu0 %v2318
      %3698 = vmatprep.subr.bf16.mxu0 %v2315
      %3699 = vmatpush2.bf16.msra.mxu0 %v2314
      %3700 = vmatprep.mubr.bf16.mxu0 %v877
      %3701 = vmatmul.mubr.bf16.gmra.mxu0 %v876
      %v3702 = vpop.f32.mrf.mxu0
      %v3703 = vadd.f32 %v671, %v3702
      %v3704 = vpop.f32.mrf.mxu0
      %v3705 = vadd.f32 %v671, %v3704
      %v3706 = vpop.f32.mrf.mxu0
      %v3707 = vadd.f32 %v676, %v3706
      %v3708 = vpop.f32.mrf.mxu0
      %v3709 = vadd.f32 %v676, %v3708
      %3710 = vmatprep.mubr.bf16.mxu0 %v891
      %3711 = vmatmul.mubr.bf16.gmra.mxu0 %v890
      %v3712 = vpop.f32.mrf.mxu0
      %v3713 = vadd.f32 %v681, %v3712
      %v3714 = vpop.f32.mrf.mxu0
      %v3715 = vadd.f32 %v681, %v3714
      %v3716 = vpop.f32.mrf.mxu0
      %v3717 = vadd.f32 %v686, %v3716
      %v3718 = vpop.f32.mrf.mxu0
      %v3719 = vadd.f32 %v686, %v3718
      %3720 = vmatprep.mubr.bf16.mxu0 %v905
      %3721 = vmatmul.mubr.bf16.gmra.mxu0 %v904
      %v3722 = vpop.f32.mrf.mxu0
      %v3723 = vadd.f32 %v691, %v3722
      %v3724 = vpop.f32.mrf.mxu0
      %v3725 = vadd.f32 %v691, %v3724
      %v3726 = vpop.f32.mrf.mxu0
      %v3727 = vadd.f32 %v696, %v3726
      %v3728 = vpop.f32.mrf.mxu0
      %v3729 = vadd.f32 %v696, %v3728
      %3730 = vmatprep.mubr.bf16.mxu0 %v919
      %3731 = vmatmul.mubr.bf16.gmra.mxu0 %v918
      %v3732 = vpop.f32.mrf.mxu0
      %v3733 = vadd.f32 %v701, %v3732
      %v3734 = vpop.f32.mrf.mxu0
      %v3735 = vadd.f32 %v701, %v3734
      %v3736 = vpop.f32.mrf.mxu0
      %v3737 = vadd.f32 %v706, %v3736
      %v3738 = vpop.f32.mrf.mxu0
      %v3739 = vadd.f32 %v706, %v3738
      %3740 = vdwg.mxu0
      %3741 = vmatprep.subr.bf16.mxu0 %v2375
      %3742 = vmatpush1.bf16.msra.mxu0 %v2374
      %3743 = vmatprep.subr.bf16.mxu0 %v2371
      %3744 = vmatpush1.bf16.msra.mxu0 %v2370
      %3745 = vmatprep.subr.bf16.mxu0 %v2367
      %3746 = vmatpush1.bf16.msra.mxu0 %v2366
      %3747 = vmatprep.subr.bf16.mxu0 %v2363
      %3748 = vmatpush1.bf16.msra.mxu0 %v2362
      %3749 = vmatprep.subr.bf16.mxu0 %v2359
      %3750 = vmatpush1.bf16.msra.mxu0 %v2358
      %3751 = vmatprep.subr.bf16.mxu0 %v2355
      %3752 = vmatpush1.bf16.msra.mxu0 %v2354
      %3753 = vmatprep.subr.bf16.mxu0 %v2351
      %3754 = vmatpush1.bf16.msra.mxu0 %v2350
      %3755 = vmatprep.subr.bf16.mxu0 %v2347
      %3756 = vmatpush1.bf16.msra.mxu0 %v2346
      %3757 = vmatprep.subr.bf16.mxu0 %v2407
      %3758 = vmatpush2.bf16.msra.mxu0 %v2406
      %3759 = vmatprep.subr.bf16.mxu0 %v2403
      %3760 = vmatpush2.bf16.msra.mxu0 %v2402
      %3761 = vmatprep.subr.bf16.mxu0 %v2399
      %3762 = vmatpush2.bf16.msra.mxu0 %v2398
      %3763 = vmatprep.subr.bf16.mxu0 %v2395
      %3764 = vmatpush2.bf16.msra.mxu0 %v2394
      %3765 = vmatprep.subr.bf16.mxu0 %v2391
      %3766 = vmatpush2.bf16.msra.mxu0 %v2390
      %3767 = vmatprep.subr.bf16.mxu0 %v2387
      %3768 = vmatpush2.bf16.msra.mxu0 %v2386
      %3769 = vmatprep.subr.bf16.mxu0 %v2383
      %3770 = vmatpush2.bf16.msra.mxu0 %v2382
      %3771 = vmatprep.subr.bf16.mxu0 %v2379
      %3772 = vmatpush2.bf16.msra.mxu0 %v2378
      %3773 = vmatprep.mubr.bf16.mxu0 %v879
      %3774 = vmatmul.mubr.bf16.gmra.mxu0 %v878
      %v3775 = vpop.f32.mrf.mxu0
      %v3776 = vadd.f32 %v3703, %v3775
      %v3777 = vpop.f32.mrf.mxu0
      %v3778 = vadd.f32 %v3705, %v3777
      %v3779 = vpop.f32.mrf.mxu0
      %v3780 = vadd.f32 %v3707, %v3779
      %v3781 = vpop.f32.mrf.mxu0
      %v3782 = vadd.f32 %v3709, %v3781
      %3783 = vmatprep.mubr.bf16.mxu0 %v893
      %3784 = vmatmul.mubr.bf16.gmra.mxu0 %v892
      %v3785 = vpop.f32.mrf.mxu0
      %v3786 = vadd.f32 %v3713, %v3785
      %v3787 = vpop.f32.mrf.mxu0
      %v3788 = vadd.f32 %v3715, %v3787
      %v3789 = vpop.f32.mrf.mxu0
      %v3790 = vadd.f32 %v3717, %v3789
      %v3791 = vpop.f32.mrf.mxu0
      %v3792 = vadd.f32 %v3719, %v3791
      %3793 = vmatprep.mubr.bf16.mxu0 %v907
      %3794 = vmatmul.mubr.bf16.gmra.mxu0 %v906
      %v3795 = vpop.f32.mrf.mxu0
      %v3796 = vadd.f32 %v3723, %v3795
      %v3797 = vpop.f32.mrf.mxu0
      %v3798 = vadd.f32 %v3725, %v3797
      %v3799 = vpop.f32.mrf.mxu0
      %v3800 = vadd.f32 %v3727, %v3799
      %v3801 = vpop.f32.mrf.mxu0
      %v3802 = vadd.f32 %v3729, %v3801
      %3803 = vmatprep.mubr.bf16.mxu0 %v921
      %3804 = vmatmul.mubr.bf16.gmra.mxu0 %v920
      %v3805 = vpop.f32.mrf.mxu0
      %v3806 = vadd.f32 %v3733, %v3805
      %v3807 = vpop.f32.mrf.mxu0
      %v3808 = vadd.f32 %v3735, %v3807
      %v3809 = vpop.f32.mrf.mxu0
      %v3810 = vadd.f32 %v3737, %v3809
      %v3811 = vpop.f32.mrf.mxu0
      %v3812 = vadd.f32 %v3739, %v3811
      %3813 = vdwg.mxu0
      %3814 = vmatprep.subr.bf16.mxu0 %v2439
      %3815 = vmatpush1.bf16.msra.mxu0 %v2438
      %3816 = vmatprep.subr.bf16.mxu0 %v2435
      %3817 = vmatpush1.bf16.msra.mxu0 %v2434
      %3818 = vmatprep.subr.bf16.mxu0 %v2431
      %3819 = vmatpush1.bf16.msra.mxu0 %v2430
      %3820 = vmatprep.subr.bf16.mxu0 %v2427
      %3821 = vmatpush1.bf16.msra.mxu0 %v2426
      %3822 = vmatprep.subr.bf16.mxu0 %v2423
      %3823 = vmatpush1.bf16.msra.mxu0 %v2422
      %3824 = vmatprep.subr.bf16.mxu0 %v2419
      %3825 = vmatpush1.bf16.msra.mxu0 %v2418
      %3826 = vmatprep.subr.bf16.mxu0 %v2415
      %3827 = vmatpush1.bf16.msra.mxu0 %v2414
      %3828 = vmatprep.subr.bf16.mxu0 %v2411
      %3829 = vmatpush1.bf16.msra.mxu0 %v2410
      %3830 = vmatprep.subr.bf16.mxu0 %v2471
      %3831 = vmatpush2.bf16.msra.mxu0 %v2470
      %3832 = vmatprep.subr.bf16.mxu0 %v2467
      %3833 = vmatpush2.bf16.msra.mxu0 %v2466
      %3834 = vmatprep.subr.bf16.mxu0 %v2463
      %3835 = vmatpush2.bf16.msra.mxu0 %v2462
      %3836 = vmatprep.subr.bf16.mxu0 %v2459
      %3837 = vmatpush2.bf16.msra.mxu0 %v2458
      %3838 = vmatprep.subr.bf16.mxu0 %v2455
      %3839 = vmatpush2.bf16.msra.mxu0 %v2454
      %3840 = vmatprep.subr.bf16.mxu0 %v2451
      %3841 = vmatpush2.bf16.msra.mxu0 %v2450
      %3842 = vmatprep.subr.bf16.mxu0 %v2447
      %3843 = vmatpush2.bf16.msra.mxu0 %v2446
      %3844 = vmatprep.subr.bf16.mxu0 %v2443
      %3845 = vmatpush2.bf16.msra.mxu0 %v2442
      %3846 = vmatprep.mubr.bf16.mxu0 %v881
      %3847 = vmatmul.mubr.bf16.gmra.mxu0 %v880
      %v3848 = vpop.f32.mrf.mxu0
      %v3849 = vadd.f32 %v3776, %v3848
      %v3850 = vpop.f32.mrf.mxu0
      %v3851 = vadd.f32 %v3778, %v3850
      %v3852 = vpop.f32.mrf.mxu0
      %v3853 = vadd.f32 %v3780, %v3852
      %v3854 = vpop.f32.mrf.mxu0
      %v3855 = vadd.f32 %v3782, %v3854
      %3856 = vmatprep.mubr.bf16.mxu0 %v895
      %3857 = vmatmul.mubr.bf16.gmra.mxu0 %v894
      %v3858 = vpop.f32.mrf.mxu0
      %v3859 = vadd.f32 %v3786, %v3858
      %v3860 = vpop.f32.mrf.mxu0
      %v3861 = vadd.f32 %v3788, %v3860
      %v3862 = vpop.f32.mrf.mxu0
      %v3863 = vadd.f32 %v3790, %v3862
      %v3864 = vpop.f32.mrf.mxu0
      %v3865 = vadd.f32 %v3792, %v3864
      %3866 = vmatprep.mubr.bf16.mxu0 %v909
      %3867 = vmatmul.mubr.bf16.gmra.mxu0 %v908
      %v3868 = vpop.f32.mrf.mxu0
      %v3869 = vadd.f32 %v3796, %v3868
      %v3870 = vpop.f32.mrf.mxu0
      %v3871 = vadd.f32 %v3798, %v3870
      %v3872 = vpop.f32.mrf.mxu0
      %v3873 = vadd.f32 %v3800, %v3872
      %v3874 = vpop.f32.mrf.mxu0
      %v3875 = vadd.f32 %v3802, %v3874
      %3876 = vmatprep.mubr.bf16.mxu0 %v923
      %3877 = vmatmul.mubr.bf16.gmra.mxu0 %v922
      %v3878 = vpop.f32.mrf.mxu0
      %v3879 = vadd.f32 %v3806, %v3878
      %v3880 = vpop.f32.mrf.mxu0
      %v3881 = vadd.f32 %v3808, %v3880
      %v3882 = vpop.f32.mrf.mxu0
      %v3883 = vadd.f32 %v3810, %v3882
      %v3884 = vpop.f32.mrf.mxu0
      %v3885 = vadd.f32 %v3812, %v3884
      %3886 = vdwg.mxu0
      %3887 = vmatprep.subr.bf16.mxu0 %v2503
      %3888 = vmatpush1.bf16.msra.mxu0 %v2502
      %3889 = vmatprep.subr.bf16.mxu0 %v2499
      %3890 = vmatpush1.bf16.msra.mxu0 %v2498
      %3891 = vmatprep.subr.bf16.mxu0 %v2495
      %3892 = vmatpush1.bf16.msra.mxu0 %v2494
      %3893 = vmatprep.subr.bf16.mxu0 %v2491
      %3894 = vmatpush1.bf16.msra.mxu0 %v2490
      %3895 = vmatprep.subr.bf16.mxu0 %v2487
      %3896 = vmatpush1.bf16.msra.mxu0 %v2486
      %3897 = vmatprep.subr.bf16.mxu0 %v2483
      %3898 = vmatpush1.bf16.msra.mxu0 %v2482
      %3899 = vmatprep.subr.bf16.mxu0 %v2479
      %3900 = vmatpush1.bf16.msra.mxu0 %v2478
      %3901 = vmatprep.subr.bf16.mxu0 %v2475
      %3902 = vmatpush1.bf16.msra.mxu0 %v2474
      %3903 = vmatprep.subr.bf16.mxu0 %v2535
      %3904 = vmatpush2.bf16.msra.mxu0 %v2534
      %3905 = vmatprep.subr.bf16.mxu0 %v2531
      %3906 = vmatpush2.bf16.msra.mxu0 %v2530
      %3907 = vmatprep.subr.bf16.mxu0 %v2527
      %3908 = vmatpush2.bf16.msra.mxu0 %v2526
      %3909 = vmatprep.subr.bf16.mxu0 %v2523
      %3910 = vmatpush2.bf16.msra.mxu0 %v2522
      %3911 = vmatprep.subr.bf16.mxu0 %v2519
      %3912 = vmatpush2.bf16.msra.mxu0 %v2518
      %3913 = vmatprep.subr.bf16.mxu0 %v2515
      %3914 = vmatpush2.bf16.msra.mxu0 %v2514
      %3915 = vmatprep.subr.bf16.mxu0 %v2511
      %3916 = vmatpush2.bf16.msra.mxu0 %v2510
      %3917 = vmatprep.subr.bf16.mxu0 %v2507
      %3918 = vmatpush2.bf16.msra.mxu0 %v2506
      %3919 = vmatprep.mubr.bf16.mxu0 %v883
      %3920 = vmatmul.mubr.bf16.gmra.mxu0 %v882
      %v3921 = vpop.f32.mrf.mxu0
      %v3922 = vadd.f32 %v3849, %v3921
      %v3923 = vpop.f32.mrf.mxu0
      %v3924 = vadd.f32 %v3851, %v3923
      %v3925 = vpop.f32.mrf.mxu0
      %v3926 = vadd.f32 %v3853, %v3925
      %v3927 = vpop.f32.mrf.mxu0
      %v3928 = vadd.f32 %v3855, %v3927
      %3929 = vmatprep.mubr.bf16.mxu0 %v897
      %3930 = vmatmul.mubr.bf16.gmra.mxu0 %v896
      %v3931 = vpop.f32.mrf.mxu0
      %v3932 = vadd.f32 %v3859, %v3931
      %v3933 = vpop.f32.mrf.mxu0
      %v3934 = vadd.f32 %v3861, %v3933
      %v3935 = vpop.f32.mrf.mxu0
      %v3936 = vadd.f32 %v3863, %v3935
      %v3937 = vpop.f32.mrf.mxu0
      %v3938 = vadd.f32 %v3865, %v3937
      %3939 = vmatprep.mubr.bf16.mxu0 %v911
      %3940 = vmatmul.mubr.bf16.gmra.mxu0 %v910
      %v3941 = vpop.f32.mrf.mxu0
      %v3942 = vadd.f32 %v3869, %v3941
      %v3943 = vpop.f32.mrf.mxu0
      %v3944 = vadd.f32 %v3871, %v3943
      %v3945 = vpop.f32.mrf.mxu0
      %v3946 = vadd.f32 %v3873, %v3945
      %v3947 = vpop.f32.mrf.mxu0
      %v3948 = vadd.f32 %v3875, %v3947
      %3949 = vmatprep.mubr.bf16.mxu0 %v925
      %3950 = vmatmul.mubr.bf16.gmra.mxu0 %v924
      %v3951 = vpop.f32.mrf.mxu0
      %v3952 = vadd.f32 %v3879, %v3951
      %v3953 = vpop.f32.mrf.mxu0
      %v3954 = vadd.f32 %v3881, %v3953
      %v3955 = vpop.f32.mrf.mxu0
      %v3956 = vadd.f32 %v3883, %v3955
      %v3957 = vpop.f32.mrf.mxu0
      %v3958 = vadd.f32 %v3885, %v3957
      %3959 = vdwg.mxu0
      %3960 = vmatprep.subr.bf16.mxu0 %v2567
      %3961 = vmatpush1.bf16.msra.mxu0 %v2566
      %3962 = vmatprep.subr.bf16.mxu0 %v2563
      %3963 = vmatpush1.bf16.msra.mxu0 %v2562
      %3964 = vmatprep.subr.bf16.mxu0 %v2559
      %3965 = vmatpush1.bf16.msra.mxu0 %v2558
      %3966 = vmatprep.subr.bf16.mxu0 %v2555
      %3967 = vmatpush1.bf16.msra.mxu0 %v2554
      %3968 = vmatprep.subr.bf16.mxu0 %v2551
      %3969 = vmatpush1.bf16.msra.mxu0 %v2550
      %3970 = vmatprep.subr.bf16.mxu0 %v2547
      %3971 = vmatpush1.bf16.msra.mxu0 %v2546
      %3972 = vmatprep.subr.bf16.mxu0 %v2543
      %3973 = vmatpush1.bf16.msra.mxu0 %v2542
      %3974 = vmatprep.subr.bf16.mxu0 %v2539
      %3975 = vmatpush1.bf16.msra.mxu0 %v2538
      %3976 = vmatprep.subr.bf16.mxu0 %v2599
      %3977 = vmatpush2.bf16.msra.mxu0 %v2598
      %3978 = vmatprep.subr.bf16.mxu0 %v2595
      %3979 = vmatpush2.bf16.msra.mxu0 %v2594
      %3980 = vmatprep.subr.bf16.mxu0 %v2591
      %3981 = vmatpush2.bf16.msra.mxu0 %v2590
      %3982 = vmatprep.subr.bf16.mxu0 %v2587
      %3983 = vmatpush2.bf16.msra.mxu0 %v2586
      %3984 = vmatprep.subr.bf16.mxu0 %v2583
      %3985 = vmatpush2.bf16.msra.mxu0 %v2582
      %3986 = vmatprep.subr.bf16.mxu0 %v2579
      %3987 = vmatpush2.bf16.msra.mxu0 %v2578
      %3988 = vmatprep.subr.bf16.mxu0 %v2575
      %3989 = vmatpush2.bf16.msra.mxu0 %v2574
      %3990 = vmatprep.subr.bf16.mxu0 %v2571
      %3991 = vmatpush2.bf16.msra.mxu0 %v2570
      %3992 = vmatprep.mubr.bf16.mxu0 %v885
      %3993 = vmatmul.mubr.bf16.gmra.mxu0 %v884
      %v3994 = vpop.f32.mrf.mxu0
      %v3995 = vadd.f32 %v3922, %v3994
      %v3996 = vpop.f32.mrf.mxu0
      %v3997 = vadd.f32 %v3924, %v3996
      %v3998 = vpop.f32.mrf.mxu0
      %v3999 = vadd.f32 %v3926, %v3998
      %v4000 = vpop.f32.mrf.mxu0
      %v4001 = vadd.f32 %v3928, %v4000
      %4002 = vmatprep.mubr.bf16.mxu0 %v899
      %4003 = vmatmul.mubr.bf16.gmra.mxu0 %v898
      %v4004 = vpop.f32.mrf.mxu0
      %v4005 = vadd.f32 %v3932, %v4004
      %v4006 = vpop.f32.mrf.mxu0
      %v4007 = vadd.f32 %v3934, %v4006
      %v4008 = vpop.f32.mrf.mxu0
      %v4009 = vadd.f32 %v3936, %v4008
      %v4010 = vpop.f32.mrf.mxu0
      %v4011 = vadd.f32 %v3938, %v4010
      %4012 = vmatprep.mubr.bf16.mxu0 %v913
      %4013 = vmatmul.mubr.bf16.gmra.mxu0 %v912
      %v4014 = vpop.f32.mrf.mxu0
      %v4015 = vadd.f32 %v3942, %v4014
      %v4016 = vpop.f32.mrf.mxu0
      %v4017 = vadd.f32 %v3944, %v4016
      %v4018 = vpop.f32.mrf.mxu0
      %v4019 = vadd.f32 %v3946, %v4018
      %v4020 = vpop.f32.mrf.mxu0
      %v4021 = vadd.f32 %v3948, %v4020
      %4022 = vmatprep.mubr.bf16.mxu0 %v927
      %4023 = vmatmul.mubr.bf16.gmra.mxu0 %v926
      %v4024 = vpop.f32.mrf.mxu0
      %v4025 = vadd.f32 %v3952, %v4024
      %v4026 = vpop.f32.mrf.mxu0
      %v4027 = vadd.f32 %v3954, %v4026
      %v4028 = vpop.f32.mrf.mxu0
      %v4029 = vadd.f32 %v3956, %v4028
      %v4030 = vpop.f32.mrf.mxu0
      %v4031 = vadd.f32 %v3958, %v4030
      %4032 = vdwg.mxu0
      %4033 = vmatprep.subr.bf16.mxu0 %v2631
      %4034 = vmatpush1.bf16.msra.mxu0 %v2630
      %4035 = vmatprep.subr.bf16.mxu0 %v2627
      %4036 = vmatpush1.bf16.msra.mxu0 %v2626
      %4037 = vmatprep.subr.bf16.mxu0 %v2623
      %4038 = vmatpush1.bf16.msra.mxu0 %v2622
      %4039 = vmatprep.subr.bf16.mxu0 %v2619
      %4040 = vmatpush1.bf16.msra.mxu0 %v2618
      %4041 = vmatprep.subr.bf16.mxu0 %v2615
      %4042 = vmatpush1.bf16.msra.mxu0 %v2614
      %4043 = vmatprep.subr.bf16.mxu0 %v2611
      %4044 = vmatpush1.bf16.msra.mxu0 %v2610
      %4045 = vmatprep.subr.bf16.mxu0 %v2607
      %4046 = vmatpush1.bf16.msra.mxu0 %v2606
      %4047 = vmatprep.subr.bf16.mxu0 %v2603
      %4048 = vmatpush1.bf16.msra.mxu0 %v2602
      %4049 = vmatprep.subr.bf16.mxu0 %v2663
      %4050 = vmatpush2.bf16.msra.mxu0 %v2662
      %4051 = vmatprep.subr.bf16.mxu0 %v2659
      %4052 = vmatpush2.bf16.msra.mxu0 %v2658
      %4053 = vmatprep.subr.bf16.mxu0 %v2655
      %4054 = vmatpush2.bf16.msra.mxu0 %v2654
      %4055 = vmatprep.subr.bf16.mxu0 %v2651
      %4056 = vmatpush2.bf16.msra.mxu0 %v2650
      %4057 = vmatprep.subr.bf16.mxu0 %v2647
      %4058 = vmatpush2.bf16.msra.mxu0 %v2646
      %4059 = vmatprep.subr.bf16.mxu0 %v2643
      %4060 = vmatpush2.bf16.msra.mxu0 %v2642
      %4061 = vmatprep.subr.bf16.mxu0 %v2639
      %4062 = vmatpush2.bf16.msra.mxu0 %v2638
      %4063 = vmatprep.subr.bf16.mxu0 %v2635
      %4064 = vmatpush2.bf16.msra.mxu0 %v2634
      %4065 = vmatprep.mubr.bf16.mxu0 %v887
      %4066 = vmatmul.mubr.bf16.gmra.mxu0 %v886
      %v4067 = vpop.f32.mrf.mxu0
      %v4068 = vadd.f32 %v3995, %v4067
      %v4069 = vpop.f32.mrf.mxu0
      %v4070 = vadd.f32 %v3997, %v4069
      %v4071 = vpop.f32.mrf.mxu0
      %v4072 = vadd.f32 %v3999, %v4071
      %v4073 = vpop.f32.mrf.mxu0
      %v4074 = vadd.f32 %v4001, %v4073
      %4075 = vmatprep.mubr.bf16.mxu0 %v901
      %4076 = vmatmul.mubr.bf16.gmra.mxu0 %v900
      %v4077 = vpop.f32.mrf.mxu0
      %v4078 = vadd.f32 %v4005, %v4077
      %v4079 = vpop.f32.mrf.mxu0
      %v4080 = vadd.f32 %v4007, %v4079
      %v4081 = vpop.f32.mrf.mxu0
      %v4082 = vadd.f32 %v4009, %v4081
      %v4083 = vpop.f32.mrf.mxu0
      %v4084 = vadd.f32 %v4011, %v4083
      %4085 = vmatprep.mubr.bf16.mxu0 %v915
      %4086 = vmatmul.mubr.bf16.gmra.mxu0 %v914
      %v4087 = vpop.f32.mrf.mxu0
      %v4088 = vadd.f32 %v4015, %v4087
      %v4089 = vpop.f32.mrf.mxu0
      %v4090 = vadd.f32 %v4017, %v4089
      %v4091 = vpop.f32.mrf.mxu0
      %v4092 = vadd.f32 %v4019, %v4091
      %v4093 = vpop.f32.mrf.mxu0
      %v4094 = vadd.f32 %v4021, %v4093
      %4095 = vmatprep.mubr.bf16.mxu0 %v929
      %4096 = vmatmul.mubr.bf16.gmra.mxu0 %v928
      %v4097 = vpop.f32.mrf.mxu0
      %v4098 = vadd.f32 %v4025, %v4097
      %v4099 = vpop.f32.mrf.mxu0
      %v4100 = vadd.f32 %v4027, %v4099
      %v4101 = vpop.f32.mrf.mxu0
      %v4102 = vadd.f32 %v4029, %v4101
      %v4103 = vpop.f32.mrf.mxu0
      %v4104 = vadd.f32 %v4031, %v4103
      %4105 = vdwg.mxu0
      %4106 = vmatprep.subr.bf16.mxu0 %v2695
      %4107 = vmatpush1.bf16.msra.mxu0 %v2694
      %4108 = vmatprep.subr.bf16.mxu0 %v2691
      %4109 = vmatpush1.bf16.msra.mxu0 %v2690
      %4110 = vmatprep.subr.bf16.mxu0 %v2687
      %4111 = vmatpush1.bf16.msra.mxu0 %v2686
      %4112 = vmatprep.subr.bf16.mxu0 %v2683
      %4113 = vmatpush1.bf16.msra.mxu0 %v2682
      %4114 = vmatprep.subr.bf16.mxu0 %v2679
      %4115 = vmatpush1.bf16.msra.mxu0 %v2678
      %4116 = vmatprep.subr.bf16.mxu0 %v2675
      %4117 = vmatpush1.bf16.msra.mxu0 %v2674
      %4118 = vmatprep.subr.bf16.mxu0 %v2671
      %4119 = vmatpush1.bf16.msra.mxu0 %v2670
      %4120 = vmatprep.subr.bf16.mxu0 %v2667
      %4121 = vmatpush1.bf16.msra.mxu0 %v2666
      %4122 = vmatprep.subr.bf16.mxu0 0
      %4123 = vmatpush2.bf16.msra.mxu0 0
      %4124 = vmatprep.subr.bf16.mxu0 0
      %4125 = vmatpush2.bf16.msra.mxu0 0
      %4126 = vmatprep.subr.bf16.mxu0 0
      %4127 = vmatpush2.bf16.msra.mxu0 0
      %4128 = vmatprep.subr.bf16.mxu0 0
      %4129 = vmatpush2.bf16.msra.mxu0 0
      %4130 = vmatprep.subr.bf16.mxu0 %v2711
      %4131 = vmatpush2.bf16.msra.mxu0 %v2710
      %4132 = vmatprep.subr.bf16.mxu0 %v2707
      %4133 = vmatpush2.bf16.msra.mxu0 %v2706
      %4134 = vmatprep.subr.bf16.mxu0 %v2703
      %4135 = vmatpush2.bf16.msra.mxu0 %v2702
      %4136 = vmatprep.subr.bf16.mxu0 %v2699
      %4137 = vmatpush2.bf16.msra.mxu0 %v2698
      %4138 = vmatprep.mubr.bf16.mxu0 %v3146
      %4139 = vmatmul.mubr.bf16.gmra.mxu0 %v888
      %v4140 = vpop.f32.mrf.mxu0
      %v4141 = vadd.f32 %v4068, %v4140
      %v4142 = vpop.f32.mrf.mxu0
      %v4143 = vadd.f32 %v4070, %v4142
      %v4144 = vpop.f32.mrf.mxu0
      %v4145 = vadd.f32 %v4072, %v4144
      %v4146 = vpop.f32.mrf.mxu0
      %v4147 = vadd.f32 %v4074, %v4146
      %4148 = vmatprep.mubr.bf16.mxu0 %v3149
      %4149 = vmatmul.mubr.bf16.gmra.mxu0 %v902
      %v4150 = vpop.f32.mrf.mxu0
      %v4151 = vadd.f32 %v4078, %v4150
      %v4152 = vpop.f32.mrf.mxu0
      %v4153 = vadd.f32 %v4080, %v4152
      %v4154 = vpop.f32.mrf.mxu0
      %v4155 = vadd.f32 %v4082, %v4154
      %v4156 = vpop.f32.mrf.mxu0
      %v4157 = vadd.f32 %v4084, %v4156
      %4158 = vmatprep.mubr.bf16.mxu0 %v3152
      %4159 = vmatmul.mubr.bf16.gmra.mxu0 %v916
      %v4160 = vpop.f32.mrf.mxu0
      %v4161 = vadd.f32 %v4088, %v4160
      %v4162 = vpop.f32.mrf.mxu0
      %v4163 = vadd.f32 %v4090, %v4162
      %v4164 = vpop.f32.mrf.mxu0
      %v4165 = vadd.f32 %v4092, %v4164
      %v4166 = vpop.f32.mrf.mxu0
      %v4167 = vadd.f32 %v4094, %v4166
      %4168 = vmatprep.mubr.bf16.mxu0 %v3155
      %4169 = vmatmul.mubr.bf16.gmra.mxu0 %v930
      %v4170 = vpop.f32.mrf.mxu0
      %v4171 = vadd.f32 %v4098, %v4170
      %v4172 = vpop.f32.mrf.mxu0
      %v4173 = vadd.f32 %v4100, %v4172
      %v4174 = vpop.f32.mrf.mxu0
      %v4175 = vadd.f32 %v4102, %v4174
      %v4176 = vpop.f32.mrf.mxu0
      %v4177 = vadd.f32 %v4104, %v4176
      %4178 = vdwg.mxu0
      %v4179 = vadd.f32 %v3630, %v3632
      %v4180 = vadd.f32 %v4179, %v4141
      %v4181 = vadd.f32 %v4180, %v4143
      %4182 = vadd.xlane.f32.xlu0 %v4181
      %v4183 = vpop.xlane.xlu0 %4182
      %v4184 = vadd.f32 %v3634, %v3636
      %v4185 = vadd.f32 %v4184, %v4145
      %v4186 = vadd.f32 %v4185, %v4147
      %4187 = vadd.xlane.f32.xlu0 %v4186
      %v4188 = vpop.xlane.xlu0 %4187
      %v4189 = vadd.f32 %v3640, %v3642
      %v4190 = vadd.f32 %v4189, %v4151
      %v4191 = vadd.f32 %v4190, %v4153
      %4192 = vadd.xlane.f32.xlu0 %v4191
      %v4193 = vpop.xlane.xlu0 %4192
      %v4194 = vadd.f32 %v3644, %v3646
      %v4195 = vadd.f32 %v4194, %v4155
      %v4196 = vadd.f32 %v4195, %v4157
      %4197 = vadd.xlane.f32.xlu0 %v4196
      %v4198 = vpop.xlane.xlu0 %4197
      %v4199 = vadd.f32 %v3650, %v3652
      %v4200 = vadd.f32 %v4199, %v4161
      %v4201 = vadd.f32 %v4200, %v4163
      %4202 = vadd.xlane.f32.xlu0 %v4201
      %v4203 = vpop.xlane.xlu0 %4202
      %v4204 = vadd.f32 %v3654, %v3656
      %v4205 = vadd.f32 %v4204, %v4165
      %v4206 = vadd.f32 %v4205, %v4167
      %4207 = vadd.xlane.f32.xlu0 %v4206
      %v4208 = vpop.xlane.xlu0 %4207
      %v4209 = vadd.f32 %v3660, %v3662
      %v4210 = vadd.f32 %v4209, %v4171
      %v4211 = vadd.f32 %v4210, %v4173
      %4212 = vadd.xlane.f32.xlu0 %v4211
      %v4213 = vpop.xlane.xlu0 %4212
      %v4214 = vadd.f32 %v3664, %v3666
      %v4215 = vadd.f32 %v4214, %v4175
      %v4216 = vadd.f32 %v4215, %v4177
      %4217 = vadd.xlane.f32.xlu0 %v4216
      %v4218 = vpop.xlane.xlu0 %4217
      %v4219 = vmul.f32 %v4183, 0.001953125
      %v4220 = vmul.f32 %v4188, 0.001953125
      %v4221 = vmul.f32 %v4193, 0.001953125
      %v4222 = vmul.f32 %v4198, 0.001953125
      %v4223 = vmul.f32 %v4203, 0.001953125
      %v4224 = vmul.f32 %v4208, 0.001953125
      %v4225 = vmul.f32 %v4213, 0.001953125
      %v4226 = vmul.f32 %v4218, 0.001953125
      %v4227 = vmul.f32 %v3630, %v3630
      %v4228 = vmul.f32 %v3632, %v3632
      %v4229 = vmul.f32 %v4141, %v4141
      %v4230 = vmul.f32 %v4143, %v4143
      %v4231 = vmul.f32 %v3634, %v3634
      %v4232 = vmul.f32 %v3636, %v3636
      %v4233 = vmul.f32 %v4145, %v4145
      %v4234 = vmul.f32 %v4147, %v4147
      %v4235 = vmul.f32 %v3640, %v3640
      %v4236 = vmul.f32 %v3642, %v3642
      %v4237 = vmul.f32 %v4151, %v4151
      %v4238 = vmul.f32 %v4153, %v4153
      %v4239 = vmul.f32 %v3644, %v3644
      %v4240 = vmul.f32 %v3646, %v3646
      %v4241 = vmul.f32 %v4155, %v4155
      %v4242 = vmul.f32 %v4157, %v4157
      %v4243 = vmul.f32 %v3650, %v3650
      %v4244 = vmul.f32 %v3652, %v3652
      %v4245 = vmul.f32 %v4161, %v4161
      %v4246 = vmul.f32 %v4163, %v4163
      %v4247 = vmul.f32 %v3654, %v3654
      %v4248 = vmul.f32 %v3656, %v3656
      %v4249 = vmul.f32 %v4165, %v4165
      %v4250 = vmul.f32 %v4167, %v4167
      %v4251 = vmul.f32 %v3660, %v3660
      %v4252 = vmul.f32 %v3662, %v3662
      %v4253 = vmul.f32 %v4171, %v4171
      %v4254 = vmul.f32 %v4173, %v4173
      %v4255 = vmul.f32 %v3664, %v3664
      %v4256 = vmul.f32 %v3666, %v3666
      %v4257 = vmul.f32 %v4175, %v4175
      %v4258 = vmul.f32 %v4177, %v4177
      %v4259 = vadd.f32 %v4227, %v4228
      %v4260 = vadd.f32 %v4259, %v4229
      %v4261 = vadd.f32 %v4260, %v4230
      %4262 = vadd.xlane.f32.xlu0 %v4261
      %v4263 = vpop.xlane.xlu0 %4262
      %v4264 = vadd.f32 %v4231, %v4232
      %v4265 = vadd.f32 %v4264, %v4233
      %v4266 = vadd.f32 %v4265, %v4234
      %4267 = vadd.xlane.f32.xlu0 %v4266
      %v4268 = vpop.xlane.xlu0 %4267
      %v4269 = vadd.f32 %v4235, %v4236
      %v4270 = vadd.f32 %v4269, %v4237
      %v4271 = vadd.f32 %v4270, %v4238
      %4272 = vadd.xlane.f32.xlu0 %v4271
      %v4273 = vpop.xlane.xlu0 %4272
      %v4274 = vadd.f32 %v4239, %v4240
      %v4275 = vadd.f32 %v4274, %v4241
      %v4276 = vadd.f32 %v4275, %v4242
      %4277 = vadd.xlane.f32.xlu0 %v4276
      %v4278 = vpop.xlane.xlu0 %4277
      %v4279 = vadd.f32 %v4243, %v4244
      %v4280 = vadd.f32 %v4279, %v4245
      %v4281 = vadd.f32 %v4280, %v4246
      %4282 = vadd.xlane.f32.xlu0 %v4281
      %v4283 = vpop.xlane.xlu0 %4282
      %v4284 = vadd.f32 %v4247, %v4248
      %v4285 = vadd.f32 %v4284, %v4249
      %v4286 = vadd.f32 %v4285, %v4250
      %4287 = vadd.xlane.f32.xlu0 %v4286
      %v4288 = vpop.xlane.xlu0 %4287
      %v4289 = vadd.f32 %v4251, %v4252
      %v4290 = vadd.f32 %v4289, %v4253
      %v4291 = vadd.f32 %v4290, %v4254
      %4292 = vadd.xlane.f32.xlu0 %v4291
      %v4293 = vpop.xlane.xlu0 %4292
      %v4294 = vadd.f32 %v4255, %v4256
      %v4295 = vadd.f32 %v4294, %v4257
      %v4296 = vadd.f32 %v4295, %v4258
      %4297 = vadd.xlane.f32.xlu0 %v4296
      %v4298 = vpop.xlane.xlu0 %4297
      %v4299 = vmul.f32 %v4263, 0.001953125
      %v4300 = vmul.f32 %v4268, 0.001953125
      %v4301 = vmul.f32 %v4273, 0.001953125
      %v4302 = vmul.f32 %v4278, 0.001953125
      %v4303 = vmul.f32 %v4283, 0.001953125
      %v4304 = vmul.f32 %v4288, 0.001953125
      %v4305 = vmul.f32 %v4293, 0.001953125
      %v4306 = vmul.f32 %v4298, 0.001953125
      %v4307 = vmul.f32 %v4219, %v4219
      %v4308 = vmul.f32 %v4220, %v4220
      %v4309 = vmul.f32 %v4221, %v4221
      %v4310 = vmul.f32 %v4222, %v4222
      %v4311 = vmul.f32 %v4223, %v4223
      %v4312 = vmul.f32 %v4224, %v4224
      %v4313 = vmul.f32 %v4225, %v4225
      %v4314 = vmul.f32 %v4226, %v4226
      %v4315 = vsub.f32 %v4299, %v4307
      %v4316 = vsub.f32 %v4300, %v4308
      %v4317 = vsub.f32 %v4301, %v4309
      %v4318 = vsub.f32 %v4302, %v4310
      %v4319 = vsub.f32 %v4303, %v4311
      %v4320 = vsub.f32 %v4304, %v4312
      %v4321 = vsub.f32 %v4305, %v4313
      %v4322 = vsub.f32 %v4306, %v4314
      %v4323 = vmax.f32 %v4315, 0.0
      %v4324 = vmax.f32 %v4316, 0.0
      %v4325 = vmax.f32 %v4317, 0.0
      %v4326 = vmax.f32 %v4318, 0.0
      %v4327 = vmax.f32 %v4319, 0.0
      %v4328 = vmax.f32 %v4320, 0.0
      %v4329 = vmax.f32 %v4321, 0.0
      %v4330 = vmax.f32 %v4322, 0.0
      %v4331 = vsub.f32 %v3630, %v4219
      %v4332 = vsub.f32 %v3632, %v4219
      %v4333 = vsub.f32 %v4141, %v4219
      %v4334 = vsub.f32 %v4143, %v4219
      %v4335 = vsub.f32 %v3634, %v4220
      %v4336 = vsub.f32 %v3636, %v4220
      %v4337 = vsub.f32 %v4145, %v4220
      %v4338 = vsub.f32 %v4147, %v4220
      %v4339 = vsub.f32 %v3640, %v4221
      %v4340 = vsub.f32 %v3642, %v4221
      %v4341 = vsub.f32 %v4151, %v4221
      %v4342 = vsub.f32 %v4153, %v4221
      %v4343 = vsub.f32 %v3644, %v4222
      %v4344 = vsub.f32 %v3646, %v4222
      %v4345 = vsub.f32 %v4155, %v4222
      %v4346 = vsub.f32 %v4157, %v4222
      %v4347 = vsub.f32 %v3650, %v4223
      %v4348 = vsub.f32 %v3652, %v4223
      %v4349 = vsub.f32 %v4161, %v4223
      %v4350 = vsub.f32 %v4163, %v4223
      %v4351 = vsub.f32 %v3654, %v4224
      %v4352 = vsub.f32 %v3656, %v4224
      %v4353 = vsub.f32 %v4165, %v4224
      %v4354 = vsub.f32 %v4167, %v4224
      %v4355 = vsub.f32 %v3660, %v4225
      %v4356 = vsub.f32 %v3662, %v4225
      %v4357 = vsub.f32 %v4171, %v4225
      %v4358 = vsub.f32 %v4173, %v4225
      %v4359 = vsub.f32 %v3664, %v4226
      %v4360 = vsub.f32 %v3666, %v4226
      %v4361 = vsub.f32 %v4175, %v4226
      %v4362 = vsub.f32 %v4177, %v4226
      %v4363 = vadd.f32 %v4323, 1e-05
      %v4364 = vadd.f32 %v4324, 1e-05
      %v4365 = vadd.f32 %v4325, 1e-05
      %v4366 = vadd.f32 %v4326, 1e-05
      %v4367 = vadd.f32 %v4327, 1e-05
      %v4368 = vadd.f32 %v4328, 1e-05
      %v4369 = vadd.f32 %v4329, 1e-05
      %v4370 = vadd.f32 %v4330, 1e-05
      %v4371 = vrsqrt.pop %v4363
      %v4372 = vrsqrt.pop %v4364
      %v4373 = vrsqrt.pop %v4365
      %v4374 = vrsqrt.pop %v4366
      %v4375 = vrsqrt.pop %v4367
      %v4376 = vrsqrt.pop %v4368
      %v4377 = vrsqrt.pop %v4369
      %v4378 = vrsqrt.pop %v4370
      %v4379 = vmul.f32 %v4331, %v4371
      %v4380 = vmul.f32 %v4332, %v4371
      %v4381 = vmul.f32 %v4333, %v4371
      %v4382 = vmul.f32 %v4334, %v4371
      %v4383 = vmul.f32 %v4335, %v4372
      %v4384 = vmul.f32 %v4336, %v4372
      %v4385 = vmul.f32 %v4337, %v4372
      %v4386 = vmul.f32 %v4338, %v4372
      %v4387 = vmul.f32 %v4339, %v4373
      %v4388 = vmul.f32 %v4340, %v4373
      %v4389 = vmul.f32 %v4341, %v4373
      %v4390 = vmul.f32 %v4342, %v4373
      %v4391 = vmul.f32 %v4343, %v4374
      %v4392 = vmul.f32 %v4344, %v4374
      %v4393 = vmul.f32 %v4345, %v4374
      %v4394 = vmul.f32 %v4346, %v4374
      %v4395 = vmul.f32 %v4347, %v4375
      %v4396 = vmul.f32 %v4348, %v4375
      %v4397 = vmul.f32 %v4349, %v4375
      %v4398 = vmul.f32 %v4350, %v4375
      %v4399 = vmul.f32 %v4351, %v4376
      %v4400 = vmul.f32 %v4352, %v4376
      %v4401 = vmul.f32 %v4353, %v4376
      %v4402 = vmul.f32 %v4354, %v4376
      %v4403 = vmul.f32 %v4355, %v4377
      %v4404 = vmul.f32 %v4356, %v4377
      %v4405 = vmul.f32 %v4357, %v4377
      %v4406 = vmul.f32 %v4358, %v4377
      %v4407 = vmul.f32 %v4359, %v4378
      %v4408 = vmul.f32 %v4360, %v4378
      %v4409 = vmul.f32 %v4361, %v4378
      %v4410 = vmul.f32 %v4362, %v4378
      %vm4411 = vcmp.ge.f32.partialorder %v4379, 0.0
      %vm4412 = vcmp.ge.f32.partialorder %v4380, 0.0
      %vm4413 = vcmp.ge.f32.partialorder %v4381, 0.0
      %vm4414 = vcmp.ge.f32.partialorder %v4382, 0.0
      %vm4415 = vcmp.ge.f32.partialorder %v4383, 0.0
      %vm4416 = vcmp.ge.f32.partialorder %v4384, 0.0
      %vm4417 = vcmp.ge.f32.partialorder %v4385, 0.0
      %vm4418 = vcmp.ge.f32.partialorder %v4386, 0.0
      %vm4419 = vcmp.ge.f32.partialorder %v4387, 0.0
      %vm4420 = vcmp.ge.f32.partialorder %v4388, 0.0
      %vm4421 = vcmp.ge.f32.partialorder %v4389, 0.0
      %vm4422 = vcmp.ge.f32.partialorder %v4390, 0.0
      %vm4423 = vcmp.ge.f32.partialorder %v4391, 0.0
      %vm4424 = vcmp.ge.f32.partialorder %v4392, 0.0
      %vm4425 = vcmp.ge.f32.partialorder %v4393, 0.0
      %vm4426 = vcmp.ge.f32.partialorder %v4394, 0.0
      %vm4427 = vcmp.ge.f32.partialorder %v4395, 0.0
      %vm4428 = vcmp.ge.f32.partialorder %v4396, 0.0
      %vm4429 = vcmp.ge.f32.partialorder %v4397, 0.0
      %vm4430 = vcmp.ge.f32.partialorder %v4398, 0.0
      %vm4431 = vcmp.ge.f32.partialorder %v4399, 0.0
      %vm4432 = vcmp.ge.f32.partialorder %v4400, 0.0
      %vm4433 = vcmp.ge.f32.partialorder %v4401, 0.0
      %vm4434 = vcmp.ge.f32.partialorder %v4402, 0.0
      %vm4435 = vcmp.ge.f32.partialorder %v4403, 0.0
      %vm4436 = vcmp.ge.f32.partialorder %v4404, 0.0
      %vm4437 = vcmp.ge.f32.partialorder %v4405, 0.0
      %vm4438 = vcmp.ge.f32.partialorder %v4406, 0.0
      %vm4439 = vcmp.ge.f32.partialorder %v4407, 0.0
      %vm4440 = vcmp.ge.f32.partialorder %v4408, 0.0
      %vm4441 = vcmp.ge.f32.partialorder %v4409, 0.0
      %vm4442 = vcmp.ge.f32.partialorder %v4410, 0.0
      %v4443 = vmul.f32 %v4379, 0.01
      %v4444 = vmul.f32 %v4380, 0.01
      %v4445 = vmul.f32 %v4381, 0.01
      %v4446 = vmul.f32 %v4382, 0.01
      %v4447 = vmul.f32 %v4383, 0.01
      %v4448 = vmul.f32 %v4384, 0.01
      %v4449 = vmul.f32 %v4385, 0.01
      %v4450 = vmul.f32 %v4386, 0.01
      %v4451 = vmul.f32 %v4387, 0.01
      %v4452 = vmul.f32 %v4388, 0.01
      %v4453 = vmul.f32 %v4389, 0.01
      %v4454 = vmul.f32 %v4390, 0.01
      %v4455 = vmul.f32 %v4391, 0.01
      %v4456 = vmul.f32 %v4392, 0.01
      %v4457 = vmul.f32 %v4393, 0.01
      %v4458 = vmul.f32 %v4394, 0.01
      %v4459 = vmul.f32 %v4395, 0.01
      %v4460 = vmul.f32 %v4396, 0.01
      %v4461 = vmul.f32 %v4397, 0.01
      %v4462 = vmul.f32 %v4398, 0.01
      %v4463 = vmul.f32 %v4399, 0.01
      %v4464 = vmul.f32 %v4400, 0.01
      %v4465 = vmul.f32 %v4401, 0.01
      %v4466 = vmul.f32 %v4402, 0.01
      %v4467 = vmul.f32 %v4403, 0.01
      %v4468 = vmul.f32 %v4404, 0.01
      %v4469 = vmul.f32 %v4405, 0.01
      %v4470 = vmul.f32 %v4406, 0.01
      %v4471 = vmul.f32 %v4407, 0.01
      %v4472 = vmul.f32 %v4408, 0.01
      %v4473 = vmul.f32 %v4409, 0.01
      %v4474 = vmul.f32 %v4410, 0.01
      %v4475 = vsel %vm4411, %v4379, %v4443
      %v4476 = vsel %vm4412, %v4380, %v4444
      %v4477 = vsel %vm4413, %v4381, %v4445
      %v4478 = vsel %vm4414, %v4382, %v4446
      %v4479 = vsel %vm4415, %v4383, %v4447
      %v4480 = vsel %vm4416, %v4384, %v4448
      %v4481 = vsel %vm4417, %v4385, %v4449
      %v4482 = vsel %vm4418, %v4386, %v4450
      %v4483 = vsel %vm4419, %v4387, %v4451
      %v4484 = vsel %vm4420, %v4388, %v4452
      %v4485 = vsel %vm4421, %v4389, %v4453
      %v4486 = vsel %vm4422, %v4390, %v4454
      %v4487 = vsel %vm4423, %v4391, %v4455
      %v4488 = vsel %vm4424, %v4392, %v4456
      %v4489 = vsel %vm4425, %v4393, %v4457
      %v4490 = vsel %vm4426, %v4394, %v4458
      %v4491 = vsel %vm4427, %v4395, %v4459
      %v4492 = vsel %vm4428, %v4396, %v4460
      %v4493 = vsel %vm4429, %v4397, %v4461
      %v4494 = vsel %vm4430, %v4398, %v4462
      %v4495 = vsel %vm4431, %v4399, %v4463
      %v4496 = vsel %vm4432, %v4400, %v4464
      %v4497 = vsel %vm4433, %v4401, %v4465
      %v4498 = vsel %vm4434, %v4402, %v4466
      %v4499 = vsel %vm4435, %v4403, %v4467
      %v4500 = vsel %vm4436, %v4404, %v4468
      %v4501 = vsel %vm4437, %v4405, %v4469
      %v4502 = vsel %vm4438, %v4406, %v4470
      %v4503 = vsel %vm4439, %v4407, %v4471
      %v4504 = vsel %vm4440, %v4408, %v4472
      %v4505 = vsel %vm4441, %v4409, %v4473
      %v4506 = vsel %vm4442, %v4410, %v4474
      %4507 = vst [vmem:[%s170] sm:$0xff] %v4475
      %4508 = vst [vmem:[%s170 + $0x8] sm:$0xff] %v4476
      %4509 = vst [vmem:[%s170 + $0x10] sm:$0xff] %v4477
      %4510 = vst [vmem:[%s170 + $0x18] sm:$0xff] %v4478
      %4511 = vst [vmem:[%s170 + $0x20] sm:$0xff] %v4479
      %4512 = vst [vmem:[%s170 + $0x28] sm:$0xff] %v4480
      %4513 = vst [vmem:[%s170 + $0x30] sm:$0xff] %v4481
      %4514 = vst [vmem:[%s170 + $0x38] sm:$0xff] %v4482
      %4515 = vst [vmem:[%s170 + $0x40] sm:$0xff] %v4483
      %4516 = vst [vmem:[%s170 + $0x48] sm:$0xff] %v4484
      %4517 = vst [vmem:[%s170 + $0x50] sm:$0xff] %v4485
      %4518 = vst [vmem:[%s170 + $0x58] sm:$0xff] %v4486
      %4519 = vst [vmem:[%s170 + $0x60] sm:$0xff] %v4487
      %4520 = vst [vmem:[%s170 + $0x68] sm:$0xff] %v4488
      %4521 = vst [vmem:[%s170 + $0x70] sm:$0xff] %v4489
      %4522 = vst [vmem:[%s170 + $0x78] sm:$0xff] %v4490
      %4523 = vst [vmem:[%s170 + $0x80] sm:$0xff] %v4491
      %4524 = vst [vmem:[%s170 + $0x88] sm:$0xff] %v4492
      %4525 = vst [vmem:[%s170 + $0x90] sm:$0xff] %v4493
      %4526 = vst [vmem:[%s170 + $0x98] sm:$0xff] %v4494
      %4527 = vst [vmem:[%s170 + $0xa0] sm:$0xff] %v4495
      %4528 = vst [vmem:[%s170 + $0xa8] sm:$0xff] %v4496
      %4529 = vst [vmem:[%s170 + $0xb0] sm:$0xff] %v4497
      %4530 = vst [vmem:[%s170 + $0xb8] sm:$0xff] %v4498
      %4531 = vst [vmem:[%s170 + $0xc0] sm:$0xff] %v4499
      %4532 = vst [vmem:[%s170 + $0xc8] sm:$0xff] %v4500
      %4533 = vst [vmem:[%s170 + $0xd0] sm:$0xff] %v4501
      %4534 = vst [vmem:[%s170 + $0xd8] sm:$0xff] %v4502
      %4535 = vst [vmem:[%s170 + $0xe0] sm:$0xff] %v4503
      %4536 = vst [vmem:[%s170 + $0xe8] sm:$0xff] %v4504
      %4537 = vst [vmem:[%s170 + $0xf0] sm:$0xff] %v4505
      %4538 = vst [vmem:[%s170 + $0xf8] sm:$0xff] %v4506
      %p4539 = scmp.lt.s32.totalorder %s14, 1
      %s4540 = scalar_select %p4539, %s14, 1
      %s4541 = smul.addr %s4540, 32
      %s4542 = smul.addr %s4541, 8
      %s4543 = scalar_lea.vmem %s3, %s4542
      // Predicated region
      $region33: #{conv_block_pallas.3} parent=31 // pred_check
        %p4544 = pneg %p100
      $region34: #{conv_block_pallas.3} parent=31 // pred_check_branch
        %4546 = sbr.rel (%p4544) target = $region36
      $region35: #{conv_block_pallas.3} parent=31 // pred_region
        _
      $region36: #{conv_block_pallas.3} parent=31 // pred_fallthru
        _
    $region32: #{conv_block_pallas.3} parent=5 // pred_fallthru
      _
    %p4547 = scmp.le.s32.totalorder 2, %s9
    // Predicated region
    $region37: #{conv_block_pallas.3} parent=5 // pred_check
      %p4548 = pneg %p4547
    $region38: #{conv_block_pallas.3} parent=5 // pred_check_branch
      %4550 = sbr.rel (%p4548) target = $region40
    $region39: #{conv_block_pallas.3} parent=5 // pred_region
      %s4551 = ssub.s32 %s9, 2
      // Predicated region
      $region41: #{conv_block_pallas.3} parent=39 // pred_check
        %p4552 = pneg %p106
      $region42: #{conv_block_pallas.3} parent=39 // pred_check_branch
        %4554 = sbr.rel (%p4552) target = $region44
      $region43: #{conv_block_pallas.3} parent=39 // pred_region
        %p4555 = scmp.lt.s32.totalorder %s15, 1
        %s4556 = scalar_select %p4555, %s15, 1
        %s4557 = smul.addr %s4556, 32
        %s4558 = smul.addr %s4557, 8
        %s4559 = scalar_lea.vmem %s3, %s4558
      $region44: #{conv_block_pallas.3} parent=39 // pred_fallthru
        _
    $region40: #{conv_block_pallas.3} parent=5 // pred_fallthru
      _
  $region6: #{conv_block_pallas.3} parent=0 // loop_footer
    %s13 = sadd.s32 1, %s9
  $region7: #{conv_block_pallas.3} parent=0 // loop_footer_branch
    %8 = sbr.rel target = $region3
  $region8: #{conv_block_pallas.3} parent=0 // loop_exit
    _

</llo_original>
